<compile_context>
chip_gen: v7x
topology: tpu7x:2x2x1
jax: 0.10.0
libtpu: 0.0.40
codegen_flags: <defaults>
</compile_context>

<pallas_src>
import functools

import jax
import jax.numpy as jnp
from jax import lax
from jax.experimental import pallas as pl
from jax.experimental.pallas import tpu as pltpu


def _round_up(x, m):
    return (x + m - 1) // m * m


# ---------------------------------------------------------------------------
# Pallas kernels
# ---------------------------------------------------------------------------
def conv_bn_relu_kernel(p_ref, w_ref, bias_ref, o_ref):
    """Im2col conv as a bf16 MXU matmul (BN scale pre-folded into weights),
    f32 accumulate, fused folded-BN bias + ReLU epilogue, bf16 output."""
    acc = jnp.dot(p_ref[...], w_ref[...], preferred_element_type=jnp.float32)
    o_ref[...] = jnp.maximum(acc + bias_ref[...], 0.0).astype(o_ref.dtype)


def fc_kernel(x_ref, w_ref, b_ref, o_ref):
    """Pooled classifier matmul, K tiled over the grid, f32 accumulation in the
    resident output block; bias added on the last K step."""
    k = pl.program_id(0)

    @pl.when(k == 0)
    def _():
        o_ref[...] = jnp.zeros_like(o_ref)

    o_ref[...] += jnp.dot(x_ref[...], w_ref[...],
                          preferred_element_type=jnp.float32)

    @pl.when(k == pl.num_programs(0) - 1)
    def _():
        o_ref[...] = o_ref[...] + b_ref[...]


# ---------------------------------------------------------------------------
# Wrapper
# ---------------------------------------------------------------------------
@functools.partial(jax.jit, static_argnames=("n_classes",))
def exit_block_forward(x_nchw, params, n_classes=10):
    conv_w = params["conv_w"]          # (Cout, Cin, 3, 3)   PyTorch OIHW
    bn_gamma = params["bn_gamma"]      # (Cout,)
    bn_beta = params["bn_beta"]        # (Cout,)
    bn_mean = params["bn_mean"]        # (Cout,)
    bn_var = params["bn_var"]          # (Cout,)
    fc_w = params["fc_w"]              # (n_classes, Cout*PH*PW)
    fc_b = params["fc_b"]              # (n_classes,)
    eps = 1e-5

    B, C, H, W = x_nchw.shape
    Cout = conv_w.shape[0]
    OH = (H + 2 - 3) // 2 + 1          # stride 2, pad 1, k 3
    OW = (W + 2 - 3) // 2 + 1
    # The pooled-FC weight expansion below assumes even conv output spatial dims
    # (matches AvgPool2d(2) with no remainder; true for the cifar ExitBlock).
    assert OH % 2 == 0 and OW % 2 == 0, "odd conv output spatial size unsupported"
    PH, PW = OH // 2, OW // 2

    # ---- glue: NCHW -> NHWC, im2col (stride 2, pad 1, kernel 3) ----
    x_nhwc = jnp.transpose(x_nchw, (0, 2, 3, 1))
    x_pad = jnp.pad(x_nhwc, ((0, 0), (1, 1), (1, 1), (0, 0)))
    cols = []
    for kh in range(3):
        for kw in range(3):
            cols.append(x_pad[:, kh:kh + 2 * OH:2, kw:kw + 2 * OW:2, :])
    patches = jnp.stack(cols, axis=3)                    # (B, OH, OW, 9, C)
    patches = patches.reshape(B * OH * OW, 9 * C)

    M = B * OH * OW
    K = 9 * C
    Kpad = _round_up(K, 128)                             # unmasked MXU K dim
    TM = max(8, min(512, _round_up(M, 8)))               # big M tile, padded M
    Mpad = _round_up(M, TM)

    patches_p = jnp.pad(patches, ((0, Mpad - M), (0, Kpad - K))
                        ).astype(jnp.bfloat16)

    # conv weight -> (kh*kw*Cin, Cout); fold BN inference scale into the weight
    inv_std = lax.rsqrt(bn_var + eps)
    scale = bn_gamma * inv_std                           # (Cout,)
    bias = (bn_beta - bn_mean * scale).reshape(1, Cout).astype(jnp.float32)
    w_mat = jnp.transpose(conv_w, (2, 3, 1, 0)).reshape(K, Cout) * scale[None, :]
    w_mat_p = jnp.pad(w_mat, ((0, Kpad - K), (0, 0))).astype(jnp.bfloat16)

    conv_out = pl.pallas_call(
        conv_bn_relu_kernel,
        out_shape=jax.ShapeDtypeStruct((Mpad, Cout), jnp.bfloat16),
        grid_spec=pltpu.PrefetchScalarGridSpec(
            num_scalar_prefetch=0,
            grid=(Mpad // TM,),
            in_specs=[
                pl.BlockSpec((TM, Kpad), lambda i: (i, 0)),
                pl.BlockSpec((Kpad, Cout), lambda i: (0, 0)),   # resident
                pl.BlockSpec((1, Cout), lambda i: (0, 0)),      # resident
            ],
            out_specs=pl.BlockSpec((TM, Cout), lambda i: (i, 0)),
        ),
        compiler_params=pltpu.CompilerParams(
            dimension_semantics=("parallel",)),
    )(patches_p, w_mat_p, bias)

    # ---- glue: fuse AvgPool2d(2) + NCHW flatten + Linear via weight expansion
    # conv_out row order is (b, oh, ow); per-batch feature index is s*Cout + c.
    feats = conv_out[:M].reshape(B, OH * OW * Cout)      # bf16, free reshape

    # Structured (gather-free) expansion of the classifier weight over the 2x2
    # pooling windows; the 0.25 folds the pooling mean.
    w4 = fc_w.reshape(n_classes, Cout, PH, PW)
    w6 = jnp.broadcast_to(w4[:, :, :, None, :, None],
                          (n_classes, Cout, PH, 2, PW, 2))
    w_exp = 0.25 * jnp.transpose(
        w6.reshape(n_classes, Cout, OH, OW), (2, 3, 1, 0)
    ).reshape(OH * OW * Cout, n_classes)                 # (S*Cout, n_classes)

    K2 = OH * OW * Cout
    Npad = _round_up(n_classes, 128)                     # lane-dense output
    Bpad = _round_up(B, 8)                               # sublane-dense output
    # Large K tile (multiple of 128) -> fewer grid steps; bf16 weight tile
    # (8192, 128) ~= 2 MiB, comfortably inside VMEM even with double-buffering.
    TK2 = min(8192, _round_up(K2, 128))
    K2pad = _round_up(K2, TK2)

    feats_p = jnp.pad(feats, ((0, Bpad - B), (0, K2pad - K2)))
    w_exp_p = jnp.pad(w_exp, ((0, K2pad - K2), (0, Npad - n_classes))
                      ).astype(jnp.bfloat16)
    fc_b_p = jnp.pad(fc_b, (0, Npad - n_classes)).reshape(1, Npad
                                                          ).astype(jnp.float32)

    logits_p = pl.pallas_call(
        fc_kernel,
        out_shape=jax.ShapeDtypeStruct((Bpad, Npad), jnp.float32),
        grid_spec=pltpu.PrefetchScalarGridSpec(
            num_scalar_prefetch=0,
            grid=(K2pad // TK2,),
            in_specs=[
                pl.BlockSpec((Bpad, TK2), lambda k: (0, k)),
                pl.BlockSpec((TK2, Npad), lambda k: (k, 0)),
                pl.BlockSpec((1, Npad), lambda k: (0, 0)),
            ],
            out_specs=pl.BlockSpec((Bpad, Npad), lambda k: (0, 0)),
        ),
        compiler_params=pltpu.CompilerParams(
            dimension_semantics=("arbitrary",)),
    )(feats_p, w_exp_p, fc_b_p)

    return logits_p[:B, :n_classes]


# ---------------------------------------------------------------------------
# Pure-JAX reference (for correctness check)
# ---------------------------------------------------------------------------
def exit_block_reference(x_nchw, params, n_classes=10):
    eps = 1e-5
    y = lax.conv_general_dilated(
        x_nchw, params["conv_w"], window_strides=(2, 2),
        padding=((1, 1), (1, 1)),
        dimension_numbers=("NCHW", "OIHW", "NCHW"),
        precision=lax.Precision.HIGHEST)
    inv_std = 1.0 / jnp.sqrt(params["bn_var"] + eps)
    scale = params["bn_gamma"] * inv_std
    shift = params["bn_beta"] - params["bn_mean"] * scale
    y = y * scale[None, :, None, None] + shift[None, :, None, None]
    y = jnp.maximum(y, 0.0)
    B, Cout, OH, OW = y.shape
    y = y.reshape(B, Cout, OH // 2, 2, OW // 2, 2).mean(axis=(3, 5))
    y = y.reshape(B, -1)
    return jnp.dot(y, params["fc_w"].T,
                   precision=lax.Precision.HIGHEST) + params["fc_b"]


# ---------------------------------------------------------------------------
# Main
# ---------------------------------------------------------------------------
if __name__ == "__main__":
    B, C, H, W = 2, 4, 16, 16
    n_classes = 10
    Cout = 128                      # interChannels1 in the 'cifar' branch
    OH, OW = H // 2, W // 2
    PH, PW = OH // 2, OW // 2
    total_neurons = Cout * PH * PW  # 128 * 4 * 4 = 2048

    key = jax.random.PRNGKey(0)
    k_x, k_cw, k_g, k_b, k_m, k_v, k_fw, k_fb = jax.random.split(key, 8)

    x = jax.random.normal(k_x, (B, C, H, W), dtype=jnp.float32)
    params = {
        "conv_w": 0.1 * jax.random.normal(k_cw, (Cout, C, 3, 3), jnp.float32),
        "bn_gamma": 1.0 + 0.1 * jax.random.normal(k_g, (Cout,), jnp.float32),
        "bn_beta": 0.1 * jax.random.normal(k_b, (Cout,), jnp.float32),
        "bn_mean": 0.05 * jax.random.normal(k_m, (Cout,), jnp.float32),
        "bn_var": 1.0 + 0.1 * jnp.abs(jax.random.normal(k_v, (Cout,), jnp.float32)),
        "fc_w": 0.05 * jax.random.normal(k_fw, (n_classes, total_neurons), jnp.float32),
        "fc_b": 0.05 * jax.random.normal(k_fb, (n_classes,), jnp.float32),
    }

    out = exit_block_forward(x, params, n_classes=n_classes)
    out = jax.block_until_ready(out)

    ref = exit_block_reference(x, params, n_classes=n_classes)
    assert out.shape == (B, n_classes)
    # bf16 MXU operands (f32 accumulation) => looser tolerance than a pure-f32 run.
    assert bool(jnp.allclose(out, ref, atol=8e-2, rtol=8e-2)), "mismatch vs reference"

    print("KERNEL_OK")
</pallas_src>

<mosaic_0001>
module attributes {stable_mosaic.version = 11 : i64} {
  func.func @conv_bn_relu_kernel(%arg0: i32, %arg1: memref<128x128xbf16, #tpu.memory_space<vmem>>, %arg2: memref<128x128xbf16, #tpu.memory_space<vmem>>, %arg3: memref<1x128xf32, #tpu.memory_space<vmem>>, %arg4: memref<128x128xbf16, #tpu.memory_space<vmem>>) attributes {dimension_semantics = [#tpu.dimension_semantics<parallel>], iteration_bounds = array<i64: 1>, scalar_prefetch = 0 : i64, scratch_operands = 0 : i64, tpu.core_type = #tpu.core_type<tc>, window_params = [{transform_indices = @transform_0, window_bounds = array<i64: 128, 128>}, {pipeline_mode = #tpu.pipeline_mode<synchronous>, transform_indices = @transform_1, window_bounds = array<i64: 128, 128>}, {pipeline_mode = #tpu.pipeline_mode<synchronous>, transform_indices = @transform_2, window_bounds = array<i64: 1, 128>}, {transform_indices = @transform_3, window_bounds = array<i64: 128, 128>}]} {
    %c0 = arith.constant 0 : index
    %c0_0 = arith.constant 0 : index
    %0 = vector.load %arg1[%c0, %c0_0] : memref<128x128xbf16, #tpu.memory_space<vmem>>, vector<128x128xbf16>
    %c0_1 = arith.constant 0 : index
    %c0_2 = arith.constant 0 : index
    %1 = vector.load %arg2[%c0_1, %c0_2] : memref<128x128xbf16, #tpu.memory_space<vmem>>, vector<128x128xbf16>
    %cst = arith.constant dense<0.000000e+00> : vector<128x128xf32>
    %2 = tpu.matmul %0, %1, %cst {dimension_numbers = #tpu.dot_dimension_numbers<[1], [0], [0], [1], [0, 0, 1, 1], [], []>} : vector<128x128xbf16>, vector<128x128xbf16>, vector<128x128xf32> -> vector<128x128xf32>
    %c0_3 = arith.constant 0 : index
    %c0_4 = arith.constant 0 : index
    %3 = vector.load %arg3[%c0_3, %c0_4] : memref<1x128xf32, #tpu.memory_space<vmem>>, vector<1x128xf32>
    %4 = vector.broadcast %3 : vector<1x128xf32> to vector<128x128xf32>
    %5 = arith.addf %2, %4 : vector<128x128xf32>
    %cst_5 = arith.constant 0.000000e+00 : f32
    %6 = vector.broadcast %cst_5 : f32 to vector<128x128xf32>
    %7 = arith.maximumf %5, %6 : vector<128x128xf32>
    %8 = arith.truncf %7 : vector<128x128xf32> to vector<128x128xbf16>
    %c0_6 = arith.constant 0 : index
    %c0_7 = arith.constant 0 : index
    %9 = vector.load %arg4[%c0_6, %c0_7] : memref<128x128xbf16, #tpu.memory_space<vmem>>, vector<128x128xbf16>
    tpu.vector_store %arg4[%c0_6, %c0_7], %8 {strides = array<i32>} : memref<128x128xbf16, #tpu.memory_space<vmem>>, vector<128x128xbf16>,
    return
  }
  func.func @transform_0(%arg0: i32) -> (i32, i32) {
    %c0_i32 = arith.constant 0 : i32
    %c0_i32_0 = arith.constant 0 : i32
    return %arg0, %c0_i32 : i32, i32
  }
  func.func @transform_1(%arg0: i32) -> (i32, i32) {
    %c0_i32 = arith.constant 0 : i32
    %c0_i32_0 = arith.constant 0 : i32
    %c0_i32_1 = arith.constant 0 : i32
    return %c0_i32, %c0_i32_0 : i32, i32
  }
  func.func @transform_2(%arg0: i32) -> (i32, i32) {
    %c0_i32 = arith.constant 0 : i32
    %c0_i32_0 = arith.constant 0 : i32
    %c0_i32_1 = arith.constant 0 : i32
    return %c0_i32, %c0_i32_0 : i32, i32
  }
  func.func @transform_3(%arg0: i32) -> (i32, i32) {
    %c0_i32 = arith.constant 0 : i32
    %c0_i32_0 = arith.constant 0 : i32
    return %arg0, %c0_i32 : i32, i32
  }
}

module attributes {stable_mosaic.version = 11 : i64} {
  func.func @fc_kernel(%arg0: i32, %arg1: memref<8x8192xbf16, #tpu.memory_space<vmem>>, %arg2: memref<8192x128xbf16, #tpu.memory_space<vmem>>, %arg3: memref<1x128xf32, #tpu.memory_space<vmem>>, %arg4: memref<8x128xf32, #tpu.memory_space<vmem>>) attributes {dimension_semantics = [#tpu.dimension_semantics<arbitrary>], iteration_bounds = array<i64: 1>, scalar_prefetch = 0 : i64, scratch_operands = 0 : i64, tpu.core_type = #tpu.core_type<tc>, window_params = [{transform_indices = @transform_0, window_bounds = array<i64: 8, 8192>}, {transform_indices = @transform_1, window_bounds = array<i64: 8192, 128>}, {pipeline_mode = #tpu.pipeline_mode<synchronous>, transform_indices = @transform_2, window_bounds = array<i64: 1, 128>}, {pipeline_mode = #tpu.pipeline_mode<synchronous>, transform_indices = @transform_3, window_bounds = array<i64: 8, 128>}]} {
    %c0_i32 = arith.constant 0 : i32
    %0 = arith.cmpi eq, %arg0, %c0_i32 : i32
    %1 = arith.extui %0 : i1 to i32
    %c0_i32_0 = arith.constant 0 : i32
    %2 = arith.cmpi ne, %1, %c0_i32_0 : i32
    scf.if %2 {
      %cst_10 = arith.constant 0.000000e+00 : f32
      %12 = vector.broadcast %cst_10 : f32 to vector<8x128xf32>
      %c0_11 = arith.constant 0 : index
      %c0_12 = arith.constant 0 : index
      %13 = vector.load %arg4[%c0_11, %c0_12] : memref<8x128xf32, #tpu.memory_space<vmem>>, vector<8x128xf32>
      tpu.vector_store %arg4[%c0_11, %c0_12], %12 {strides = array<i32>} : memref<8x128xf32, #tpu.memory_space<vmem>>, vector<8x128xf32>,
    } else {
    }
    %c0 = arith.constant 0 : index
    %c0_1 = arith.constant 0 : index
    %3 = vector.load %arg4[%c0, %c0_1] : memref<8x128xf32, #tpu.memory_space<vmem>>, vector<8x128xf32>
    %c0_2 = arith.constant 0 : index
    %c0_3 = arith.constant 0 : index
    %4 = vector.load %arg1[%c0_2, %c0_3] : memref<8x8192xbf16, #tpu.memory_space<vmem>>, vector<8x8192xbf16>
    %c0_4 = arith.constant 0 : index
    %c0_5 = arith.constant 0 : index
    %5 = vector.load %arg2[%c0_4, %c0_5] : memref<8192x128xbf16, #tpu.memory_space<vmem>>, vector<8192x128xbf16>
    %cst = arith.constant dense<0.000000e+00> : vector<8x128xf32>
    %6 = tpu.matmul %4, %5, %cst {dimension_numbers = #tpu.dot_dimension_numbers<[1], [0], [0], [1], [0, 0, 1, 1], [], []>} : vector<8x8192xbf16>, vector<8192x128xbf16>, vector<8x128xf32> -> vector<8x128xf32>
    %7 = arith.addf %3, %6 : vector<8x128xf32>
    %c0_6 = arith.constant 0 : index
    %c0_7 = arith.constant 0 : index
    %8 = vector.load %arg4[%c0_6, %c0_7] : memref<8x128xf32, #tpu.memory_space<vmem>>, vector<8x128xf32>
    tpu.vector_store %arg4[%c0_6, %c0_7], %7 {strides = array<i32>} : memref<8x128xf32, #tpu.memory_space<vmem>>, vector<8x128xf32>,
    %c0_i32_8 = arith.constant 0 : i32
    %9 = arith.cmpi eq, %arg0, %c0_i32_8 : i32
    %10 = arith.extui %9 : i1 to i32
    %c0_i32_9 = arith.constant 0 : i32
    %11 = arith.cmpi ne, %10, %c0_i32_9 : i32
    scf.if %11 {
      %c0_10 = arith.constant 0 : index
      %c0_11 = arith.constant 0 : index
      %12 = vector.load %arg4[%c0_10, %c0_11] : memref<8x128xf32, #tpu.memory_space<vmem>>, vector<8x128xf32>
      %c0_12 = arith.constant 0 : index
      %c0_13 = arith.constant 0 : index
      %13 = vector.load %arg3[%c0_12, %c0_13] : memref<1x128xf32, #tpu.memory_space<vmem>>, vector<1x128xf32>
      %14 = vector.broadcast %13 : vector<1x128xf32> to vector<8x128xf32>
      %15 = arith.addf %12, %14 : vector<8x128xf32>
      %c0_14 = arith.constant 0 : index
      %c0_15 = arith.constant 0 : index
      %16 = vector.load %arg4[%c0_14, %c0_15] : memref<8x128xf32, #tpu.memory_space<vmem>>, vector<8x128xf32>
      tpu.vector_store %arg4[%c0_14, %c0_15], %15 {strides = array<i32>} : memref<8x128xf32, #tpu.memory_space<vmem>>, vector<8x128xf32>,
    } else {
    }
    return
  }
  func.func @transform_0(%arg0: i32) -> (i32, i32) {
    %c0_i32 = arith.constant 0 : i32
    %c0_i32_0 = arith.constant 0 : i32
    return %c0_i32, %arg0 : i32, i32
  }
  func.func @transform_1(%arg0: i32) -> (i32, i32) {
    %c0_i32 = arith.constant 0 : i32
    %c0_i32_0 = arith.constant 0 : i32
    return %arg0, %c0_i32 : i32, i32
  }
  func.func @transform_2(%arg0: i32) -> (i32, i32) {
    %c0_i32 = arith.constant 0 : i32
    %c0_i32_0 = arith.constant 0 : i32
    %c0_i32_1 = arith.constant 0 : i32
    return %c0_i32, %c0_i32_0 : i32, i32
  }
  func.func @transform_3(%arg0: i32) -> (i32, i32) {
    %c0_i32 = arith.constant 0 : i32
    %c0_i32_0 = arith.constant 0 : i32
    %c0_i32_1 = arith.constant 0 : i32
    return %c0_i32, %c0_i32_0 : i32, i32
  }
}

</mosaic_0001>

<llo_original>
// kernel: exit_block_forward.2
$region0: #{exit_block_forward.2}
  #allocation0 [shape = 'u32[]', space=smem, size = 0x4, offset = 0x4, fixed_abs, tag = 'smem constant byte address 0x4 - core index']
  #allocation1 [shape = 'u32[144,128]{1,0:T(1,128)}', space=vmem, size = 0x12000, scoped, tag = 'internal scratch']
  %s0 = inlined_call_operand.vmem [shape: bf16[128,128], index: 0, kind: input, shape index: {}]
  %s1 = inlined_call_operand.vmem [shape: bf16[128,128], index: 1, kind: input, shape index: {}]
  %s2 = inlined_call_operand.vmem [shape: f32[1,128], index: 2, kind: input, shape index: {}]
  %s3 = inlined_call_operand.vmem [shape: bf16[128,128], index: 3, kind: output, shape index: {}]
  %s4 = sld [smem:[#allocation0]]
  $region22: #{exit_block_forward.2} parent=0
    _
  %s6 = ssub.s32 1, %s4
  %s7 = scalar_select 0, %s6, %s4
  // Predicated region
  $region2: #{exit_block_forward.2} parent=0 // pred_check
    _
  $region3: #{exit_block_forward.2} parent=0 // pred_check_branch
    %9 = sbr.rel (0) target = $region5
  $region4: #{exit_block_forward.2} parent=0 // pred_region
    _
  $region5: #{exit_block_forward.2} parent=0 // pred_fallthru
    _
  // Predicated region
  $region6: #{exit_block_forward.2} parent=0 // pred_check
    _
  $region7: #{exit_block_forward.2} parent=0 // pred_check_branch
    %11 = sbr.rel (0) target = $region9
  $region8: #{exit_block_forward.2} parent=0 // pred_region
    _
  $region9: #{exit_block_forward.2} parent=0 // pred_fallthru
    _
  // Predicated region
  $region10: #{exit_block_forward.2} parent=0 // pred_check
    _
  $region11: #{exit_block_forward.2} parent=0 // pred_check_branch
    %13 = sbr.rel (0) target = $region13
  $region12: #{exit_block_forward.2} parent=0 // pred_region
    _
  $region13: #{exit_block_forward.2} parent=0 // pred_fallthru
    _
  %v15 = vld [vmem:[%s0] sm:$0xf]
  %v16 = vld [vmem:[%s0 + $0x4] sm:$0xf]
  %v17 = vld [vmem:[%s0 + $0x8] sm:$0xf]
  %v18 = vld [vmem:[%s0 + $0xc] sm:$0xf]
  %v19 = vld [vmem:[%s0 + $0x10] sm:$0xf]
  %v20 = vld [vmem:[%s0 + $0x14] sm:$0xf]
  %v21 = vld [vmem:[%s0 + $0x18] sm:$0xf]
  %v22 = vld [vmem:[%s0 + $0x1c] sm:$0xf]
  %v23 = vld [vmem:[%s0 + $0x20] sm:$0xf]
  %v24 = vld [vmem:[%s0 + $0x24] sm:$0xf]
  %v25 = vld [vmem:[%s0 + $0x28] sm:$0xf]
  %v26 = vld [vmem:[%s0 + $0x2c] sm:$0xf]
  %v27 = vld [vmem:[%s0 + $0x30] sm:$0xf]
  %v28 = vld [vmem:[%s0 + $0x34] sm:$0xf]
  %v29 = vld [vmem:[%s0 + $0x38] sm:$0xf]
  %v30 = vld [vmem:[%s0 + $0x3c] sm:$0xf]
  %v31 = vld [vmem:[%s1] sm:$0xf]
  %v32 = vld [vmem:[%s1 + $0x4] sm:$0xf]
  %v33 = vld [vmem:[%s1 + $0x8] sm:$0xf]
  %v34 = vld [vmem:[%s1 + $0xc] sm:$0xf]
  %v35 = vld [vmem:[%s1 + $0x10] sm:$0xf]
  %v36 = vld [vmem:[%s1 + $0x14] sm:$0xf]
  %v37 = vld [vmem:[%s1 + $0x18] sm:$0xf]
  %v38 = vld [vmem:[%s1 + $0x1c] sm:$0xf]
  %v39 = vld [vmem:[%s1 + $0x20] sm:$0xf]
  %v40 = vld [vmem:[%s1 + $0x24] sm:$0xf]
  %v41 = vld [vmem:[%s1 + $0x28] sm:$0xf]
  %v42 = vld [vmem:[%s1 + $0x2c] sm:$0xf]
  %v43 = vld [vmem:[%s1 + $0x30] sm:$0xf]
  %v44 = vld [vmem:[%s1 + $0x34] sm:$0xf]
  %v45 = vld [vmem:[%s1 + $0x38] sm:$0xf]
  %v46 = vld [vmem:[%s1 + $0x3c] sm:$0xf]
  %v47 = vld [vmem:[%s2] sm:$0x1]
  %v49 = vlaneseq
  %v50 = vshrl.u32 %v49, 7
  %v51 = vsub.s32 0, %v50
  %v52 = vrot.slane %v47, %v51
  %v70 = vunpack.c.l.b16 %v15
  %v71 = vunpack.c.l.b16 %v16
  %v72 = vunpack.c.l.b16 %v17
  %v73 = vunpack.c.l.b16 %v18
  %v74 = vunpack.c.l.b16 %v19
  %v75 = vunpack.c.l.b16 %v20
  %v76 = vunpack.c.l.b16 %v21
  %v77 = vunpack.c.l.b16 %v22
  %v78 = vunpack.c.l.b16 %v23
  %v79 = vunpack.c.l.b16 %v24
  %v80 = vunpack.c.l.b16 %v25
  %v81 = vunpack.c.l.b16 %v26
  %v82 = vunpack.c.l.b16 %v27
  %v83 = vunpack.c.l.b16 %v28
  %v84 = vunpack.c.l.b16 %v29
  %v85 = vunpack.c.l.b16 %v30
  %v86 = vpack.c.b16 %v71, %v70
  %v87 = vpack.c.b16 %v73, %v72
  %v88 = vpack.c.b16 %v75, %v74
  %v89 = vpack.c.b16 %v77, %v76
  %v90 = vpack.c.b16 %v79, %v78
  %v91 = vpack.c.b16 %v81, %v80
  %v92 = vpack.c.b16 %v83, %v82
  %v93 = vpack.c.b16 %v85, %v84
  %v118 = vunpack.c.l.b16 %v31
  %v119 = vunpack.c.l.b16 %v32
  %v120 = vunpack.c.l.b16 %v33
  %v121 = vunpack.c.l.b16 %v34
  %v122 = vunpack.c.l.b16 %v35
  %v123 = vunpack.c.l.b16 %v36
  %v124 = vunpack.c.l.b16 %v37
  %v125 = vunpack.c.l.b16 %v38
  %v126 = vunpack.c.l.b16 %v39
  %v127 = vunpack.c.l.b16 %v40
  %v128 = vunpack.c.l.b16 %v41
  %v129 = vunpack.c.l.b16 %v42
  %v130 = vunpack.c.l.b16 %v43
  %v131 = vunpack.c.l.b16 %v44
  %v132 = vunpack.c.l.b16 %v45
  %v133 = vunpack.c.l.b16 %v46
  %v134 = vpack.c.b16 %v119, %v118
  %v135 = vpack.c.b16 %v121, %v120
  %v136 = vpack.c.b16 %v123, %v122
  %v137 = vpack.c.b16 %v125, %v124
  %v138 = vpack.c.b16 %v127, %v126
  %v139 = vpack.c.b16 %v129, %v128
  %v140 = vpack.c.b16 %v131, %v130
  %v141 = vpack.c.b16 %v133, %v132
  %150 = vmatprep.subr.bf16.mxu0 0
  %151 = vmatpush1.bf16.msra.mxu0 %v134
  %152 = vmatprep.subr.bf16.mxu0 0
  %153 = vmatpush1.bf16.msra.mxu0 %v135
  %154 = vmatprep.subr.bf16.mxu0 0
  %155 = vmatpush1.bf16.msra.mxu0 %v136
  %156 = vmatprep.subr.bf16.mxu0 0
  %157 = vmatpush1.bf16.msra.mxu0 %v137
  %158 = vmatprep.subr.bf16.mxu0 0
  %159 = vmatpush1.bf16.msra.mxu0 %v138
  %160 = vmatprep.subr.bf16.mxu0 0
  %161 = vmatpush1.bf16.msra.mxu0 %v139
  %162 = vmatprep.subr.bf16.mxu0 0
  %163 = vmatpush1.bf16.msra.mxu0 %v140
  %164 = vmatprep.subr.bf16.mxu0 0
  %165 = vmatpush1.bf16.msra.mxu0 %v141
  %166 = vmatprep.subr.bf16.mxu0 0
  %167 = vmatpush1.bf16.msra.mxu0 0
  %168 = vmatprep.subr.bf16.mxu0 0
  %169 = vmatpush1.bf16.msra.mxu0 0
  %170 = vmatprep.subr.bf16.mxu0 0
  %171 = vmatpush1.bf16.msra.mxu0 0
  %172 = vmatprep.subr.bf16.mxu0 0
  %173 = vmatpush1.bf16.msra.mxu0 0
  %174 = vmatprep.subr.bf16.mxu0 0
  %175 = vmatpush1.bf16.msra.mxu0 0
  %176 = vmatprep.subr.bf16.mxu0 0
  %177 = vmatpush1.bf16.msra.mxu0 0
  %178 = vmatprep.subr.bf16.mxu0 0
  %179 = vmatpush1.bf16.msra.mxu0 0
  %180 = vmatprep.subr.bf16.mxu0 0
  %181 = vmatpush1.bf16.msra.mxu0 0
  %182 = vmatprep.mubr.bf16.mxu0 0
  %183 = vmatmul.mubr.bf16.gmra.mrb[0].mxu0 %v86
  %v184 = vpop.f32.mrb[0].mxu0
  %v185 = vadd.f32 %v52, %v184
  %v186 = vpop.f32.mrb[0].mxu0
  %v187 = vpop.f32.mrb[0].mxu0
  %v188 = vadd.f32 %v52, %v187
  %v189 = vpop.f32.mrb[0].mxu0
  %190 = vmatprep.mubr.bf16.mxu0 0
  %191 = vmatmul.mubr.bf16.gmra.mrb[0].mxu0 %v87
  %v192 = vpop.f32.mrb[0].mxu0
  %v193 = vadd.f32 %v52, %v192
  %v194 = vpop.f32.mrb[0].mxu0
  %v195 = vpop.f32.mrb[0].mxu0
  %v196 = vadd.f32 %v52, %v195
  %v197 = vpop.f32.mrb[0].mxu0
  %198 = vmatprep.mubr.bf16.mxu0 0
  %199 = vmatmul.mubr.bf16.gmra.mrb[0].mxu0 %v88
  %v200 = vpop.f32.mrb[0].mxu0
  %v201 = vadd.f32 %v52, %v200
  %v202 = vpop.f32.mrb[0].mxu0
  %v203 = vpop.f32.mrb[0].mxu0
  %v204 = vadd.f32 %v52, %v203
  %v205 = vpop.f32.mrb[0].mxu0
  %206 = vmatprep.mubr.bf16.mxu0 0
  %207 = vmatmul.mubr.bf16.gmra.mrb[0].mxu0 %v89
  %v208 = vpop.f32.mrb[0].mxu0
  %v209 = vadd.f32 %v52, %v208
  %v210 = vpop.f32.mrb[0].mxu0
  %v211 = vpop.f32.mrb[0].mxu0
  %v212 = vadd.f32 %v52, %v211
  %v213 = vpop.f32.mrb[0].mxu0
  %214 = vmatprep.mubr.bf16.mxu0 0
  %215 = vmatmul.mubr.bf16.gmra.mrb[0].mxu0 %v90
  %v216 = vpop.f32.mrb[0].mxu0
  %v217 = vadd.f32 %v52, %v216
  %v218 = vpop.f32.mrb[0].mxu0
  %v219 = vpop.f32.mrb[0].mxu0
  %v220 = vadd.f32 %v52, %v219
  %v221 = vpop.f32.mrb[0].mxu0
  %222 = vmatprep.mubr.bf16.mxu0 0
  %223 = vmatmul.mubr.bf16.gmra.mrb[0].mxu0 %v91
  %v224 = vpop.f32.mrb[0].mxu0
  %v225 = vadd.f32 %v52, %v224
  %v226 = vpop.f32.mrb[0].mxu0
  %v227 = vpop.f32.mrb[0].mxu0
  %v228 = vadd.f32 %v52, %v227
  %v229 = vpop.f32.mrb[0].mxu0
  %230 = vmatprep.mubr.bf16.mxu0 0
  %231 = vmatmul.mubr.bf16.gmra.mrb[0].mxu0 %v92
  %v232 = vpop.f32.mrb[0].mxu0
  %v233 = vadd.f32 %v52, %v232
  %v234 = vpop.f32.mrb[0].mxu0
  %v235 = vpop.f32.mrb[0].mxu0
  %v236 = vadd.f32 %v52, %v235
  %v237 = vpop.f32.mrb[0].mxu0
  %238 = vmatprep.mubr.bf16.mxu0 0
  %239 = vmatmul.mubr.bf16.gmra.mrb[0].mxu0 %v93
  %v240 = vpop.f32.mrb[0].mxu0
  %v241 = vadd.f32 %v52, %v240
  %v242 = vpop.f32.mrb[0].mxu0
  %v243 = vpop.f32.mrb[0].mxu0
  %v244 = vadd.f32 %v52, %v243
  %v245 = vpop.f32.mrb[0].mxu0
  %246 = vdwg.mxu0
  %v247 = vmax.f32 %v185, 0.0
  %v248 = vmax.f32 %v188, 0.0
  %v249 = vmax.f32 %v193, 0.0
  %v250 = vmax.f32 %v196, 0.0
  %v251 = vmax.f32 %v201, 0.0
  %v252 = vmax.f32 %v204, 0.0
  %v253 = vmax.f32 %v209, 0.0
  %v254 = vmax.f32 %v212, 0.0
  %v255 = vmax.f32 %v217, 0.0
  %v256 = vmax.f32 %v220, 0.0
  %v257 = vmax.f32 %v225, 0.0
  %v258 = vmax.f32 %v228, 0.0
  %v259 = vmax.f32 %v233, 0.0
  %v260 = vmax.f32 %v236, 0.0
  %v261 = vmax.f32 %v241, 0.0
  %v262 = vmax.f32 %v244, 0.0
  %v263 = vpack.c.bf16 %v248, %v247
  %v264 = vpack.c.bf16 %v250, %v249
  %v265 = vpack.c.bf16 %v252, %v251
  %v266 = vpack.c.bf16 %v254, %v253
  %v267 = vpack.c.bf16 %v256, %v255
  %v268 = vpack.c.bf16 %v258, %v257
  %v269 = vpack.c.bf16 %v260, %v259
  %v270 = vpack.c.bf16 %v262, %v261
  %v279 = vunpack.c.l.b16 %v263
  %v280 = vunpack.c.h.b16 %v263
  %v281 = vunpack.c.l.b16 %v264
  %v282 = vunpack.c.h.b16 %v264
  %v283 = vunpack.c.l.b16 %v265
  %v284 = vunpack.c.h.b16 %v265
  %v285 = vunpack.c.l.b16 %v266
  %v286 = vunpack.c.h.b16 %v266
  %v287 = vunpack.c.l.b16 %v267
  %v288 = vunpack.c.h.b16 %v267
  %v289 = vunpack.c.l.b16 %v268
  %v290 = vunpack.c.h.b16 %v268
  %v291 = vunpack.c.l.b16 %v269
  %v292 = vunpack.c.h.b16 %v269
  %v293 = vunpack.c.l.b16 %v270
  %v294 = vunpack.c.h.b16 %v270
  %v295 = vpack.c.b16 %v279, %v279
  %v296 = vpack.c.b16 %v280, %v280
  %v297 = vpack.c.b16 %v281, %v281
  %v298 = vpack.c.b16 %v282, %v282
  %v299 = vpack.c.b16 %v283, %v283
  %v300 = vpack.c.b16 %v284, %v284
  %v301 = vpack.c.b16 %v285, %v285
  %v302 = vpack.c.b16 %v286, %v286
  %v303 = vpack.c.b16 %v287, %v287
  %v304 = vpack.c.b16 %v288, %v288
  %v305 = vpack.c.b16 %v289, %v289
  %v306 = vpack.c.b16 %v290, %v290
  %v307 = vpack.c.b16 %v291, %v291
  %v308 = vpack.c.b16 %v292, %v292
  %v309 = vpack.c.b16 %v293, %v293
  %v310 = vpack.c.b16 %v294, %v294
  %327 = vst [vmem:[%s3] sm:$0xf] %v295
  %328 = vst [vmem:[%s3 + $0x4] sm:$0xf] %v296
  %329 = vst [vmem:[%s3 + $0x8] sm:$0xf] %v297
  %330 = vst [vmem:[%s3 + $0xc] sm:$0xf] %v298
  %331 = vst [vmem:[%s3 + $0x10] sm:$0xf] %v299
  %332 = vst [vmem:[%s3 + $0x14] sm:$0xf] %v300
  %333 = vst [vmem:[%s3 + $0x18] sm:$0xf] %v301
  %334 = vst [vmem:[%s3 + $0x1c] sm:$0xf] %v302
  %335 = vst [vmem:[%s3 + $0x20] sm:$0xf] %v303
  %336 = vst [vmem:[%s3 + $0x24] sm:$0xf] %v304
  %337 = vst [vmem:[%s3 + $0x28] sm:$0xf] %v305
  %338 = vst [vmem:[%s3 + $0x2c] sm:$0xf] %v306
  %339 = vst [vmem:[%s3 + $0x30] sm:$0xf] %v307
  %340 = vst [vmem:[%s3 + $0x34] sm:$0xf] %v308
  %341 = vst [vmem:[%s3 + $0x38] sm:$0xf] %v309
  %342 = vst [vmem:[%s3 + $0x3c] sm:$0xf] %v310
  // Predicated region
  $region14: #{exit_block_forward.2} parent=0 // pred_check
    _
  $region15: #{exit_block_forward.2} parent=0 // pred_check_branch
    %344 = sbr.rel (0) target = $region17
  $region16: #{exit_block_forward.2} parent=0 // pred_region
    _
  $region17: #{exit_block_forward.2} parent=0 // pred_fallthru
    _
  // Predicated region
  $region18: #{exit_block_forward.2} parent=0 // pred_check
    _
  $region19: #{exit_block_forward.2} parent=0 // pred_check_branch
    %346 = sbr.rel (0) target = $region21
  $region20: #{exit_block_forward.2} parent=0 // pred_region
    _
  $region21: #{exit_block_forward.2} parent=0 // pred_fallthru
    _

// kernel: exit_block_forward.3
$region0: #{exit_block_forward.3}
  #allocation0 [shape = 'u32[]', space=smem, size = 0x4, offset = 0x4, fixed_abs, tag = 'smem constant byte address 0x4 - core index']
  #allocation1 [shape = 'u32[144,128]{1,0:T(1,128)}', space=vmem, size = 0x12000, scoped, tag = 'internal scratch']
  %s0 = inlined_call_operand.vmem [shape: bf16[8,8192], index: 0, kind: input, shape index: {}]
  %s1 = inlined_call_operand.vmem [shape: bf16[8192,128], index: 1, kind: input, shape index: {}]
  %s2 = inlined_call_operand.vmem [shape: f32[1,128], index: 2, kind: input, shape index: {}]
  %s3 = inlined_call_operand.vmem [shape: f32[8,128], index: 3, kind: output, shape index: {}]
  %s4 = sld [smem:[#allocation0]]
  $region30: #{exit_block_forward.3} parent=0
    _
  %s6 = ssub.s32 1, %s4
  %s7 = scalar_select 0, %s6, %s4
  // Predicated region
  $region2: #{exit_block_forward.3} parent=0 // pred_check
    _
  $region3: #{exit_block_forward.3} parent=0 // pred_check_branch
    %9 = sbr.rel (0) target = $region5
  $region4: #{exit_block_forward.3} parent=0 // pred_region
    _
  $region5: #{exit_block_forward.3} parent=0 // pred_fallthru
    _
  // Predicated region
  $region6: #{exit_block_forward.3} parent=0 // pred_check
    _
  $region7: #{exit_block_forward.3} parent=0 // pred_check_branch
    %11 = sbr.rel (0) target = $region9
  $region8: #{exit_block_forward.3} parent=0 // pred_region
    _
  $region9: #{exit_block_forward.3} parent=0 // pred_fallthru
    _
  // Predicated region
  $region10: #{exit_block_forward.3} parent=0 // pred_check
    _
  $region11: #{exit_block_forward.3} parent=0 // pred_check_branch
    %13 = sbr.rel (0) target = $region13
  $region12: #{exit_block_forward.3} parent=0 // pred_region
    _
  $region13: #{exit_block_forward.3} parent=0 // pred_fallthru
    _
  %p15 = scmp.eq.s32.totalorder 0, 0
  // Predicated region
  $region14: #{exit_block_forward.3} parent=0 // pred_check
    %p16 = pneg %p15
  $region15: #{exit_block_forward.3} parent=0 // pred_check_branch
    %18 = sbr.rel (%p16) target = $region17
  $region16: #{exit_block_forward.3} parent=0 // pred_region
    %19 = vst [vmem:[%s3] sm:$0xff] 0.0
  $region17: #{exit_block_forward.3} parent=0 // pred_fallthru
    _
  %v20 = vld [vmem:[%s3] sm:$0xff]
  %v21 = vld [vmem:[%s0] sm:$0xff]
  %v22 = vld [vmem:[%s0 + $0x8] sm:$0xff]
  %v23 = vld [vmem:[%s0 + $0x10] sm:$0xff]
  %v24 = vld [vmem:[%s0 + $0x18] sm:$0xff]
  %v25 = vld [vmem:[%s0 + $0x20] sm:$0xff]
  %v26 = vld [vmem:[%s0 + $0x28] sm:$0xff]
  %v27 = vld [vmem:[%s0 + $0x30] sm:$0xff]
  %v28 = vld [vmem:[%s0 + $0x38] sm:$0xff]
  %v29 = vld [vmem:[%s0 + $0x40] sm:$0xff]
  %v30 = vld [vmem:[%s0 + $0x48] sm:$0xff]
  %v31 = vld [vmem:[%s0 + $0x50] sm:$0xff]
  %v32 = vld [vmem:[%s0 + $0x58] sm:$0xff]
  %v33 = vld [vmem:[%s0 + $0x60] sm:$0xff]
  %v34 = vld [vmem:[%s0 + $0x68] sm:$0xff]
  %v35 = vld [vmem:[%s0 + $0x70] sm:$0xff]
  %v36 = vld [vmem:[%s0 + $0x78] sm:$0xff]
  %v37 = vld [vmem:[%s0 + $0x80] sm:$0xff]
  %v38 = vld [vmem:[%s0 + $0x88] sm:$0xff]
  %v39 = vld [vmem:[%s0 + $0x90] sm:$0xff]
  %v40 = vld [vmem:[%s0 + $0x98] sm:$0xff]
  %v41 = vld [vmem:[%s0 + $0xa0] sm:$0xff]
  %v42 = vld [vmem:[%s0 + $0xa8] sm:$0xff]
  %v43 = vld [vmem:[%s0 + $0xb0] sm:$0xff]
  %v44 = vld [vmem:[%s0 + $0xb8] sm:$0xff]
  %v45 = vld [vmem:[%s0 + $0xc0] sm:$0xff]
  %v46 = vld [vmem:[%s0 + $0xc8] sm:$0xff]
  %v47 = vld [vmem:[%s0 + $0xd0] sm:$0xff]
  %v48 = vld [vmem:[%s0 + $0xd8] sm:$0xff]
  %v49 = vld [vmem:[%s0 + $0xe0] sm:$0xff]
  %v50 = vld [vmem:[%s0 + $0xe8] sm:$0xff]
  %v51 = vld [vmem:[%s0 + $0xf0] sm:$0xff]
  %v52 = vld [vmem:[%s0 + $0xf8] sm:$0xff]
  %v53 = vld [vmem:[%s1] sm:$0xf]
  %v54 = vld [vmem:[%s1 + $0x4] sm:$0xf]
  %v55 = vld [vmem:[%s1 + $0x8] sm:$0xf]
  %v56 = vld [vmem:[%s1 + $0xc] sm:$0xf]
  %v57 = vld [vmem:[%s1 + $0x10] sm:$0xf]
  %v58 = vld [vmem:[%s1 + $0x14] sm:$0xf]
  %v59 = vld [vmem:[%s1 + $0x18] sm:$0xf]
  %v60 = vld [vmem:[%s1 + $0x1c] sm:$0xf]
  %v61 = vld [vmem:[%s1 + $0x20] sm:$0xf]
  %v62 = vld [vmem:[%s1 + $0x24] sm:$0xf]
  %v63 = vld [vmem:[%s1 + $0x28] sm:$0xf]
  %v64 = vld [vmem:[%s1 + $0x2c] sm:$0xf]
  %v65 = vld [vmem:[%s1 + $0x30] sm:$0xf]
  %v66 = vld [vmem:[%s1 + $0x34] sm:$0xf]
  %v67 = vld [vmem:[%s1 + $0x38] sm:$0xf]
  %v68 = vld [vmem:[%s1 + $0x3c] sm:$0xf]
  %v69 = vld [vmem:[%s1 + $0x40] sm:$0xf]
  %v70 = vld [vmem:[%s1 + $0x44] sm:$0xf]
  %v71 = vld [vmem:[%s1 + $0x48] sm:$0xf]
  %v72 = vld [vmem:[%s1 + $0x4c] sm:$0xf]
  %v73 = vld [vmem:[%s1 + $0x50] sm:$0xf]
  %v74 = vld [vmem:[%s1 + $0x54] sm:$0xf]
  %v75 = vld [vmem:[%s1 + $0x58] sm:$0xf]
  %v76 = vld [vmem:[%s1 + $0x5c] sm:$0xf]
  %v77 = vld [vmem:[%s1 + $0x60] sm:$0xf]
  %v78 = vld [vmem:[%s1 + $0x64] sm:$0xf]
  %v79 = vld [vmem:[%s1 + $0x68] sm:$0xf]
  %v80 = vld [vmem:[%s1 + $0x6c] sm:$0xf]
  %v81 = vld [vmem:[%s1 + $0x70] sm:$0xf]
  %v82 = vld [vmem:[%s1 + $0x74] sm:$0xf]
  %v83 = vld [vmem:[%s1 + $0x78] sm:$0xf]
  %v84 = vld [vmem:[%s1 + $0x7c] sm:$0xf]
  %v85 = vld [vmem:[%s1 + $0x80] sm:$0xf]
  %v86 = vld [vmem:[%s1 + $0x84] sm:$0xf]
  %v87 = vld [vmem:[%s1 + $0x88] sm:$0xf]
  %v88 = vld [vmem:[%s1 + $0x8c] sm:$0xf]
  %v89 = vld [vmem:[%s1 + $0x90] sm:$0xf]
  %v90 = vld [vmem:[%s1 + $0x94] sm:$0xf]
  %v91 = vld [vmem:[%s1 + $0x98] sm:$0xf]
  %v92 = vld [vmem:[%s1 + $0x9c] sm:$0xf]
  %v93 = vld [vmem:[%s1 + $0xa0] sm:$0xf]
  %v94 = vld [vmem:[%s1 + $0xa4] sm:$0xf]
  %v95 = vld [vmem:[%s1 + $0xa8] sm:$0xf]
  %v96 = vld [vmem:[%s1 + $0xac] sm:$0xf]
  %v97 = vld [vmem:[%s1 + $0xb0] sm:$0xf]
  %v98 = vld [vmem:[%s1 + $0xb4] sm:$0xf]
  %v99 = vld [vmem:[%s1 + $0xb8] sm:$0xf]
  %v100 = vld [vmem:[%s1 + $0xbc] sm:$0xf]
  %v101 = vld [vmem:[%s1 + $0xc0] sm:$0xf]
  %v102 = vld [vmem:[%s1 + $0xc4] sm:$0xf]
  %v103 = vld [vmem:[%s1 + $0xc8] sm:$0xf]
  %v104 = vld [vmem:[%s1 + $0xcc] sm:$0xf]
  %v105 = vld [vmem:[%s1 + $0xd0] sm:$0xf]
  %v106 = vld [vmem:[%s1 + $0xd4] sm:$0xf]
  %v107 = vld [vmem:[%s1 + $0xd8] sm:$0xf]
  %v108 = vld [vmem:[%s1 + $0xdc] sm:$0xf]
  %v109 = vld [vmem:[%s1 + $0xe0] sm:$0xf]
  %v110 = vld [vmem:[%s1 + $0xe4] sm:$0xf]
  %v111 = vld [vmem:[%s1 + $0xe8] sm:$0xf]
  %v112 = vld [vmem:[%s1 + $0xec] sm:$0xf]
  %v113 = vld [vmem:[%s1 + $0xf0] sm:$0xf]
  %v114 = vld [vmem:[%s1 + $0xf4] sm:$0xf]
  %v115 = vld [vmem:[%s1 + $0xf8] sm:$0xf]
  %v116 = vld [vmem:[%s1 + $0xfc] sm:$0xf]
  %v117 = vld [vmem:[%s1 + $0x100] sm:$0xf]
  %v118 = vld [vmem:[%s1 + $0x104] sm:$0xf]
  %v119 = vld [vmem:[%s1 + $0x108] sm:$0xf]
  %v120 = vld [vmem:[%s1 + $0x10c] sm:$0xf]
  %v121 = vld [vmem:[%s1 + $0x110] sm:$0xf]
  %v122 = vld [vmem:[%s1 + $0x114] sm:$0xf]
  %v123 = vld [vmem:[%s1 + $0x118] sm:$0xf]
  %v124 = vld [vmem:[%s1 + $0x11c] sm:$0xf]
  %v125 = vld [vmem:[%s1 + $0x120] sm:$0xf]
  %v126 = vld [vmem:[%s1 + $0x124] sm:$0xf]
  %v127 = vld [vmem:[%s1 + $0x128] sm:$0xf]
  %v128 = vld [vmem:[%s1 + $0x12c] sm:$0xf]
  %v129 = vld [vmem:[%s1 + $0x130] sm:$0xf]
  %v130 = vld [vmem:[%s1 + $0x134] sm:$0xf]
  %v131 = vld [vmem:[%s1 + $0x138] sm:$0xf]
  %v132 = vld [vmem:[%s1 + $0x13c] sm:$0xf]
  %v133 = vld [vmem:[%s1 + $0x140] sm:$0xf]
  %v134 = vld [vmem:[%s1 + $0x144] sm:$0xf]
  %v135 = vld [vmem:[%s1 + $0x148] sm:$0xf]
  %v136 = vld [vmem:[%s1 + $0x14c] sm:$0xf]
  %v137 = vld [vmem:[%s1 + $0x150] sm:$0xf]
  %v138 = vld [vmem:[%s1 + $0x154] sm:$0xf]
  %v139 = vld [vmem:[%s1 + $0x158] sm:$0xf]
  %v140 = vld [vmem:[%s1 + $0x15c] sm:$0xf]
  %v141 = vld [vmem:[%s1 + $0x160] sm:$0xf]
  %v142 = vld [vmem:[%s1 + $0x164] sm:$0xf]
  %v143 = vld [vmem:[%s1 + $0x168] sm:$0xf]
  %v144 = vld [vmem:[%s1 + $0x16c] sm:$0xf]
  %v145 = vld [vmem:[%s1 + $0x170] sm:$0xf]
  %v146 = vld [vmem:[%s1 + $0x174] sm:$0xf]
  %v147 = vld [vmem:[%s1 + $0x178] sm:$0xf]
  %v148 = vld [vmem:[%s1 + $0x17c] sm:$0xf]
  %v149 = vld [vmem:[%s1 + $0x180] sm:$0xf]
  %v150 = vld [vmem:[%s1 + $0x184] sm:$0xf]
  %v151 = vld [vmem:[%s1 + $0x188] sm:$0xf]
  %v152 = vld [vmem:[%s1 + $0x18c] sm:$0xf]
  %v153 = vld [vmem:[%s1 + $0x190] sm:$0xf]
  %v154 = vld [vmem:[%s1 + $0x194] sm:$0xf]
  %v155 = vld [vmem:[%s1 + $0x198] sm:$0xf]
  %v156 = vld [vmem:[%s1 + $0x19c] sm:$0xf]
  %v157 = vld [vmem:[%s1 + $0x1a0] sm:$0xf]
  %v158 = vld [vmem:[%s1 + $0x1a4] sm:$0xf]
  %v159 = vld [vmem:[%s1 + $0x1a8] sm:$0xf]
  %v160 = vld [vmem:[%s1 + $0x1ac] sm:$0xf]
  %v161 = vld [vmem:[%s1 + $0x1b0] sm:$0xf]
  %v162 = vld [vmem:[%s1 + $0x1b4] sm:$0xf]
  %v163 = vld [vmem:[%s1 + $0x1b8] sm:$0xf]
  %v164 = vld [vmem:[%s1 + $0x1bc] sm:$0xf]
  %v165 = vld [vmem:[%s1 + $0x1c0] sm:$0xf]
  %v166 = vld [vmem:[%s1 + $0x1c4] sm:$0xf]
  %v167 = vld [vmem:[%s1 + $0x1c8] sm:$0xf]
  %v168 = vld [vmem:[%s1 + $0x1cc] sm:$0xf]
  %v169 = vld [vmem:[%s1 + $0x1d0] sm:$0xf]
  %v170 = vld [vmem:[%s1 + $0x1d4] sm:$0xf]
  %v171 = vld [vmem:[%s1 + $0x1d8] sm:$0xf]
  %v172 = vld [vmem:[%s1 + $0x1dc] sm:$0xf]
  %v173 = vld [vmem:[%s1 + $0x1e0] sm:$0xf]
  %v174 = vld [vmem:[%s1 + $0x1e4] sm:$0xf]
  %v175 = vld [vmem:[%s1 + $0x1e8] sm:$0xf]
  %v176 = vld [vmem:[%s1 + $0x1ec] sm:$0xf]
  %v177 = vld [vmem:[%s1 + $0x1f0] sm:$0xf]
  %v178 = vld [vmem:[%s1 + $0x1f4] sm:$0xf]
  %v179 = vld [vmem:[%s1 + $0x1f8] sm:$0xf]
  %v180 = vld [vmem:[%s1 + $0x1fc] sm:$0xf]
  %v181 = vld [vmem:[%s1 + $0x200] sm:$0xf]
  %v182 = vld [vmem:[%s1 + $0x204] sm:$0xf]
  %v183 = vld [vmem:[%s1 + $0x208] sm:$0xf]
  %v184 = vld [vmem:[%s1 + $0x20c] sm:$0xf]
  %v185 = vld [vmem:[%s1 + $0x210] sm:$0xf]
  %v186 = vld [vmem:[%s1 + $0x214] sm:$0xf]
  %v187 = vld [vmem:[%s1 + $0x218] sm:$0xf]
  %v188 = vld [vmem:[%s1 + $0x21c] sm:$0xf]
  %v189 = vld [vmem:[%s1 + $0x220] sm:$0xf]
  %v190 = vld [vmem:[%s1 + $0x224] sm:$0xf]
  %v191 = vld [vmem:[%s1 + $0x228] sm:$0xf]
  %v192 = vld [vmem:[%s1 + $0x22c] sm:$0xf]
  %v193 = vld [vmem:[%s1 + $0x230] sm:$0xf]
  %v194 = vld [vmem:[%s1 + $0x234] sm:$0xf]
  %v195 = vld [vmem:[%s1 + $0x238] sm:$0xf]
  %v196 = vld [vmem:[%s1 + $0x23c] sm:$0xf]
  %v197 = vld [vmem:[%s1 + $0x240] sm:$0xf]
  %v198 = vld [vmem:[%s1 + $0x244] sm:$0xf]
  %v199 = vld [vmem:[%s1 + $0x248] sm:$0xf]
  %v200 = vld [vmem:[%s1 + $0x24c] sm:$0xf]
  %v201 = vld [vmem:[%s1 + $0x250] sm:$0xf]
  %v202 = vld [vmem:[%s1 + $0x254] sm:$0xf]
  %v203 = vld [vmem:[%s1 + $0x258] sm:$0xf]
  %v204 = vld [vmem:[%s1 + $0x25c] sm:$0xf]
  %v205 = vld [vmem:[%s1 + $0x260] sm:$0xf]
  %v206 = vld [vmem:[%s1 + $0x264] sm:$0xf]
  %v207 = vld [vmem:[%s1 + $0x268] sm:$0xf]
  %v208 = vld [vmem:[%s1 + $0x26c] sm:$0xf]
  %v209 = vld [vmem:[%s1 + $0x270] sm:$0xf]
  %v210 = vld [vmem:[%s1 + $0x274] sm:$0xf]
  %v211 = vld [vmem:[%s1 + $0x278] sm:$0xf]
  %v212 = vld [vmem:[%s1 + $0x27c] sm:$0xf]
  %v213 = vld [vmem:[%s1 + $0x280] sm:$0xf]
  %v214 = vld [vmem:[%s1 + $0x284] sm:$0xf]
  %v215 = vld [vmem:[%s1 + $0x288] sm:$0xf]
  %v216 = vld [vmem:[%s1 + $0x28c] sm:$0xf]
  %v217 = vld [vmem:[%s1 + $0x290] sm:$0xf]
  %v218 = vld [vmem:[%s1 + $0x294] sm:$0xf]
  %v219 = vld [vmem:[%s1 + $0x298] sm:$0xf]
  %v220 = vld [vmem:[%s1 + $0x29c] sm:$0xf]
  %v221 = vld [vmem:[%s1 + $0x2a0] sm:$0xf]
  %v222 = vld [vmem:[%s1 + $0x2a4] sm:$0xf]
  %v223 = vld [vmem:[%s1 + $0x2a8] sm:$0xf]
  %v224 = vld [vmem:[%s1 + $0x2ac] sm:$0xf]
  %v225 = vld [vmem:[%s1 + $0x2b0] sm:$0xf]
  %v226 = vld [vmem:[%s1 + $0x2b4] sm:$0xf]
  %v227 = vld [vmem:[%s1 + $0x2b8] sm:$0xf]
  %v228 = vld [vmem:[%s1 + $0x2bc] sm:$0xf]
  %v229 = vld [vmem:[%s1 + $0x2c0] sm:$0xf]
  %v230 = vld [vmem:[%s1 + $0x2c4] sm:$0xf]
  %v231 = vld [vmem:[%s1 + $0x2c8] sm:$0xf]
  %v232 = vld [vmem:[%s1 + $0x2cc] sm:$0xf]
  %v233 = vld [vmem:[%s1 + $0x2d0] sm:$0xf]
  %v234 = vld [vmem:[%s1 + $0x2d4] sm:$0xf]
  %v235 = vld [vmem:[%s1 + $0x2d8] sm:$0xf]
  %v236 = vld [vmem:[%s1 + $0x2dc] sm:$0xf]
  %v237 = vld [vmem:[%s1 + $0x2e0] sm:$0xf]
  %v238 = vld [vmem:[%s1 + $0x2e4] sm:$0xf]
  %v239 = vld [vmem:[%s1 + $0x2e8] sm:$0xf]
  %v240 = vld [vmem:[%s1 + $0x2ec] sm:$0xf]
  %v241 = vld [vmem:[%s1 + $0x2f0] sm:$0xf]
  %v242 = vld [vmem:[%s1 + $0x2f4] sm:$0xf]
  %v243 = vld [vmem:[%s1 + $0x2f8] sm:$0xf]
  %v244 = vld [vmem:[%s1 + $0x2fc] sm:$0xf]
  %v245 = vld [vmem:[%s1 + $0x300] sm:$0xf]
  %v246 = vld [vmem:[%s1 + $0x304] sm:$0xf]
  %v247 = vld [vmem:[%s1 + $0x308] sm:$0xf]
  %v248 = vld [vmem:[%s1 + $0x30c] sm:$0xf]
  %v249 = vld [vmem:[%s1 + $0x310] sm:$0xf]
  %v250 = vld [vmem:[%s1 + $0x314] sm:$0xf]
  %v251 = vld [vmem:[%s1 + $0x318] sm:$0xf]
  %v252 = vld [vmem:[%s1 + $0x31c] sm:$0xf]
  %v253 = vld [vmem:[%s1 + $0x320] sm:$0xf]
  %v254 = vld [vmem:[%s1 + $0x324] sm:$0xf]
  %v255 = vld [vmem:[%s1 + $0x328] sm:$0xf]
  %v256 = vld [vmem:[%s1 + $0x32c] sm:$0xf]
  %v257 = vld [vmem:[%s1 + $0x330] sm:$0xf]
  %v258 = vld [vmem:[%s1 + $0x334] sm:$0xf]
  %v259 = vld [vmem:[%s1 + $0x338] sm:$0xf]
  %v260 = vld [vmem:[%s1 + $0x33c] sm:$0xf]
  %v261 = vld [vmem:[%s1 + $0x340] sm:$0xf]
  %v262 = vld [vmem:[%s1 + $0x344] sm:$0xf]
  %v263 = vld [vmem:[%s1 + $0x348] sm:$0xf]
  %v264 = vld [vmem:[%s1 + $0x34c] sm:$0xf]
  %v265 = vld [vmem:[%s1 + $0x350] sm:$0xf]
  %v266 = vld [vmem:[%s1 + $0x354] sm:$0xf]
  %v267 = vld [vmem:[%s1 + $0x358] sm:$0xf]
  %v268 = vld [vmem:[%s1 + $0x35c] sm:$0xf]
  %v269 = vld [vmem:[%s1 + $0x360] sm:$0xf]
  %v270 = vld [vmem:[%s1 + $0x364] sm:$0xf]
  %v271 = vld [vmem:[%s1 + $0x368] sm:$0xf]
  %v272 = vld [vmem:[%s1 + $0x36c] sm:$0xf]
  %v273 = vld [vmem:[%s1 + $0x370] sm:$0xf]
  %v274 = vld [vmem:[%s1 + $0x374] sm:$0xf]
  %v275 = vld [vmem:[%s1 + $0x378] sm:$0xf]
  %v276 = vld [vmem:[%s1 + $0x37c] sm:$0xf]
  %v277 = vld [vmem:[%s1 + $0x380] sm:$0xf]
  %v278 = vld [vmem:[%s1 + $0x384] sm:$0xf]
  %v279 = vld [vmem:[%s1 + $0x388] sm:$0xf]
  %v280 = vld [vmem:[%s1 + $0x38c] sm:$0xf]
  %v281 = vld [vmem:[%s1 + $0x390] sm:$0xf]
  %v282 = vld [vmem:[%s1 + $0x394] sm:$0xf]
  %v283 = vld [vmem:[%s1 + $0x398] sm:$0xf]
  %v284 = vld [vmem:[%s1 + $0x39c] sm:$0xf]
  %v285 = vld [vmem:[%s1 + $0x3a0] sm:$0xf]
  %v286 = vld [vmem:[%s1 + $0x3a4] sm:$0xf]
  %v287 = vld [vmem:[%s1 + $0x3a8] sm:$0xf]
  %v288 = vld [vmem:[%s1 + $0x3ac] sm:$0xf]
  %v289 = vld [vmem:[%s1 + $0x3b0] sm:$0xf]
  %v290 = vld [vmem:[%s1 + $0x3b4] sm:$0xf]
  %v291 = vld [vmem:[%s1 + $0x3b8] sm:$0xf]
  %v292 = vld [vmem:[%s1 + $0x3bc] sm:$0xf]
  %v293 = vld [vmem:[%s1 + $0x3c0] sm:$0xf]
  %v294 = vld [vmem:[%s1 + $0x3c4] sm:$0xf]
  %v295 = vld [vmem:[%s1 + $0x3c8] sm:$0xf]
  %v296 = vld [vmem:[%s1 + $0x3cc] sm:$0xf]
  %v297 = vld [vmem:[%s1 + $0x3d0] sm:$0xf]
  %v298 = vld [vmem:[%s1 + $0x3d4] sm:$0xf]
  %v299 = vld [vmem:[%s1 + $0x3d8] sm:$0xf]
  %v300 = vld [vmem:[%s1 + $0x3dc] sm:$0xf]
  %v301 = vld [vmem:[%s1 + $0x3e0] sm:$0xf]
  %v302 = vld [vmem:[%s1 + $0x3e4] sm:$0xf]
  %v303 = vld [vmem:[%s1 + $0x3e8] sm:$0xf]
  %v304 = vld [vmem:[%s1 + $0x3ec] sm:$0xf]
  %v305 = vld [vmem:[%s1 + $0x3f0] sm:$0xf]
  %v306 = vld [vmem:[%s1 + $0x3f4] sm:$0xf]
  %v307 = vld [vmem:[%s1 + $0x3f8] sm:$0xf]
  %v308 = vld [vmem:[%s1 + $0x3fc] sm:$0xf]
  %v309 = vld [vmem:[%s1 + $0x400] sm:$0xf]
  %v310 = vld [vmem:[%s1 + $0x404] sm:$0xf]
  %v311 = vld [vmem:[%s1 + $0x408] sm:$0xf]
  %v312 = vld [vmem:[%s1 + $0x40c] sm:$0xf]
  %v313 = vld [vmem:[%s1 + $0x410] sm:$0xf]
  %v314 = vld [vmem:[%s1 + $0x414] sm:$0xf]
  %v315 = vld [vmem:[%s1 + $0x418] sm:$0xf]
  %v316 = vld [vmem:[%s1 + $0x41c] sm:$0xf]
  %v317 = vld [vmem:[%s1 + $0x420] sm:$0xf]
  %v318 = vld [vmem:[%s1 + $0x424] sm:$0xf]
  %v319 = vld [vmem:[%s1 + $0x428] sm:$0xf]
  %v320 = vld [vmem:[%s1 + $0x42c] sm:$0xf]
  %v321 = vld [vmem:[%s1 + $0x430] sm:$0xf]
  %v322 = vld [vmem:[%s1 + $0x434] sm:$0xf]
  %v323 = vld [vmem:[%s1 + $0x438] sm:$0xf]
  %v324 = vld [vmem:[%s1 + $0x43c] sm:$0xf]
  %v325 = vld [vmem:[%s1 + $0x440] sm:$0xf]
  %v326 = vld [vmem:[%s1 + $0x444] sm:$0xf]
  %v327 = vld [vmem:[%s1 + $0x448] sm:$0xf]
  %v328 = vld [vmem:[%s1 + $0x44c] sm:$0xf]
  %v329 = vld [vmem:[%s1 + $0x450] sm:$0xf]
  %v330 = vld [vmem:[%s1 + $0x454] sm:$0xf]
  %v331 = vld [vmem:[%s1 + $0x458] sm:$0xf]
  %v332 = vld [vmem:[%s1 + $0x45c] sm:$0xf]
  %v333 = vld [vmem:[%s1 + $0x460] sm:$0xf]
  %v334 = vld [vmem:[%s1 + $0x464] sm:$0xf]
  %v335 = vld [vmem:[%s1 + $0x468] sm:$0xf]
  %v336 = vld [vmem:[%s1 + $0x46c] sm:$0xf]
  %v337 = vld [vmem:[%s1 + $0x470] sm:$0xf]
  %v338 = vld [vmem:[%s1 + $0x474] sm:$0xf]
  %v339 = vld [vmem:[%s1 + $0x478] sm:$0xf]
  %v340 = vld [vmem:[%s1 + $0x47c] sm:$0xf]
  %v341 = vld [vmem:[%s1 + $0x480] sm:$0xf]
  %v342 = vld [vmem:[%s1 + $0x484] sm:$0xf]
  %v343 = vld [vmem:[%s1 + $0x488] sm:$0xf]
  %v344 = vld [vmem:[%s1 + $0x48c] sm:$0xf]
  %v345 = vld [vmem:[%s1 + $0x490] sm:$0xf]
  %v346 = vld [vmem:[%s1 + $0x494] sm:$0xf]
  %v347 = vld [vmem:[%s1 + $0x498] sm:$0xf]
  %v348 = vld [vmem:[%s1 + $0x49c] sm:$0xf]
  %v349 = vld [vmem:[%s1 + $0x4a0] sm:$0xf]
  %v350 = vld [vmem:[%s1 + $0x4a4] sm:$0xf]
  %v351 = vld [vmem:[%s1 + $0x4a8] sm:$0xf]
  %v352 = vld [vmem:[%s1 + $0x4ac] sm:$0xf]
  %v353 = vld [vmem:[%s1 + $0x4b0] sm:$0xf]
  %v354 = vld [vmem:[%s1 + $0x4b4] sm:$0xf]
  %v355 = vld [vmem:[%s1 + $0x4b8] sm:$0xf]
  %v356 = vld [vmem:[%s1 + $0x4bc] sm:$0xf]
  %v357 = vld [vmem:[%s1 + $0x4c0] sm:$0xf]
  %v358 = vld [vmem:[%s1 + $0x4c4] sm:$0xf]
  %v359 = vld [vmem:[%s1 + $0x4c8] sm:$0xf]
  %v360 = vld [vmem:[%s1 + $0x4cc] sm:$0xf]
  %v361 = vld [vmem:[%s1 + $0x4d0] sm:$0xf]
  %v362 = vld [vmem:[%s1 + $0x4d4] sm:$0xf]
  %v363 = vld [vmem:[%s1 + $0x4d8] sm:$0xf]
  %v364 = vld [vmem:[%s1 + $0x4dc] sm:$0xf]
  %v365 = vld [vmem:[%s1 + $0x4e0] sm:$0xf]
  %v366 = vld [vmem:[%s1 + $0x4e4] sm:$0xf]
  %v367 = vld [vmem:[%s1 + $0x4e8] sm:$0xf]
  %v368 = vld [vmem:[%s1 + $0x4ec] sm:$0xf]
  %v369 = vld [vmem:[%s1 + $0x4f0] sm:$0xf]
  %v370 = vld [vmem:[%s1 + $0x4f4] sm:$0xf]
  %v371 = vld [vmem:[%s1 + $0x4f8] sm:$0xf]
  %v372 = vld [vmem:[%s1 + $0x4fc] sm:$0xf]
  %v373 = vld [vmem:[%s1 + $0x500] sm:$0xf]
  %v374 = vld [vmem:[%s1 + $0x504] sm:$0xf]
  %v375 = vld [vmem:[%s1 + $0x508] sm:$0xf]
  %v376 = vld [vmem:[%s1 + $0x50c] sm:$0xf]
  %v377 = vld [vmem:[%s1 + $0x510] sm:$0xf]
  %v378 = vld [vmem:[%s1 + $0x514] sm:$0xf]
  %v379 = vld [vmem:[%s1 + $0x518] sm:$0xf]
  %v380 = vld [vmem:[%s1 + $0x51c] sm:$0xf]
  %v381 = vld [vmem:[%s1 + $0x520] sm:$0xf]
  %v382 = vld [vmem:[%s1 + $0x524] sm:$0xf]
  %v383 = vld [vmem:[%s1 + $0x528] sm:$0xf]
  %v384 = vld [vmem:[%s1 + $0x52c] sm:$0xf]
  %v385 = vld [vmem:[%s1 + $0x530] sm:$0xf]
  %v386 = vld [vmem:[%s1 + $0x534] sm:$0xf]
  %v387 = vld [vmem:[%s1 + $0x538] sm:$0xf]
  %v388 = vld [vmem:[%s1 + $0x53c] sm:$0xf]
  %v389 = vld [vmem:[%s1 + $0x540] sm:$0xf]
  %v390 = vld [vmem:[%s1 + $0x544] sm:$0xf]
  %v391 = vld [vmem:[%s1 + $0x548] sm:$0xf]
  %v392 = vld [vmem:[%s1 + $0x54c] sm:$0xf]
  %v393 = vld [vmem:[%s1 + $0x550] sm:$0xf]
  %v394 = vld [vmem:[%s1 + $0x554] sm:$0xf]
  %v395 = vld [vmem:[%s1 + $0x558] sm:$0xf]
  %v396 = vld [vmem:[%s1 + $0x55c] sm:$0xf]
  %v397 = vld [vmem:[%s1 + $0x560] sm:$0xf]
  %v398 = vld [vmem:[%s1 + $0x564] sm:$0xf]
  %v399 = vld [vmem:[%s1 + $0x568] sm:$0xf]
  %v400 = vld [vmem:[%s1 + $0x56c] sm:$0xf]
  %v401 = vld [vmem:[%s1 + $0x570] sm:$0xf]
  %v402 = vld [vmem:[%s1 + $0x574] sm:$0xf]
  %v403 = vld [vmem:[%s1 + $0x578] sm:$0xf]
  %v404 = vld [vmem:[%s1 + $0x57c] sm:$0xf]
  %v405 = vld [vmem:[%s1 + $0x580] sm:$0xf]
  %v406 = vld [vmem:[%s1 + $0x584] sm:$0xf]
  %v407 = vld [vmem:[%s1 + $0x588] sm:$0xf]
  %v408 = vld [vmem:[%s1 + $0x58c] sm:$0xf]
  %v409 = vld [vmem:[%s1 + $0x590] sm:$0xf]
  %v410 = vld [vmem:[%s1 + $0x594] sm:$0xf]
  %v411 = vld [vmem:[%s1 + $0x598] sm:$0xf]
  %v412 = vld [vmem:[%s1 + $0x59c] sm:$0xf]
  %v413 = vld [vmem:[%s1 + $0x5a0] sm:$0xf]
  %v414 = vld [vmem:[%s1 + $0x5a4] sm:$0xf]
  %v415 = vld [vmem:[%s1 + $0x5a8] sm:$0xf]
  %v416 = vld [vmem:[%s1 + $0x5ac] sm:$0xf]
  %v417 = vld [vmem:[%s1 + $0x5b0] sm:$0xf]
  %v418 = vld [vmem:[%s1 + $0x5b4] sm:$0xf]
  %v419 = vld [vmem:[%s1 + $0x5b8] sm:$0xf]
  %v420 = vld [vmem:[%s1 + $0x5bc] sm:$0xf]
  %v421 = vld [vmem:[%s1 + $0x5c0] sm:$0xf]
  %v422 = vld [vmem:[%s1 + $0x5c4] sm:$0xf]
  %v423 = vld [vmem:[%s1 + $0x5c8] sm:$0xf]
  %v424 = vld [vmem:[%s1 + $0x5cc] sm:$0xf]
  %v425 = vld [vmem:[%s1 + $0x5d0] sm:$0xf]
  %v426 = vld [vmem:[%s1 + $0x5d4] sm:$0xf]
  %v427 = vld [vmem:[%s1 + $0x5d8] sm:$0xf]
  %v428 = vld [vmem:[%s1 + $0x5dc] sm:$0xf]
  %v429 = vld [vmem:[%s1 + $0x5e0] sm:$0xf]
  %v430 = vld [vmem:[%s1 + $0x5e4] sm:$0xf]
  %v431 = vld [vmem:[%s1 + $0x5e8] sm:$0xf]
  %v432 = vld [vmem:[%s1 + $0x5ec] sm:$0xf]
  %v433 = vld [vmem:[%s1 + $0x5f0] sm:$0xf]
  %v434 = vld [vmem:[%s1 + $0x5f4] sm:$0xf]
  %v435 = vld [vmem:[%s1 + $0x5f8] sm:$0xf]
  %v436 = vld [vmem:[%s1 + $0x5fc] sm:$0xf]
  %v437 = vld [vmem:[%s1 + $0x600] sm:$0xf]
  %v438 = vld [vmem:[%s1 + $0x604] sm:$0xf]
  %v439 = vld [vmem:[%s1 + $0x608] sm:$0xf]
  %v440 = vld [vmem:[%s1 + $0x60c] sm:$0xf]
  %v441 = vld [vmem:[%s1 + $0x610] sm:$0xf]
  %v442 = vld [vmem:[%s1 + $0x614] sm:$0xf]
  %v443 = vld [vmem:[%s1 + $0x618] sm:$0xf]
  %v444 = vld [vmem:[%s1 + $0x61c] sm:$0xf]
  %v445 = vld [vmem:[%s1 + $0x620] sm:$0xf]
  %v446 = vld [vmem:[%s1 + $0x624] sm:$0xf]
  %v447 = vld [vmem:[%s1 + $0x628] sm:$0xf]
  %v448 = vld [vmem:[%s1 + $0x62c] sm:$0xf]
  %v449 = vld [vmem:[%s1 + $0x630] sm:$0xf]
  %v450 = vld [vmem:[%s1 + $0x634] sm:$0xf]
  %v451 = vld [vmem:[%s1 + $0x638] sm:$0xf]
  %v452 = vld [vmem:[%s1 + $0x63c] sm:$0xf]
  %v453 = vld [vmem:[%s1 + $0x640] sm:$0xf]
  %v454 = vld [vmem:[%s1 + $0x644] sm:$0xf]
  %v455 = vld [vmem:[%s1 + $0x648] sm:$0xf]
  %v456 = vld [vmem:[%s1 + $0x64c] sm:$0xf]
  %v457 = vld [vmem:[%s1 + $0x650] sm:$0xf]
  %v458 = vld [vmem:[%s1 + $0x654] sm:$0xf]
  %v459 = vld [vmem:[%s1 + $0x658] sm:$0xf]
  %v460 = vld [vmem:[%s1 + $0x65c] sm:$0xf]
  %v461 = vld [vmem:[%s1 + $0x660] sm:$0xf]
  %v462 = vld [vmem:[%s1 + $0x664] sm:$0xf]
  %v463 = vld [vmem:[%s1 + $0x668] sm:$0xf]
  %v464 = vld [vmem:[%s1 + $0x66c] sm:$0xf]
  %v465 = vld [vmem:[%s1 + $0x670] sm:$0xf]
  %v466 = vld [vmem:[%s1 + $0x674] sm:$0xf]
  %v467 = vld [vmem:[%s1 + $0x678] sm:$0xf]
  %v468 = vld [vmem:[%s1 + $0x67c] sm:$0xf]
  %v469 = vld [vmem:[%s1 + $0x680] sm:$0xf]
  %v470 = vld [vmem:[%s1 + $0x684] sm:$0xf]
  %v471 = vld [vmem:[%s1 + $0x688] sm:$0xf]
  %v472 = vld [vmem:[%s1 + $0x68c] sm:$0xf]
  %v473 = vld [vmem:[%s1 + $0x690] sm:$0xf]
  %v474 = vld [vmem:[%s1 + $0x694] sm:$0xf]
  %v475 = vld [vmem:[%s1 + $0x698] sm:$0xf]
  %v476 = vld [vmem:[%s1 + $0x69c] sm:$0xf]
  %v477 = vld [vmem:[%s1 + $0x6a0] sm:$0xf]
  %v478 = vld [vmem:[%s1 + $0x6a4] sm:$0xf]
  %v479 = vld [vmem:[%s1 + $0x6a8] sm:$0xf]
  %v480 = vld [vmem:[%s1 + $0x6ac] sm:$0xf]
  %v481 = vld [vmem:[%s1 + $0x6b0] sm:$0xf]
  %v482 = vld [vmem:[%s1 + $0x6b4] sm:$0xf]
  %v483 = vld [vmem:[%s1 + $0x6b8] sm:$0xf]
  %v484 = vld [vmem:[%s1 + $0x6bc] sm:$0xf]
  %v485 = vld [vmem:[%s1 + $0x6c0] sm:$0xf]
  %v486 = vld [vmem:[%s1 + $0x6c4] sm:$0xf]
  %v487 = vld [vmem:[%s1 + $0x6c8] sm:$0xf]
  %v488 = vld [vmem:[%s1 + $0x6cc] sm:$0xf]
  %v489 = vld [vmem:[%s1 + $0x6d0] sm:$0xf]
  %v490 = vld [vmem:[%s1 + $0x6d4] sm:$0xf]
  %v491 = vld [vmem:[%s1 + $0x6d8] sm:$0xf]
  %v492 = vld [vmem:[%s1 + $0x6dc] sm:$0xf]
  %v493 = vld [vmem:[%s1 + $0x6e0] sm:$0xf]
  %v494 = vld [vmem:[%s1 + $0x6e4] sm:$0xf]
  %v495 = vld [vmem:[%s1 + $0x6e8] sm:$0xf]
  %v496 = vld [vmem:[%s1 + $0x6ec] sm:$0xf]
  %v497 = vld [vmem:[%s1 + $0x6f0] sm:$0xf]
  %v498 = vld [vmem:[%s1 + $0x6f4] sm:$0xf]
  %v499 = vld [vmem:[%s1 + $0x6f8] sm:$0xf]
  %v500 = vld [vmem:[%s1 + $0x6fc] sm:$0xf]
  %v501 = vld [vmem:[%s1 + $0x700] sm:$0xf]
  %v502 = vld [vmem:[%s1 + $0x704] sm:$0xf]
  %v503 = vld [vmem:[%s1 + $0x708] sm:$0xf]
  %v504 = vld [vmem:[%s1 + $0x70c] sm:$0xf]
  %v505 = vld [vmem:[%s1 + $0x710] sm:$0xf]
  %v506 = vld [vmem:[%s1 + $0x714] sm:$0xf]
  %v507 = vld [vmem:[%s1 + $0x718] sm:$0xf]
  %v508 = vld [vmem:[%s1 + $0x71c] sm:$0xf]
  %v509 = vld [vmem:[%s1 + $0x720] sm:$0xf]
  %v510 = vld [vmem:[%s1 + $0x724] sm:$0xf]
  %v511 = vld [vmem:[%s1 + $0x728] sm:$0xf]
  %v512 = vld [vmem:[%s1 + $0x72c] sm:$0xf]
  %v513 = vld [vmem:[%s1 + $0x730] sm:$0xf]
  %v514 = vld [vmem:[%s1 + $0x734] sm:$0xf]
  %v515 = vld [vmem:[%s1 + $0x738] sm:$0xf]
  %v516 = vld [vmem:[%s1 + $0x73c] sm:$0xf]
  %v517 = vld [vmem:[%s1 + $0x740] sm:$0xf]
  %v518 = vld [vmem:[%s1 + $0x744] sm:$0xf]
  %v519 = vld [vmem:[%s1 + $0x748] sm:$0xf]
  %v520 = vld [vmem:[%s1 + $0x74c] sm:$0xf]
  %v521 = vld [vmem:[%s1 + $0x750] sm:$0xf]
  %v522 = vld [vmem:[%s1 + $0x754] sm:$0xf]
  %v523 = vld [vmem:[%s1 + $0x758] sm:$0xf]
  %v524 = vld [vmem:[%s1 + $0x75c] sm:$0xf]
  %v525 = vld [vmem:[%s1 + $0x760] sm:$0xf]
  %v526 = vld [vmem:[%s1 + $0x764] sm:$0xf]
  %v527 = vld [vmem:[%s1 + $0x768] sm:$0xf]
  %v528 = vld [vmem:[%s1 + $0x76c] sm:$0xf]
  %v529 = vld [vmem:[%s1 + $0x770] sm:$0xf]
  %v530 = vld [vmem:[%s1 + $0x774] sm:$0xf]
  %v531 = vld [vmem:[%s1 + $0x778] sm:$0xf]
  %v532 = vld [vmem:[%s1 + $0x77c] sm:$0xf]
  %v533 = vld [vmem:[%s1 + $0x780] sm:$0xf]
  %v534 = vld [vmem:[%s1 + $0x784] sm:$0xf]
  %v535 = vld [vmem:[%s1 + $0x788] sm:$0xf]
  %v536 = vld [vmem:[%s1 + $0x78c] sm:$0xf]
  %v537 = vld [vmem:[%s1 + $0x790] sm:$0xf]
  %v538 = vld [vmem:[%s1 + $0x794] sm:$0xf]
  %v539 = vld [vmem:[%s1 + $0x798] sm:$0xf]
  %v540 = vld [vmem:[%s1 + $0x79c] sm:$0xf]
  %v541 = vld [vmem:[%s1 + $0x7a0] sm:$0xf]
  %v542 = vld [vmem:[%s1 + $0x7a4] sm:$0xf]
  %v543 = vld [vmem:[%s1 + $0x7a8] sm:$0xf]
  %v544 = vld [vmem:[%s1 + $0x7ac] sm:$0xf]
  %v545 = vld [vmem:[%s1 + $0x7b0] sm:$0xf]
  %v546 = vld [vmem:[%s1 + $0x7b4] sm:$0xf]
  %v547 = vld [vmem:[%s1 + $0x7b8] sm:$0xf]
  %v548 = vld [vmem:[%s1 + $0x7bc] sm:$0xf]
  %v549 = vld [vmem:[%s1 + $0x7c0] sm:$0xf]
  %v550 = vld [vmem:[%s1 + $0x7c4] sm:$0xf]
  %v551 = vld [vmem:[%s1 + $0x7c8] sm:$0xf]
  %v552 = vld [vmem:[%s1 + $0x7cc] sm:$0xf]
  %v553 = vld [vmem:[%s1 + $0x7d0] sm:$0xf]
  %v554 = vld [vmem:[%s1 + $0x7d4] sm:$0xf]
  %v555 = vld [vmem:[%s1 + $0x7d8] sm:$0xf]
  %v556 = vld [vmem:[%s1 + $0x7dc] sm:$0xf]
  %v557 = vld [vmem:[%s1 + $0x7e0] sm:$0xf]
  %v558 = vld [vmem:[%s1 + $0x7e4] sm:$0xf]
  %v559 = vld [vmem:[%s1 + $0x7e8] sm:$0xf]
  %v560 = vld [vmem:[%s1 + $0x7ec] sm:$0xf]
  %v561 = vld [vmem:[%s1 + $0x7f0] sm:$0xf]
  %v562 = vld [vmem:[%s1 + $0x7f4] sm:$0xf]
  %v563 = vld [vmem:[%s1 + $0x7f8] sm:$0xf]
  %v564 = vld [vmem:[%s1 + $0x7fc] sm:$0xf]
  %v565 = vld [vmem:[%s1 + $0x800] sm:$0xf]
  %v566 = vld [vmem:[%s1 + $0x804] sm:$0xf]
  %v567 = vld [vmem:[%s1 + $0x808] sm:$0xf]
  %v568 = vld [vmem:[%s1 + $0x80c] sm:$0xf]
  %v569 = vld [vmem:[%s1 + $0x810] sm:$0xf]
  %v570 = vld [vmem:[%s1 + $0x814] sm:$0xf]
  %v571 = vld [vmem:[%s1 + $0x818] sm:$0xf]
  %v572 = vld [vmem:[%s1 + $0x81c] sm:$0xf]
  %v573 = vld [vmem:[%s1 + $0x820] sm:$0xf]
  %v574 = vld [vmem:[%s1 + $0x824] sm:$0xf]
  %v575 = vld [vmem:[%s1 + $0x828] sm:$0xf]
  %v576 = vld [vmem:[%s1 + $0x82c] sm:$0xf]
  %v577 = vld [vmem:[%s1 + $0x830] sm:$0xf]
  %v578 = vld [vmem:[%s1 + $0x834] sm:$0xf]
  %v579 = vld [vmem:[%s1 + $0x838] sm:$0xf]
  %v580 = vld [vmem:[%s1 + $0x83c] sm:$0xf]
  %v581 = vld [vmem:[%s1 + $0x840] sm:$0xf]
  %v582 = vld [vmem:[%s1 + $0x844] sm:$0xf]
  %v583 = vld [vmem:[%s1 + $0x848] sm:$0xf]
  %v584 = vld [vmem:[%s1 + $0x84c] sm:$0xf]
  %v585 = vld [vmem:[%s1 + $0x850] sm:$0xf]
  %v586 = vld [vmem:[%s1 + $0x854] sm:$0xf]
  %v587 = vld [vmem:[%s1 + $0x858] sm:$0xf]
  %v588 = vld [vmem:[%s1 + $0x85c] sm:$0xf]
  %v589 = vld [vmem:[%s1 + $0x860] sm:$0xf]
  %v590 = vld [vmem:[%s1 + $0x864] sm:$0xf]
  %v591 = vld [vmem:[%s1 + $0x868] sm:$0xf]
  %v592 = vld [vmem:[%s1 + $0x86c] sm:$0xf]
  %v593 = vld [vmem:[%s1 + $0x870] sm:$0xf]
  %v594 = vld [vmem:[%s1 + $0x874] sm:$0xf]
  %v595 = vld [vmem:[%s1 + $0x878] sm:$0xf]
  %v596 = vld [vmem:[%s1 + $0x87c] sm:$0xf]
  %v597 = vld [vmem:[%s1 + $0x880] sm:$0xf]
  %v598 = vld [vmem:[%s1 + $0x884] sm:$0xf]
  %v599 = vld [vmem:[%s1 + $0x888] sm:$0xf]
  %v600 = vld [vmem:[%s1 + $0x88c] sm:$0xf]
  %v601 = vld [vmem:[%s1 + $0x890] sm:$0xf]
  %v602 = vld [vmem:[%s1 + $0x894] sm:$0xf]
  %v603 = vld [vmem:[%s1 + $0x898] sm:$0xf]
  %v604 = vld [vmem:[%s1 + $0x89c] sm:$0xf]
  %v605 = vld [vmem:[%s1 + $0x8a0] sm:$0xf]
  %v606 = vld [vmem:[%s1 + $0x8a4] sm:$0xf]
  %v607 = vld [vmem:[%s1 + $0x8a8] sm:$0xf]
  %v608 = vld [vmem:[%s1 + $0x8ac] sm:$0xf]
  %v609 = vld [vmem:[%s1 + $0x8b0] sm:$0xf]
  %v610 = vld [vmem:[%s1 + $0x8b4] sm:$0xf]
  %v611 = vld [vmem:[%s1 + $0x8b8] sm:$0xf]
  %v612 = vld [vmem:[%s1 + $0x8bc] sm:$0xf]
  %v613 = vld [vmem:[%s1 + $0x8c0] sm:$0xf]
  %v614 = vld [vmem:[%s1 + $0x8c4] sm:$0xf]
  %v615 = vld [vmem:[%s1 + $0x8c8] sm:$0xf]
  %v616 = vld [vmem:[%s1 + $0x8cc] sm:$0xf]
  %v617 = vld [vmem:[%s1 + $0x8d0] sm:$0xf]
  %v618 = vld [vmem:[%s1 + $0x8d4] sm:$0xf]
  %v619 = vld [vmem:[%s1 + $0x8d8] sm:$0xf]
  %v620 = vld [vmem:[%s1 + $0x8dc] sm:$0xf]
  %v621 = vld [vmem:[%s1 + $0x8e0] sm:$0xf]
  %v622 = vld [vmem:[%s1 + $0x8e4] sm:$0xf]
  %v623 = vld [vmem:[%s1 + $0x8e8] sm:$0xf]
  %v624 = vld [vmem:[%s1 + $0x8ec] sm:$0xf]
  %v625 = vld [vmem:[%s1 + $0x8f0] sm:$0xf]
  %v626 = vld [vmem:[%s1 + $0x8f4] sm:$0xf]
  %v627 = vld [vmem:[%s1 + $0x8f8] sm:$0xf]
  %v628 = vld [vmem:[%s1 + $0x8fc] sm:$0xf]
  %v629 = vld [vmem:[%s1 + $0x900] sm:$0xf]
  %v630 = vld [vmem:[%s1 + $0x904] sm:$0xf]
  %v631 = vld [vmem:[%s1 + $0x908] sm:$0xf]
  %v632 = vld [vmem:[%s1 + $0x90c] sm:$0xf]
  %v633 = vld [vmem:[%s1 + $0x910] sm:$0xf]
  %v634 = vld [vmem:[%s1 + $0x914] sm:$0xf]
  %v635 = vld [vmem:[%s1 + $0x918] sm:$0xf]
  %v636 = vld [vmem:[%s1 + $0x91c] sm:$0xf]
  %v637 = vld [vmem:[%s1 + $0x920] sm:$0xf]
  %v638 = vld [vmem:[%s1 + $0x924] sm:$0xf]
  %v639 = vld [vmem:[%s1 + $0x928] sm:$0xf]
  %v640 = vld [vmem:[%s1 + $0x92c] sm:$0xf]
  %v641 = vld [vmem:[%s1 + $0x930] sm:$0xf]
  %v642 = vld [vmem:[%s1 + $0x934] sm:$0xf]
  %v643 = vld [vmem:[%s1 + $0x938] sm:$0xf]
  %v644 = vld [vmem:[%s1 + $0x93c] sm:$0xf]
  %v645 = vld [vmem:[%s1 + $0x940] sm:$0xf]
  %v646 = vld [vmem:[%s1 + $0x944] sm:$0xf]
  %v647 = vld [vmem:[%s1 + $0x948] sm:$0xf]
  %v648 = vld [vmem:[%s1 + $0x94c] sm:$0xf]
  %v649 = vld [vmem:[%s1 + $0x950] sm:$0xf]
  %v650 = vld [vmem:[%s1 + $0x954] sm:$0xf]
  %v651 = vld [vmem:[%s1 + $0x958] sm:$0xf]
  %v652 = vld [vmem:[%s1 + $0x95c] sm:$0xf]
  %v653 = vld [vmem:[%s1 + $0x960] sm:$0xf]
  %v654 = vld [vmem:[%s1 + $0x964] sm:$0xf]
  %v655 = vld [vmem:[%s1 + $0x968] sm:$0xf]
  %v656 = vld [vmem:[%s1 + $0x96c] sm:$0xf]
  %v657 = vld [vmem:[%s1 + $0x970] sm:$0xf]
  %v658 = vld [vmem:[%s1 + $0x974] sm:$0xf]
  %v659 = vld [vmem:[%s1 + $0x978] sm:$0xf]
  %v660 = vld [vmem:[%s1 + $0x97c] sm:$0xf]
  %v661 = vld [vmem:[%s1 + $0x980] sm:$0xf]
  %v662 = vld [vmem:[%s1 + $0x984] sm:$0xf]
  %v663 = vld [vmem:[%s1 + $0x988] sm:$0xf]
  %v664 = vld [vmem:[%s1 + $0x98c] sm:$0xf]
  %v665 = vld [vmem:[%s1 + $0x990] sm:$0xf]
  %v666 = vld [vmem:[%s1 + $0x994] sm:$0xf]
  %v667 = vld [vmem:[%s1 + $0x998] sm:$0xf]
  %v668 = vld [vmem:[%s1 + $0x99c] sm:$0xf]
  %v669 = vld [vmem:[%s1 + $0x9a0] sm:$0xf]
  %v670 = vld [vmem:[%s1 + $0x9a4] sm:$0xf]
  %v671 = vld [vmem:[%s1 + $0x9a8] sm:$0xf]
  %v672 = vld [vmem:[%s1 + $0x9ac] sm:$0xf]
  %v673 = vld [vmem:[%s1 + $0x9b0] sm:$0xf]
  %v674 = vld [vmem:[%s1 + $0x9b4] sm:$0xf]
  %v675 = vld [vmem:[%s1 + $0x9b8] sm:$0xf]
  %v676 = vld [vmem:[%s1 + $0x9bc] sm:$0xf]
  %v677 = vld [vmem:[%s1 + $0x9c0] sm:$0xf]
  %v678 = vld [vmem:[%s1 + $0x9c4] sm:$0xf]
  %v679 = vld [vmem:[%s1 + $0x9c8] sm:$0xf]
  %v680 = vld [vmem:[%s1 + $0x9cc] sm:$0xf]
  %v681 = vld [vmem:[%s1 + $0x9d0] sm:$0xf]
  %v682 = vld [vmem:[%s1 + $0x9d4] sm:$0xf]
  %v683 = vld [vmem:[%s1 + $0x9d8] sm:$0xf]
  %v684 = vld [vmem:[%s1 + $0x9dc] sm:$0xf]
  %v685 = vld [vmem:[%s1 + $0x9e0] sm:$0xf]
  %v686 = vld [vmem:[%s1 + $0x9e4] sm:$0xf]
  %v687 = vld [vmem:[%s1 + $0x9e8] sm:$0xf]
  %v688 = vld [vmem:[%s1 + $0x9ec] sm:$0xf]
  %v689 = vld [vmem:[%s1 + $0x9f0] sm:$0xf]
  %v690 = vld [vmem:[%s1 + $0x9f4] sm:$0xf]
  %v691 = vld [vmem:[%s1 + $0x9f8] sm:$0xf]
  %v692 = vld [vmem:[%s1 + $0x9fc] sm:$0xf]
  %v693 = vld [vmem:[%s1 + $0xa00] sm:$0xf]
  %v694 = vld [vmem:[%s1 + $0xa04] sm:$0xf]
  %v695 = vld [vmem:[%s1 + $0xa08] sm:$0xf]
  %v696 = vld [vmem:[%s1 + $0xa0c] sm:$0xf]
  %v697 = vld [vmem:[%s1 + $0xa10] sm:$0xf]
  %v698 = vld [vmem:[%s1 + $0xa14] sm:$0xf]
  %v699 = vld [vmem:[%s1 + $0xa18] sm:$0xf]
  %v700 = vld [vmem:[%s1 + $0xa1c] sm:$0xf]
  %v701 = vld [vmem:[%s1 + $0xa20] sm:$0xf]
  %v702 = vld [vmem:[%s1 + $0xa24] sm:$0xf]
  %v703 = vld [vmem:[%s1 + $0xa28] sm:$0xf]
  %v704 = vld [vmem:[%s1 + $0xa2c] sm:$0xf]
  %v705 = vld [vmem:[%s1 + $0xa30] sm:$0xf]
  %v706 = vld [vmem:[%s1 + $0xa34] sm:$0xf]
  %v707 = vld [vmem:[%s1 + $0xa38] sm:$0xf]
  %v708 = vld [vmem:[%s1 + $0xa3c] sm:$0xf]
  %v709 = vld [vmem:[%s1 + $0xa40] sm:$0xf]
  %v710 = vld [vmem:[%s1 + $0xa44] sm:$0xf]
  %v711 = vld [vmem:[%s1 + $0xa48] sm:$0xf]
  %v712 = vld [vmem:[%s1 + $0xa4c] sm:$0xf]
  %v713 = vld [vmem:[%s1 + $0xa50] sm:$0xf]
  %v714 = vld [vmem:[%s1 + $0xa54] sm:$0xf]
  %v715 = vld [vmem:[%s1 + $0xa58] sm:$0xf]
  %v716 = vld [vmem:[%s1 + $0xa5c] sm:$0xf]
  %v717 = vld [vmem:[%s1 + $0xa60] sm:$0xf]
  %v718 = vld [vmem:[%s1 + $0xa64] sm:$0xf]
  %v719 = vld [vmem:[%s1 + $0xa68] sm:$0xf]
  %v720 = vld [vmem:[%s1 + $0xa6c] sm:$0xf]
  %v721 = vld [vmem:[%s1 + $0xa70] sm:$0xf]
  %v722 = vld [vmem:[%s1 + $0xa74] sm:$0xf]
  %v723 = vld [vmem:[%s1 + $0xa78] sm:$0xf]
  %v724 = vld [vmem:[%s1 + $0xa7c] sm:$0xf]
  %v725 = vld [vmem:[%s1 + $0xa80] sm:$0xf]
  %v726 = vld [vmem:[%s1 + $0xa84] sm:$0xf]
  %v727 = vld [vmem:[%s1 + $0xa88] sm:$0xf]
  %v728 = vld [vmem:[%s1 + $0xa8c] sm:$0xf]
  %v729 = vld [vmem:[%s1 + $0xa90] sm:$0xf]
  %v730 = vld [vmem:[%s1 + $0xa94] sm:$0xf]
  %v731 = vld [vmem:[%s1 + $0xa98] sm:$0xf]
  %v732 = vld [vmem:[%s1 + $0xa9c] sm:$0xf]
  %v733 = vld [vmem:[%s1 + $0xaa0] sm:$0xf]
  %v734 = vld [vmem:[%s1 + $0xaa4] sm:$0xf]
  %v735 = vld [vmem:[%s1 + $0xaa8] sm:$0xf]
  %v736 = vld [vmem:[%s1 + $0xaac] sm:$0xf]
  %v737 = vld [vmem:[%s1 + $0xab0] sm:$0xf]
  %v738 = vld [vmem:[%s1 + $0xab4] sm:$0xf]
  %v739 = vld [vmem:[%s1 + $0xab8] sm:$0xf]
  %v740 = vld [vmem:[%s1 + $0xabc] sm:$0xf]
  %v741 = vld [vmem:[%s1 + $0xac0] sm:$0xf]
  %v742 = vld [vmem:[%s1 + $0xac4] sm:$0xf]
  %v743 = vld [vmem:[%s1 + $0xac8] sm:$0xf]
  %v744 = vld [vmem:[%s1 + $0xacc] sm:$0xf]
  %v745 = vld [vmem:[%s1 + $0xad0] sm:$0xf]
  %v746 = vld [vmem:[%s1 + $0xad4] sm:$0xf]
  %v747 = vld [vmem:[%s1 + $0xad8] sm:$0xf]
  %v748 = vld [vmem:[%s1 + $0xadc] sm:$0xf]
  %v749 = vld [vmem:[%s1 + $0xae0] sm:$0xf]
  %v750 = vld [vmem:[%s1 + $0xae4] sm:$0xf]
  %v751 = vld [vmem:[%s1 + $0xae8] sm:$0xf]
  %v752 = vld [vmem:[%s1 + $0xaec] sm:$0xf]
  %v753 = vld [vmem:[%s1 + $0xaf0] sm:$0xf]
  %v754 = vld [vmem:[%s1 + $0xaf4] sm:$0xf]
  %v755 = vld [vmem:[%s1 + $0xaf8] sm:$0xf]
  %v756 = vld [vmem:[%s1 + $0xafc] sm:$0xf]
  %v757 = vld [vmem:[%s1 + $0xb00] sm:$0xf]
  %v758 = vld [vmem:[%s1 + $0xb04] sm:$0xf]
  %v759 = vld [vmem:[%s1 + $0xb08] sm:$0xf]
  %v760 = vld [vmem:[%s1 + $0xb0c] sm:$0xf]
  %v761 = vld [vmem:[%s1 + $0xb10] sm:$0xf]
  %v762 = vld [vmem:[%s1 + $0xb14] sm:$0xf]
  %v763 = vld [vmem:[%s1 + $0xb18] sm:$0xf]
  %v764 = vld [vmem:[%s1 + $0xb1c] sm:$0xf]
  %v765 = vld [vmem:[%s1 + $0xb20] sm:$0xf]
  %v766 = vld [vmem:[%s1 + $0xb24] sm:$0xf]
  %v767 = vld [vmem:[%s1 + $0xb28] sm:$0xf]
  %v768 = vld [vmem:[%s1 + $0xb2c] sm:$0xf]
  %v769 = vld [vmem:[%s1 + $0xb30] sm:$0xf]
  %v770 = vld [vmem:[%s1 + $0xb34] sm:$0xf]
  %v771 = vld [vmem:[%s1 + $0xb38] sm:$0xf]
  %v772 = vld [vmem:[%s1 + $0xb3c] sm:$0xf]
  %v773 = vld [vmem:[%s1 + $0xb40] sm:$0xf]
  %v774 = vld [vmem:[%s1 + $0xb44] sm:$0xf]
  %v775 = vld [vmem:[%s1 + $0xb48] sm:$0xf]
  %v776 = vld [vmem:[%s1 + $0xb4c] sm:$0xf]
  %v777 = vld [vmem:[%s1 + $0xb50] sm:$0xf]
  %v778 = vld [vmem:[%s1 + $0xb54] sm:$0xf]
  %v779 = vld [vmem:[%s1 + $0xb58] sm:$0xf]
  %v780 = vld [vmem:[%s1 + $0xb5c] sm:$0xf]
  %v781 = vld [vmem:[%s1 + $0xb60] sm:$0xf]
  %v782 = vld [vmem:[%s1 + $0xb64] sm:$0xf]
  %v783 = vld [vmem:[%s1 + $0xb68] sm:$0xf]
  %v784 = vld [vmem:[%s1 + $0xb6c] sm:$0xf]
  %v785 = vld [vmem:[%s1 + $0xb70] sm:$0xf]
  %v786 = vld [vmem:[%s1 + $0xb74] sm:$0xf]
  %v787 = vld [vmem:[%s1 + $0xb78] sm:$0xf]
  %v788 = vld [vmem:[%s1 + $0xb7c] sm:$0xf]
  %v789 = vld [vmem:[%s1 + $0xb80] sm:$0xf]
  %v790 = vld [vmem:[%s1 + $0xb84] sm:$0xf]
  %v791 = vld [vmem:[%s1 + $0xb88] sm:$0xf]
  %v792 = vld [vmem:[%s1 + $0xb8c] sm:$0xf]
  %v793 = vld [vmem:[%s1 + $0xb90] sm:$0xf]
  %v794 = vld [vmem:[%s1 + $0xb94] sm:$0xf]
  %v795 = vld [vmem:[%s1 + $0xb98] sm:$0xf]
  %v796 = vld [vmem:[%s1 + $0xb9c] sm:$0xf]
  %v797 = vld [vmem:[%s1 + $0xba0] sm:$0xf]
  %v798 = vld [vmem:[%s1 + $0xba4] sm:$0xf]
  %v799 = vld [vmem:[%s1 + $0xba8] sm:$0xf]
  %v800 = vld [vmem:[%s1 + $0xbac] sm:$0xf]
  %v801 = vld [vmem:[%s1 + $0xbb0] sm:$0xf]
  %v802 = vld [vmem:[%s1 + $0xbb4] sm:$0xf]
  %v803 = vld [vmem:[%s1 + $0xbb8] sm:$0xf]
  %v804 = vld [vmem:[%s1 + $0xbbc] sm:$0xf]
  %v805 = vld [vmem:[%s1 + $0xbc0] sm:$0xf]
  %v806 = vld [vmem:[%s1 + $0xbc4] sm:$0xf]
  %v807 = vld [vmem:[%s1 + $0xbc8] sm:$0xf]
  %v808 = vld [vmem:[%s1 + $0xbcc] sm:$0xf]
  %v809 = vld [vmem:[%s1 + $0xbd0] sm:$0xf]
  %v810 = vld [vmem:[%s1 + $0xbd4] sm:$0xf]
  %v811 = vld [vmem:[%s1 + $0xbd8] sm:$0xf]
  %v812 = vld [vmem:[%s1 + $0xbdc] sm:$0xf]
  %v813 = vld [vmem:[%s1 + $0xbe0] sm:$0xf]
  %v814 = vld [vmem:[%s1 + $0xbe4] sm:$0xf]
  %v815 = vld [vmem:[%s1 + $0xbe8] sm:$0xf]
  %v816 = vld [vmem:[%s1 + $0xbec] sm:$0xf]
  %v817 = vld [vmem:[%s1 + $0xbf0] sm:$0xf]
  %v818 = vld [vmem:[%s1 + $0xbf4] sm:$0xf]
  %v819 = vld [vmem:[%s1 + $0xbf8] sm:$0xf]
  %v820 = vld [vmem:[%s1 + $0xbfc] sm:$0xf]
  %v821 = vld [vmem:[%s1 + $0xc00] sm:$0xf]
  %v822 = vld [vmem:[%s1 + $0xc04] sm:$0xf]
  %v823 = vld [vmem:[%s1 + $0xc08] sm:$0xf]
  %v824 = vld [vmem:[%s1 + $0xc0c] sm:$0xf]
  %v825 = vld [vmem:[%s1 + $0xc10] sm:$0xf]
  %v826 = vld [vmem:[%s1 + $0xc14] sm:$0xf]
  %v827 = vld [vmem:[%s1 + $0xc18] sm:$0xf]
  %v828 = vld [vmem:[%s1 + $0xc1c] sm:$0xf]
  %v829 = vld [vmem:[%s1 + $0xc20] sm:$0xf]
  %v830 = vld [vmem:[%s1 + $0xc24] sm:$0xf]
  %v831 = vld [vmem:[%s1 + $0xc28] sm:$0xf]
  %v832 = vld [vmem:[%s1 + $0xc2c] sm:$0xf]
  %v833 = vld [vmem:[%s1 + $0xc30] sm:$0xf]
  %v834 = vld [vmem:[%s1 + $0xc34] sm:$0xf]
  %v835 = vld [vmem:[%s1 + $0xc38] sm:$0xf]
  %v836 = vld [vmem:[%s1 + $0xc3c] sm:$0xf]
  %v837 = vld [vmem:[%s1 + $0xc40] sm:$0xf]
  %v838 = vld [vmem:[%s1 + $0xc44] sm:$0xf]
  %v839 = vld [vmem:[%s1 + $0xc48] sm:$0xf]
  %v840 = vld [vmem:[%s1 + $0xc4c] sm:$0xf]
  %v841 = vld [vmem:[%s1 + $0xc50] sm:$0xf]
  %v842 = vld [vmem:[%s1 + $0xc54] sm:$0xf]
  %v843 = vld [vmem:[%s1 + $0xc58] sm:$0xf]
  %v844 = vld [vmem:[%s1 + $0xc5c] sm:$0xf]
  %v845 = vld [vmem:[%s1 + $0xc60] sm:$0xf]
  %v846 = vld [vmem:[%s1 + $0xc64] sm:$0xf]
  %v847 = vld [vmem:[%s1 + $0xc68] sm:$0xf]
  %v848 = vld [vmem:[%s1 + $0xc6c] sm:$0xf]
  %v849 = vld [vmem:[%s1 + $0xc70] sm:$0xf]
  %v850 = vld [vmem:[%s1 + $0xc74] sm:$0xf]
  %v851 = vld [vmem:[%s1 + $0xc78] sm:$0xf]
  %v852 = vld [vmem:[%s1 + $0xc7c] sm:$0xf]
  %v853 = vld [vmem:[%s1 + $0xc80] sm:$0xf]
  %v854 = vld [vmem:[%s1 + $0xc84] sm:$0xf]
  %v855 = vld [vmem:[%s1 + $0xc88] sm:$0xf]
  %v856 = vld [vmem:[%s1 + $0xc8c] sm:$0xf]
  %v857 = vld [vmem:[%s1 + $0xc90] sm:$0xf]
  %v858 = vld [vmem:[%s1 + $0xc94] sm:$0xf]
  %v859 = vld [vmem:[%s1 + $0xc98] sm:$0xf]
  %v860 = vld [vmem:[%s1 + $0xc9c] sm:$0xf]
  %v861 = vld [vmem:[%s1 + $0xca0] sm:$0xf]
  %v862 = vld [vmem:[%s1 + $0xca4] sm:$0xf]
  %v863 = vld [vmem:[%s1 + $0xca8] sm:$0xf]
  %v864 = vld [vmem:[%s1 + $0xcac] sm:$0xf]
  %v865 = vld [vmem:[%s1 + $0xcb0] sm:$0xf]
  %v866 = vld [vmem:[%s1 + $0xcb4] sm:$0xf]
  %v867 = vld [vmem:[%s1 + $0xcb8] sm:$0xf]
  %v868 = vld [vmem:[%s1 + $0xcbc] sm:$0xf]
  %v869 = vld [vmem:[%s1 + $0xcc0] sm:$0xf]
  %v870 = vld [vmem:[%s1 + $0xcc4] sm:$0xf]
  %v871 = vld [vmem:[%s1 + $0xcc8] sm:$0xf]
  %v872 = vld [vmem:[%s1 + $0xccc] sm:$0xf]
  %v873 = vld [vmem:[%s1 + $0xcd0] sm:$0xf]
  %v874 = vld [vmem:[%s1 + $0xcd4] sm:$0xf]
  %v875 = vld [vmem:[%s1 + $0xcd8] sm:$0xf]
  %v876 = vld [vmem:[%s1 + $0xcdc] sm:$0xf]
  %v877 = vld [vmem:[%s1 + $0xce0] sm:$0xf]
  %v878 = vld [vmem:[%s1 + $0xce4] sm:$0xf]
  %v879 = vld [vmem:[%s1 + $0xce8] sm:$0xf]
  %v880 = vld [vmem:[%s1 + $0xcec] sm:$0xf]
  %v881 = vld [vmem:[%s1 + $0xcf0] sm:$0xf]
  %v882 = vld [vmem:[%s1 + $0xcf4] sm:$0xf]
  %v883 = vld [vmem:[%s1 + $0xcf8] sm:$0xf]
  %v884 = vld [vmem:[%s1 + $0xcfc] sm:$0xf]
  %v885 = vld [vmem:[%s1 + $0xd00] sm:$0xf]
  %v886 = vld [vmem:[%s1 + $0xd04] sm:$0xf]
  %v887 = vld [vmem:[%s1 + $0xd08] sm:$0xf]
  %v888 = vld [vmem:[%s1 + $0xd0c] sm:$0xf]
  %v889 = vld [vmem:[%s1 + $0xd10] sm:$0xf]
  %v890 = vld [vmem:[%s1 + $0xd14] sm:$0xf]
  %v891 = vld [vmem:[%s1 + $0xd18] sm:$0xf]
  %v892 = vld [vmem:[%s1 + $0xd1c] sm:$0xf]
  %v893 = vld [vmem:[%s1 + $0xd20] sm:$0xf]
  %v894 = vld [vmem:[%s1 + $0xd24] sm:$0xf]
  %v895 = vld [vmem:[%s1 + $0xd28] sm:$0xf]
  %v896 = vld [vmem:[%s1 + $0xd2c] sm:$0xf]
  %v897 = vld [vmem:[%s1 + $0xd30] sm:$0xf]
  %v898 = vld [vmem:[%s1 + $0xd34] sm:$0xf]
  %v899 = vld [vmem:[%s1 + $0xd38] sm:$0xf]
  %v900 = vld [vmem:[%s1 + $0xd3c] sm:$0xf]
  %v901 = vld [vmem:[%s1 + $0xd40] sm:$0xf]
  %v902 = vld [vmem:[%s1 + $0xd44] sm:$0xf]
  %v903 = vld [vmem:[%s1 + $0xd48] sm:$0xf]
  %v904 = vld [vmem:[%s1 + $0xd4c] sm:$0xf]
  %v905 = vld [vmem:[%s1 + $0xd50] sm:$0xf]
  %v906 = vld [vmem:[%s1 + $0xd54] sm:$0xf]
  %v907 = vld [vmem:[%s1 + $0xd58] sm:$0xf]
  %v908 = vld [vmem:[%s1 + $0xd5c] sm:$0xf]
  %v909 = vld [vmem:[%s1 + $0xd60] sm:$0xf]
  %v910 = vld [vmem:[%s1 + $0xd64] sm:$0xf]
  %v911 = vld [vmem:[%s1 + $0xd68] sm:$0xf]
  %v912 = vld [vmem:[%s1 + $0xd6c] sm:$0xf]
  %v913 = vld [vmem:[%s1 + $0xd70] sm:$0xf]
  %v914 = vld [vmem:[%s1 + $0xd74] sm:$0xf]
  %v915 = vld [vmem:[%s1 + $0xd78] sm:$0xf]
  %v916 = vld [vmem:[%s1 + $0xd7c] sm:$0xf]
  %v917 = vld [vmem:[%s1 + $0xd80] sm:$0xf]
  %v918 = vld [vmem:[%s1 + $0xd84] sm:$0xf]
  %v919 = vld [vmem:[%s1 + $0xd88] sm:$0xf]
  %v920 = vld [vmem:[%s1 + $0xd8c] sm:$0xf]
  %v921 = vld [vmem:[%s1 + $0xd90] sm:$0xf]
  %v922 = vld [vmem:[%s1 + $0xd94] sm:$0xf]
  %v923 = vld [vmem:[%s1 + $0xd98] sm:$0xf]
  %v924 = vld [vmem:[%s1 + $0xd9c] sm:$0xf]
  %v925 = vld [vmem:[%s1 + $0xda0] sm:$0xf]
  %v926 = vld [vmem:[%s1 + $0xda4] sm:$0xf]
  %v927 = vld [vmem:[%s1 + $0xda8] sm:$0xf]
  %v928 = vld [vmem:[%s1 + $0xdac] sm:$0xf]
  %v929 = vld [vmem:[%s1 + $0xdb0] sm:$0xf]
  %v930 = vld [vmem:[%s1 + $0xdb4] sm:$0xf]
  %v931 = vld [vmem:[%s1 + $0xdb8] sm:$0xf]
  %v932 = vld [vmem:[%s1 + $0xdbc] sm:$0xf]
  %v933 = vld [vmem:[%s1 + $0xdc0] sm:$0xf]
  %v934 = vld [vmem:[%s1 + $0xdc4] sm:$0xf]
  %v935 = vld [vmem:[%s1 + $0xdc8] sm:$0xf]
  %v936 = vld [vmem:[%s1 + $0xdcc] sm:$0xf]
  %v937 = vld [vmem:[%s1 + $0xdd0] sm:$0xf]
  %v938 = vld [vmem:[%s1 + $0xdd4] sm:$0xf]
  %v939 = vld [vmem:[%s1 + $0xdd8] sm:$0xf]
  %v940 = vld [vmem:[%s1 + $0xddc] sm:$0xf]
  %v941 = vld [vmem:[%s1 + $0xde0] sm:$0xf]
  %v942 = vld [vmem:[%s1 + $0xde4] sm:$0xf]
  %v943 = vld [vmem:[%s1 + $0xde8] sm:$0xf]
  %v944 = vld [vmem:[%s1 + $0xdec] sm:$0xf]
  %v945 = vld [vmem:[%s1 + $0xdf0] sm:$0xf]
  %v946 = vld [vmem:[%s1 + $0xdf4] sm:$0xf]
  %v947 = vld [vmem:[%s1 + $0xdf8] sm:$0xf]
  %v948 = vld [vmem:[%s1 + $0xdfc] sm:$0xf]
  %v949 = vld [vmem:[%s1 + $0xe00] sm:$0xf]
  %v950 = vld [vmem:[%s1 + $0xe04] sm:$0xf]
  %v951 = vld [vmem:[%s1 + $0xe08] sm:$0xf]
  %v952 = vld [vmem:[%s1 + $0xe0c] sm:$0xf]
  %v953 = vld [vmem:[%s1 + $0xe10] sm:$0xf]
  %v954 = vld [vmem:[%s1 + $0xe14] sm:$0xf]
  %v955 = vld [vmem:[%s1 + $0xe18] sm:$0xf]
  %v956 = vld [vmem:[%s1 + $0xe1c] sm:$0xf]
  %v957 = vld [vmem:[%s1 + $0xe20] sm:$0xf]
  %v958 = vld [vmem:[%s1 + $0xe24] sm:$0xf]
  %v959 = vld [vmem:[%s1 + $0xe28] sm:$0xf]
  %v960 = vld [vmem:[%s1 + $0xe2c] sm:$0xf]
  %v961 = vld [vmem:[%s1 + $0xe30] sm:$0xf]
  %v962 = vld [vmem:[%s1 + $0xe34] sm:$0xf]
  %v963 = vld [vmem:[%s1 + $0xe38] sm:$0xf]
  %v964 = vld [vmem:[%s1 + $0xe3c] sm:$0xf]
  %v965 = vld [vmem:[%s1 + $0xe40] sm:$0xf]
  %v966 = vld [vmem:[%s1 + $0xe44] sm:$0xf]
  %v967 = vld [vmem:[%s1 + $0xe48] sm:$0xf]
  %v968 = vld [vmem:[%s1 + $0xe4c] sm:$0xf]
  %v969 = vld [vmem:[%s1 + $0xe50] sm:$0xf]
  %v970 = vld [vmem:[%s1 + $0xe54] sm:$0xf]
  %v971 = vld [vmem:[%s1 + $0xe58] sm:$0xf]
  %v972 = vld [vmem:[%s1 + $0xe5c] sm:$0xf]
  %v973 = vld [vmem:[%s1 + $0xe60] sm:$0xf]
  %v974 = vld [vmem:[%s1 + $0xe64] sm:$0xf]
  %v975 = vld [vmem:[%s1 + $0xe68] sm:$0xf]
  %v976 = vld [vmem:[%s1 + $0xe6c] sm:$0xf]
  %v977 = vld [vmem:[%s1 + $0xe70] sm:$0xf]
  %v978 = vld [vmem:[%s1 + $0xe74] sm:$0xf]
  %v979 = vld [vmem:[%s1 + $0xe78] sm:$0xf]
  %v980 = vld [vmem:[%s1 + $0xe7c] sm:$0xf]
  %v981 = vld [vmem:[%s1 + $0xe80] sm:$0xf]
  %v982 = vld [vmem:[%s1 + $0xe84] sm:$0xf]
  %v983 = vld [vmem:[%s1 + $0xe88] sm:$0xf]
  %v984 = vld [vmem:[%s1 + $0xe8c] sm:$0xf]
  %v985 = vld [vmem:[%s1 + $0xe90] sm:$0xf]
  %v986 = vld [vmem:[%s1 + $0xe94] sm:$0xf]
  %v987 = vld [vmem:[%s1 + $0xe98] sm:$0xf]
  %v988 = vld [vmem:[%s1 + $0xe9c] sm:$0xf]
  %v989 = vld [vmem:[%s1 + $0xea0] sm:$0xf]
  %v990 = vld [vmem:[%s1 + $0xea4] sm:$0xf]
  %v991 = vld [vmem:[%s1 + $0xea8] sm:$0xf]
  %v992 = vld [vmem:[%s1 + $0xeac] sm:$0xf]
  %v993 = vld [vmem:[%s1 + $0xeb0] sm:$0xf]
  %v994 = vld [vmem:[%s1 + $0xeb4] sm:$0xf]
  %v995 = vld [vmem:[%s1 + $0xeb8] sm:$0xf]
  %v996 = vld [vmem:[%s1 + $0xebc] sm:$0xf]
  %v997 = vld [vmem:[%s1 + $0xec0] sm:$0xf]
  %v998 = vld [vmem:[%s1 + $0xec4] sm:$0xf]
  %v999 = vld [vmem:[%s1 + $0xec8] sm:$0xf]
  %v1000 = vld [vmem:[%s1 + $0xecc] sm:$0xf]
  %v1001 = vld [vmem:[%s1 + $0xed0] sm:$0xf]
  %v1002 = vld [vmem:[%s1 + $0xed4] sm:$0xf]
  %v1003 = vld [vmem:[%s1 + $0xed8] sm:$0xf]
  %v1004 = vld [vmem:[%s1 + $0xedc] sm:$0xf]
  %v1005 = vld [vmem:[%s1 + $0xee0] sm:$0xf]
  %v1006 = vld [vmem:[%s1 + $0xee4] sm:$0xf]
  %v1007 = vld [vmem:[%s1 + $0xee8] sm:$0xf]
  %v1008 = vld [vmem:[%s1 + $0xeec] sm:$0xf]
  %v1009 = vld [vmem:[%s1 + $0xef0] sm:$0xf]
  %v1010 = vld [vmem:[%s1 + $0xef4] sm:$0xf]
  %v1011 = vld [vmem:[%s1 + $0xef8] sm:$0xf]
  %v1012 = vld [vmem:[%s1 + $0xefc] sm:$0xf]
  %v1013 = vld [vmem:[%s1 + $0xf00] sm:$0xf]
  %v1014 = vld [vmem:[%s1 + $0xf04] sm:$0xf]
  %v1015 = vld [vmem:[%s1 + $0xf08] sm:$0xf]
  %v1016 = vld [vmem:[%s1 + $0xf0c] sm:$0xf]
  %v1017 = vld [vmem:[%s1 + $0xf10] sm:$0xf]
  %v1018 = vld [vmem:[%s1 + $0xf14] sm:$0xf]
  %v1019 = vld [vmem:[%s1 + $0xf18] sm:$0xf]
  %v1020 = vld [vmem:[%s1 + $0xf1c] sm:$0xf]
  %v1021 = vld [vmem:[%s1 + $0xf20] sm:$0xf]
  %v1022 = vld [vmem:[%s1 + $0xf24] sm:$0xf]
  %v1023 = vld [vmem:[%s1 + $0xf28] sm:$0xf]
  %v1024 = vld [vmem:[%s1 + $0xf2c] sm:$0xf]
  %v1025 = vld [vmem:[%s1 + $0xf30] sm:$0xf]
  %v1026 = vld [vmem:[%s1 + $0xf34] sm:$0xf]
  %v1027 = vld [vmem:[%s1 + $0xf38] sm:$0xf]
  %v1028 = vld [vmem:[%s1 + $0xf3c] sm:$0xf]
  %v1029 = vld [vmem:[%s1 + $0xf40] sm:$0xf]
  %v1030 = vld [vmem:[%s1 + $0xf44] sm:$0xf]
  %v1031 = vld [vmem:[%s1 + $0xf48] sm:$0xf]
  %v1032 = vld [vmem:[%s1 + $0xf4c] sm:$0xf]
  %v1033 = vld [vmem:[%s1 + $0xf50] sm:$0xf]
  %v1034 = vld [vmem:[%s1 + $0xf54] sm:$0xf]
  %v1035 = vld [vmem:[%s1 + $0xf58] sm:$0xf]
  %v1036 = vld [vmem:[%s1 + $0xf5c] sm:$0xf]
  %v1037 = vld [vmem:[%s1 + $0xf60] sm:$0xf]
  %v1038 = vld [vmem:[%s1 + $0xf64] sm:$0xf]
  %v1039 = vld [vmem:[%s1 + $0xf68] sm:$0xf]
  %v1040 = vld [vmem:[%s1 + $0xf6c] sm:$0xf]
  %v1041 = vld [vmem:[%s1 + $0xf70] sm:$0xf]
  %v1042 = vld [vmem:[%s1 + $0xf74] sm:$0xf]
  %v1043 = vld [vmem:[%s1 + $0xf78] sm:$0xf]
  %v1044 = vld [vmem:[%s1 + $0xf7c] sm:$0xf]
  %v1045 = vld [vmem:[%s1 + $0xf80] sm:$0xf]
  %v1046 = vld [vmem:[%s1 + $0xf84] sm:$0xf]
  %v1047 = vld [vmem:[%s1 + $0xf88] sm:$0xf]
  %v1048 = vld [vmem:[%s1 + $0xf8c] sm:$0xf]
  %v1049 = vld [vmem:[%s1 + $0xf90] sm:$0xf]
  %v1050 = vld [vmem:[%s1 + $0xf94] sm:$0xf]
  %v1051 = vld [vmem:[%s1 + $0xf98] sm:$0xf]
  %v1052 = vld [vmem:[%s1 + $0xf9c] sm:$0xf]
  %v1053 = vld [vmem:[%s1 + $0xfa0] sm:$0xf]
  %v1054 = vld [vmem:[%s1 + $0xfa4] sm:$0xf]
  %v1055 = vld [vmem:[%s1 + $0xfa8] sm:$0xf]
  %v1056 = vld [vmem:[%s1 + $0xfac] sm:$0xf]
  %v1057 = vld [vmem:[%s1 + $0xfb0] sm:$0xf]
  %v1058 = vld [vmem:[%s1 + $0xfb4] sm:$0xf]
  %v1059 = vld [vmem:[%s1 + $0xfb8] sm:$0xf]
  %v1060 = vld [vmem:[%s1 + $0xfbc] sm:$0xf]
  %v1061 = vld [vmem:[%s1 + $0xfc0] sm:$0xf]
  %v1062 = vld [vmem:[%s1 + $0xfc4] sm:$0xf]
  %v1063 = vld [vmem:[%s1 + $0xfc8] sm:$0xf]
  %v1064 = vld [vmem:[%s1 + $0xfcc] sm:$0xf]
  %v1065 = vld [vmem:[%s1 + $0xfd0] sm:$0xf]
  %v1066 = vld [vmem:[%s1 + $0xfd4] sm:$0xf]
  %v1067 = vld [vmem:[%s1 + $0xfd8] sm:$0xf]
  %v1068 = vld [vmem:[%s1 + $0xfdc] sm:$0xf]
  %v1069 = vld [vmem:[%s1 + $0xfe0] sm:$0xf]
  %v1070 = vld [vmem:[%s1 + $0xfe4] sm:$0xf]
  %v1071 = vld [vmem:[%s1 + $0xfe8] sm:$0xf]
  %v1072 = vld [vmem:[%s1 + $0xfec] sm:$0xf]
  %v1073 = vld [vmem:[%s1 + $0xff0] sm:$0xf]
  %v1074 = vld [vmem:[%s1 + $0xff4] sm:$0xf]
  %v1075 = vld [vmem:[%s1 + $0xff8] sm:$0xf]
  %v1076 = vld [vmem:[%s1 + $0xffc] sm:$0xf]
  %v1109 = vunpack.c.l.b16 %v21
  %v1110 = vunpack.c.h.b16 %v21
  %v1111 = vunpack.c.l.b16 %v22
  %v1112 = vunpack.c.h.b16 %v22
  %v1113 = vunpack.c.l.b16 %v23
  %v1114 = vunpack.c.h.b16 %v23
  %v1115 = vunpack.c.l.b16 %v24
  %v1116 = vunpack.c.h.b16 %v24
  %v1117 = vunpack.c.l.b16 %v25
  %v1118 = vunpack.c.h.b16 %v25
  %v1119 = vunpack.c.l.b16 %v26
  %v1120 = vunpack.c.h.b16 %v26
  %v1121 = vunpack.c.l.b16 %v27
  %v1122 = vunpack.c.h.b16 %v27
  %v1123 = vunpack.c.l.b16 %v28
  %v1124 = vunpack.c.h.b16 %v28
  %v1125 = vunpack.c.l.b16 %v29
  %v1126 = vunpack.c.h.b16 %v29
  %v1127 = vunpack.c.l.b16 %v30
  %v1128 = vunpack.c.h.b16 %v30
  %v1129 = vunpack.c.l.b16 %v31
  %v1130 = vunpack.c.h.b16 %v31
  %v1131 = vunpack.c.l.b16 %v32
  %v1132 = vunpack.c.h.b16 %v32
  %v1133 = vunpack.c.l.b16 %v33
  %v1134 = vunpack.c.h.b16 %v33
  %v1135 = vunpack.c.l.b16 %v34
  %v1136 = vunpack.c.h.b16 %v34
  %v1137 = vunpack.c.l.b16 %v35
  %v1138 = vunpack.c.h.b16 %v35
  %v1139 = vunpack.c.l.b16 %v36
  %v1140 = vunpack.c.h.b16 %v36
  %v1141 = vunpack.c.l.b16 %v37
  %v1142 = vunpack.c.h.b16 %v37
  %v1143 = vunpack.c.l.b16 %v38
  %v1144 = vunpack.c.h.b16 %v38
  %v1145 = vunpack.c.l.b16 %v39
  %v1146 = vunpack.c.h.b16 %v39
  %v1147 = vunpack.c.l.b16 %v40
  %v1148 = vunpack.c.h.b16 %v40
  %v1149 = vunpack.c.l.b16 %v41
  %v1150 = vunpack.c.h.b16 %v41
  %v1151 = vunpack.c.l.b16 %v42
  %v1152 = vunpack.c.h.b16 %v42
  %v1153 = vunpack.c.l.b16 %v43
  %v1154 = vunpack.c.h.b16 %v43
  %v1155 = vunpack.c.l.b16 %v44
  %v1156 = vunpack.c.h.b16 %v44
  %v1157 = vunpack.c.l.b16 %v45
  %v1158 = vunpack.c.h.b16 %v45
  %v1159 = vunpack.c.l.b16 %v46
  %v1160 = vunpack.c.h.b16 %v46
  %v1161 = vunpack.c.l.b16 %v47
  %v1162 = vunpack.c.h.b16 %v47
  %v1163 = vunpack.c.l.b16 %v48
  %v1164 = vunpack.c.h.b16 %v48
  %v1165 = vunpack.c.l.b16 %v49
  %v1166 = vunpack.c.h.b16 %v49
  %v1167 = vunpack.c.l.b16 %v50
  %v1168 = vunpack.c.h.b16 %v50
  %v1169 = vunpack.c.l.b16 %v51
  %v1170 = vunpack.c.h.b16 %v51
  %v1171 = vunpack.c.l.b16 %v52
  %v1172 = vunpack.c.h.b16 %v52
  %v1173 = vpack.c.b16 %v1109, %v1109
  %v1174 = vpack.c.b16 %v1110, %v1110
  %v1175 = vpack.c.b16 %v1111, %v1111
  %v1176 = vpack.c.b16 %v1112, %v1112
  %v1177 = vpack.c.b16 %v1113, %v1113
  %v1178 = vpack.c.b16 %v1114, %v1114
  %v1179 = vpack.c.b16 %v1115, %v1115
  %v1180 = vpack.c.b16 %v1116, %v1116
  %v1181 = vpack.c.b16 %v1117, %v1117
  %v1182 = vpack.c.b16 %v1118, %v1118
  %v1183 = vpack.c.b16 %v1119, %v1119
  %v1184 = vpack.c.b16 %v1120, %v1120
  %v1185 = vpack.c.b16 %v1121, %v1121
  %v1186 = vpack.c.b16 %v1122, %v1122
  %v1187 = vpack.c.b16 %v1123, %v1123
  %v1188 = vpack.c.b16 %v1124, %v1124
  %v1189 = vpack.c.b16 %v1125, %v1125
  %v1190 = vpack.c.b16 %v1126, %v1126
  %v1191 = vpack.c.b16 %v1127, %v1127
  %v1192 = vpack.c.b16 %v1128, %v1128
  %v1193 = vpack.c.b16 %v1129, %v1129
  %v1194 = vpack.c.b16 %v1130, %v1130
  %v1195 = vpack.c.b16 %v1131, %v1131
  %v1196 = vpack.c.b16 %v1132, %v1132
  %v1197 = vpack.c.b16 %v1133, %v1133
  %v1198 = vpack.c.b16 %v1134, %v1134
  %v1199 = vpack.c.b16 %v1135, %v1135
  %v1200 = vpack.c.b16 %v1136, %v1136
  %v1201 = vpack.c.b16 %v1137, %v1137
  %v1202 = vpack.c.b16 %v1138, %v1138
  %v1203 = vpack.c.b16 %v1139, %v1139
  %v1204 = vpack.c.b16 %v1140, %v1140
  %v1205 = vpack.c.b16 %v1141, %v1141
  %v1206 = vpack.c.b16 %v1142, %v1142
  %v1207 = vpack.c.b16 %v1143, %v1143
  %v1208 = vpack.c.b16 %v1144, %v1144
  %v1209 = vpack.c.b16 %v1145, %v1145
  %v1210 = vpack.c.b16 %v1146, %v1146
  %v1211 = vpack.c.b16 %v1147, %v1147
  %v1212 = vpack.c.b16 %v1148, %v1148
  %v1213 = vpack.c.b16 %v1149, %v1149
  %v1214 = vpack.c.b16 %v1150, %v1150
  %v1215 = vpack.c.b16 %v1151, %v1151
  %v1216 = vpack.c.b16 %v1152, %v1152
  %v1217 = vpack.c.b16 %v1153, %v1153
  %v1218 = vpack.c.b16 %v1154, %v1154
  %v1219 = vpack.c.b16 %v1155, %v1155
  %v1220 = vpack.c.b16 %v1156, %v1156
  %v1221 = vpack.c.b16 %v1157, %v1157
  %v1222 = vpack.c.b16 %v1158, %v1158
  %v1223 = vpack.c.b16 %v1159, %v1159
  %v1224 = vpack.c.b16 %v1160, %v1160
  %v1225 = vpack.c.b16 %v1161, %v1161
  %v1226 = vpack.c.b16 %v1162, %v1162
  %v1227 = vpack.c.b16 %v1163, %v1163
  %v1228 = vpack.c.b16 %v1164, %v1164
  %v1229 = vpack.c.b16 %v1165, %v1165
  %v1230 = vpack.c.b16 %v1166, %v1166
  %v1231 = vpack.c.b16 %v1167, %v1167
  %v1232 = vpack.c.b16 %v1168, %v1168
  %v1233 = vpack.c.b16 %v1169, %v1169
  %v1234 = vpack.c.b16 %v1170, %v1170
  %v1235 = vpack.c.b16 %v1171, %v1171
  %v1236 = vpack.c.b16 %v1172, %v1172
  %v2325 = vunpack.c.l.b16 %v53
  %v2326 = vunpack.c.l.b16 %v54
  %v2327 = vunpack.c.l.b16 %v55
  %v2328 = vunpack.c.l.b16 %v56
  %v2329 = vunpack.c.l.b16 %v57
  %v2330 = vunpack.c.l.b16 %v58
  %v2331 = vunpack.c.l.b16 %v59
  %v2332 = vunpack.c.l.b16 %v60
  %v2333 = vunpack.c.l.b16 %v61
  %v2334 = vunpack.c.l.b16 %v62
  %v2335 = vunpack.c.l.b16 %v63
  %v2336 = vunpack.c.l.b16 %v64
  %v2337 = vunpack.c.l.b16 %v65
  %v2338 = vunpack.c.l.b16 %v66
  %v2339 = vunpack.c.l.b16 %v67
  %v2340 = vunpack.c.l.b16 %v68
  %v2341 = vunpack.c.l.b16 %v69
  %v2342 = vunpack.c.l.b16 %v70
  %v2343 = vunpack.c.l.b16 %v71
  %v2344 = vunpack.c.l.b16 %v72
  %v2345 = vunpack.c.l.b16 %v73
  %v2346 = vunpack.c.l.b16 %v74
  %v2347 = vunpack.c.l.b16 %v75
  %v2348 = vunpack.c.l.b16 %v76
  %v2349 = vunpack.c.l.b16 %v77
  %v2350 = vunpack.c.l.b16 %v78
  %v2351 = vunpack.c.l.b16 %v79
  %v2352 = vunpack.c.l.b16 %v80
  %v2353 = vunpack.c.l.b16 %v81
  %v2354 = vunpack.c.l.b16 %v82
  %v2355 = vunpack.c.l.b16 %v83
  %v2356 = vunpack.c.l.b16 %v84
  %v2357 = vunpack.c.l.b16 %v85
  %v2358 = vunpack.c.l.b16 %v86
  %v2359 = vunpack.c.l.b16 %v87
  %v2360 = vunpack.c.l.b16 %v88
  %v2361 = vunpack.c.l.b16 %v89
  %v2362 = vunpack.c.l.b16 %v90
  %v2363 = vunpack.c.l.b16 %v91
  %v2364 = vunpack.c.l.b16 %v92
  %v2365 = vunpack.c.l.b16 %v93
  %v2366 = vunpack.c.l.b16 %v94
  %v2367 = vunpack.c.l.b16 %v95
  %v2368 = vunpack.c.l.b16 %v96
  %v2369 = vunpack.c.l.b16 %v97
  %v2370 = vunpack.c.l.b16 %v98
  %v2371 = vunpack.c.l.b16 %v99
  %v2372 = vunpack.c.l.b16 %v100
  %v2373 = vunpack.c.l.b16 %v101
  %v2374 = vunpack.c.l.b16 %v102
  %v2375 = vunpack.c.l.b16 %v103
  %v2376 = vunpack.c.l.b16 %v104
  %v2377 = vunpack.c.l.b16 %v105
  %v2378 = vunpack.c.l.b16 %v106
  %v2379 = vunpack.c.l.b16 %v107
  %v2380 = vunpack.c.l.b16 %v108
  %v2381 = vunpack.c.l.b16 %v109
  %v2382 = vunpack.c.l.b16 %v110
  %v2383 = vunpack.c.l.b16 %v111
  %v2384 = vunpack.c.l.b16 %v112
  %v2385 = vunpack.c.l.b16 %v113
  %v2386 = vunpack.c.l.b16 %v114
  %v2387 = vunpack.c.l.b16 %v115
  %v2388 = vunpack.c.l.b16 %v116
  %v2389 = vunpack.c.l.b16 %v117
  %v2390 = vunpack.c.l.b16 %v118
  %v2391 = vunpack.c.l.b16 %v119
  %v2392 = vunpack.c.l.b16 %v120
  %v2393 = vunpack.c.l.b16 %v121
  %v2394 = vunpack.c.l.b16 %v122
  %v2395 = vunpack.c.l.b16 %v123
  %v2396 = vunpack.c.l.b16 %v124
  %v2397 = vunpack.c.l.b16 %v125
  %v2398 = vunpack.c.l.b16 %v126
  %v2399 = vunpack.c.l.b16 %v127
  %v2400 = vunpack.c.l.b16 %v128
  %v2401 = vunpack.c.l.b16 %v129
  %v2402 = vunpack.c.l.b16 %v130
  %v2403 = vunpack.c.l.b16 %v131
  %v2404 = vunpack.c.l.b16 %v132
  %v2405 = vunpack.c.l.b16 %v133
  %v2406 = vunpack.c.l.b16 %v134
  %v2407 = vunpack.c.l.b16 %v135
  %v2408 = vunpack.c.l.b16 %v136
  %v2409 = vunpack.c.l.b16 %v137
  %v2410 = vunpack.c.l.b16 %v138
  %v2411 = vunpack.c.l.b16 %v139
  %v2412 = vunpack.c.l.b16 %v140
  %v2413 = vunpack.c.l.b16 %v141
  %v2414 = vunpack.c.l.b16 %v142
  %v2415 = vunpack.c.l.b16 %v143
  %v2416 = vunpack.c.l.b16 %v144
  %v2417 = vunpack.c.l.b16 %v145
  %v2418 = vunpack.c.l.b16 %v146
  %v2419 = vunpack.c.l.b16 %v147
  %v2420 = vunpack.c.l.b16 %v148
  %v2421 = vunpack.c.l.b16 %v149
  %v2422 = vunpack.c.l.b16 %v150
  %v2423 = vunpack.c.l.b16 %v151
  %v2424 = vunpack.c.l.b16 %v152
  %v2425 = vunpack.c.l.b16 %v153
  %v2426 = vunpack.c.l.b16 %v154
  %v2427 = vunpack.c.l.b16 %v155
  %v2428 = vunpack.c.l.b16 %v156
  %v2429 = vunpack.c.l.b16 %v157
  %v2430 = vunpack.c.l.b16 %v158
  %v2431 = vunpack.c.l.b16 %v159
  %v2432 = vunpack.c.l.b16 %v160
  %v2433 = vunpack.c.l.b16 %v161
  %v2434 = vunpack.c.l.b16 %v162
  %v2435 = vunpack.c.l.b16 %v163
  %v2436 = vunpack.c.l.b16 %v164
  %v2437 = vunpack.c.l.b16 %v165
  %v2438 = vunpack.c.l.b16 %v166
  %v2439 = vunpack.c.l.b16 %v167
  %v2440 = vunpack.c.l.b16 %v168
  %v2441 = vunpack.c.l.b16 %v169
  %v2442 = vunpack.c.l.b16 %v170
  %v2443 = vunpack.c.l.b16 %v171
  %v2444 = vunpack.c.l.b16 %v172
  %v2445 = vunpack.c.l.b16 %v173
  %v2446 = vunpack.c.l.b16 %v174
  %v2447 = vunpack.c.l.b16 %v175
  %v2448 = vunpack.c.l.b16 %v176
  %v2449 = vunpack.c.l.b16 %v177
  %v2450 = vunpack.c.l.b16 %v178
  %v2451 = vunpack.c.l.b16 %v179
  %v2452 = vunpack.c.l.b16 %v180
  %v2453 = vunpack.c.l.b16 %v181
  %v2454 = vunpack.c.l.b16 %v182
  %v2455 = vunpack.c.l.b16 %v183
  %v2456 = vunpack.c.l.b16 %v184
  %v2457 = vunpack.c.l.b16 %v185
  %v2458 = vunpack.c.l.b16 %v186
  %v2459 = vunpack.c.l.b16 %v187
  %v2460 = vunpack.c.l.b16 %v188
  %v2461 = vunpack.c.l.b16 %v189
  %v2462 = vunpack.c.l.b16 %v190
  %v2463 = vunpack.c.l.b16 %v191
  %v2464 = vunpack.c.l.b16 %v192
  %v2465 = vunpack.c.l.b16 %v193
  %v2466 = vunpack.c.l.b16 %v194
  %v2467 = vunpack.c.l.b16 %v195
  %v2468 = vunpack.c.l.b16 %v196
  %v2469 = vunpack.c.l.b16 %v197
  %v2470 = vunpack.c.l.b16 %v198
  %v2471 = vunpack.c.l.b16 %v199
  %v2472 = vunpack.c.l.b16 %v200
  %v2473 = vunpack.c.l.b16 %v201
  %v2474 = vunpack.c.l.b16 %v202
  %v2475 = vunpack.c.l.b16 %v203
  %v2476 = vunpack.c.l.b16 %v204
  %v2477 = vunpack.c.l.b16 %v205
  %v2478 = vunpack.c.l.b16 %v206
  %v2479 = vunpack.c.l.b16 %v207
  %v2480 = vunpack.c.l.b16 %v208
  %v2481 = vunpack.c.l.b16 %v209
  %v2482 = vunpack.c.l.b16 %v210
  %v2483 = vunpack.c.l.b16 %v211
  %v2484 = vunpack.c.l.b16 %v212
  %v2485 = vunpack.c.l.b16 %v213
  %v2486 = vunpack.c.l.b16 %v214
  %v2487 = vunpack.c.l.b16 %v215
  %v2488 = vunpack.c.l.b16 %v216
  %v2489 = vunpack.c.l.b16 %v217
  %v2490 = vunpack.c.l.b16 %v218
  %v2491 = vunpack.c.l.b16 %v219
  %v2492 = vunpack.c.l.b16 %v220
  %v2493 = vunpack.c.l.b16 %v221
  %v2494 = vunpack.c.l.b16 %v222
  %v2495 = vunpack.c.l.b16 %v223
  %v2496 = vunpack.c.l.b16 %v224
  %v2497 = vunpack.c.l.b16 %v225
  %v2498 = vunpack.c.l.b16 %v226
  %v2499 = vunpack.c.l.b16 %v227
  %v2500 = vunpack.c.l.b16 %v228
  %v2501 = vunpack.c.l.b16 %v229
  %v2502 = vunpack.c.l.b16 %v230
  %v2503 = vunpack.c.l.b16 %v231
  %v2504 = vunpack.c.l.b16 %v232
  %v2505 = vunpack.c.l.b16 %v233
  %v2506 = vunpack.c.l.b16 %v234
  %v2507 = vunpack.c.l.b16 %v235
  %v2508 = vunpack.c.l.b16 %v236
  %v2509 = vunpack.c.l.b16 %v237
  %v2510 = vunpack.c.l.b16 %v238
  %v2511 = vunpack.c.l.b16 %v239
  %v2512 = vunpack.c.l.b16 %v240
  %v2513 = vunpack.c.l.b16 %v241
  %v2514 = vunpack.c.l.b16 %v242
  %v2515 = vunpack.c.l.b16 %v243
  %v2516 = vunpack.c.l.b16 %v244
  %v2517 = vunpack.c.l.b16 %v245
  %v2518 = vunpack.c.l.b16 %v246
  %v2519 = vunpack.c.l.b16 %v247
  %v2520 = vunpack.c.l.b16 %v248
  %v2521 = vunpack.c.l.b16 %v249
  %v2522 = vunpack.c.l.b16 %v250
  %v2523 = vunpack.c.l.b16 %v251
  %v2524 = vunpack.c.l.b16 %v252
  %v2525 = vunpack.c.l.b16 %v253
  %v2526 = vunpack.c.l.b16 %v254
  %v2527 = vunpack.c.l.b16 %v255
  %v2528 = vunpack.c.l.b16 %v256
  %v2529 = vunpack.c.l.b16 %v257
  %v2530 = vunpack.c.l.b16 %v258
  %v2531 = vunpack.c.l.b16 %v259
  %v2532 = vunpack.c.l.b16 %v260
  %v2533 = vunpack.c.l.b16 %v261
  %v2534 = vunpack.c.l.b16 %v262
  %v2535 = vunpack.c.l.b16 %v263
  %v2536 = vunpack.c.l.b16 %v264
  %v2537 = vunpack.c.l.b16 %v265
  %v2538 = vunpack.c.l.b16 %v266
  %v2539 = vunpack.c.l.b16 %v267
  %v2540 = vunpack.c.l.b16 %v268
  %v2541 = vunpack.c.l.b16 %v269
  %v2542 = vunpack.c.l.b16 %v270
  %v2543 = vunpack.c.l.b16 %v271
  %v2544 = vunpack.c.l.b16 %v272
  %v2545 = vunpack.c.l.b16 %v273
  %v2546 = vunpack.c.l.b16 %v274
  %v2547 = vunpack.c.l.b16 %v275
  %v2548 = vunpack.c.l.b16 %v276
  %v2549 = vunpack.c.l.b16 %v277
  %v2550 = vunpack.c.l.b16 %v278
  %v2551 = vunpack.c.l.b16 %v279
  %v2552 = vunpack.c.l.b16 %v280
  %v2553 = vunpack.c.l.b16 %v281
  %v2554 = vunpack.c.l.b16 %v282
  %v2555 = vunpack.c.l.b16 %v283
  %v2556 = vunpack.c.l.b16 %v284
  %v2557 = vunpack.c.l.b16 %v285
  %v2558 = vunpack.c.l.b16 %v286
  %v2559 = vunpack.c.l.b16 %v287
  %v2560 = vunpack.c.l.b16 %v288
  %v2561 = vunpack.c.l.b16 %v289
  %v2562 = vunpack.c.l.b16 %v290
  %v2563 = vunpack.c.l.b16 %v291
  %v2564 = vunpack.c.l.b16 %v292
  %v2565 = vunpack.c.l.b16 %v293
  %v2566 = vunpack.c.l.b16 %v294
  %v2567 = vunpack.c.l.b16 %v295
  %v2568 = vunpack.c.l.b16 %v296
  %v2569 = vunpack.c.l.b16 %v297
  %v2570 = vunpack.c.l.b16 %v298
  %v2571 = vunpack.c.l.b16 %v299
  %v2572 = vunpack.c.l.b16 %v300
  %v2573 = vunpack.c.l.b16 %v301
  %v2574 = vunpack.c.l.b16 %v302
  %v2575 = vunpack.c.l.b16 %v303
  %v2576 = vunpack.c.l.b16 %v304
  %v2577 = vunpack.c.l.b16 %v305
  %v2578 = vunpack.c.l.b16 %v306
  %v2579 = vunpack.c.l.b16 %v307
  %v2580 = vunpack.c.l.b16 %v308
  %v2581 = vunpack.c.l.b16 %v309
  %v2582 = vunpack.c.l.b16 %v310
  %v2583 = vunpack.c.l.b16 %v311
  %v2584 = vunpack.c.l.b16 %v312
  %v2585 = vunpack.c.l.b16 %v313
  %v2586 = vunpack.c.l.b16 %v314
  %v2587 = vunpack.c.l.b16 %v315
  %v2588 = vunpack.c.l.b16 %v316
  %v2589 = vunpack.c.l.b16 %v317
  %v2590 = vunpack.c.l.b16 %v318
  %v2591 = vunpack.c.l.b16 %v319
  %v2592 = vunpack.c.l.b16 %v320
  %v2593 = vunpack.c.l.b16 %v321
  %v2594 = vunpack.c.l.b16 %v322
  %v2595 = vunpack.c.l.b16 %v323
  %v2596 = vunpack.c.l.b16 %v324
  %v2597 = vunpack.c.l.b16 %v325
  %v2598 = vunpack.c.l.b16 %v326
  %v2599 = vunpack.c.l.b16 %v327
  %v2600 = vunpack.c.l.b16 %v328
  %v2601 = vunpack.c.l.b16 %v329
  %v2602 = vunpack.c.l.b16 %v330
  %v2603 = vunpack.c.l.b16 %v331
  %v2604 = vunpack.c.l.b16 %v332
  %v2605 = vunpack.c.l.b16 %v333
  %v2606 = vunpack.c.l.b16 %v334
  %v2607 = vunpack.c.l.b16 %v335
  %v2608 = vunpack.c.l.b16 %v336
  %v2609 = vunpack.c.l.b16 %v337
  %v2610 = vunpack.c.l.b16 %v338
  %v2611 = vunpack.c.l.b16 %v339
  %v2612 = vunpack.c.l.b16 %v340
  %v2613 = vunpack.c.l.b16 %v341
  %v2614 = vunpack.c.l.b16 %v342
  %v2615 = vunpack.c.l.b16 %v343
  %v2616 = vunpack.c.l.b16 %v344
  %v2617 = vunpack.c.l.b16 %v345
  %v2618 = vunpack.c.l.b16 %v346
  %v2619 = vunpack.c.l.b16 %v347
  %v2620 = vunpack.c.l.b16 %v348
  %v2621 = vunpack.c.l.b16 %v349
  %v2622 = vunpack.c.l.b16 %v350
  %v2623 = vunpack.c.l.b16 %v351
  %v2624 = vunpack.c.l.b16 %v352
  %v2625 = vunpack.c.l.b16 %v353
  %v2626 = vunpack.c.l.b16 %v354
  %v2627 = vunpack.c.l.b16 %v355
  %v2628 = vunpack.c.l.b16 %v356
  %v2629 = vunpack.c.l.b16 %v357
  %v2630 = vunpack.c.l.b16 %v358
  %v2631 = vunpack.c.l.b16 %v359
  %v2632 = vunpack.c.l.b16 %v360
  %v2633 = vunpack.c.l.b16 %v361
  %v2634 = vunpack.c.l.b16 %v362
  %v2635 = vunpack.c.l.b16 %v363
  %v2636 = vunpack.c.l.b16 %v364
  %v2637 = vunpack.c.l.b16 %v365
  %v2638 = vunpack.c.l.b16 %v366
  %v2639 = vunpack.c.l.b16 %v367
  %v2640 = vunpack.c.l.b16 %v368
  %v2641 = vunpack.c.l.b16 %v369
  %v2642 = vunpack.c.l.b16 %v370
  %v2643 = vunpack.c.l.b16 %v371
  %v2644 = vunpack.c.l.b16 %v372
  %v2645 = vunpack.c.l.b16 %v373
  %v2646 = vunpack.c.l.b16 %v374
  %v2647 = vunpack.c.l.b16 %v375
  %v2648 = vunpack.c.l.b16 %v376
  %v2649 = vunpack.c.l.b16 %v377
  %v2650 = vunpack.c.l.b16 %v378
  %v2651 = vunpack.c.l.b16 %v379
  %v2652 = vunpack.c.l.b16 %v380
  %v2653 = vunpack.c.l.b16 %v381
  %v2654 = vunpack.c.l.b16 %v382
  %v2655 = vunpack.c.l.b16 %v383
  %v2656 = vunpack.c.l.b16 %v384
  %v2657 = vunpack.c.l.b16 %v385
  %v2658 = vunpack.c.l.b16 %v386
  %v2659 = vunpack.c.l.b16 %v387
  %v2660 = vunpack.c.l.b16 %v388
  %v2661 = vunpack.c.l.b16 %v389
  %v2662 = vunpack.c.l.b16 %v390
  %v2663 = vunpack.c.l.b16 %v391
  %v2664 = vunpack.c.l.b16 %v392
  %v2665 = vunpack.c.l.b16 %v393
  %v2666 = vunpack.c.l.b16 %v394
  %v2667 = vunpack.c.l.b16 %v395
  %v2668 = vunpack.c.l.b16 %v396
  %v2669 = vunpack.c.l.b16 %v397
  %v2670 = vunpack.c.l.b16 %v398
  %v2671 = vunpack.c.l.b16 %v399
  %v2672 = vunpack.c.l.b16 %v400
  %v2673 = vunpack.c.l.b16 %v401
  %v2674 = vunpack.c.l.b16 %v402
  %v2675 = vunpack.c.l.b16 %v403
  %v2676 = vunpack.c.l.b16 %v404
  %v2677 = vunpack.c.l.b16 %v405
  %v2678 = vunpack.c.l.b16 %v406
  %v2679 = vunpack.c.l.b16 %v407
  %v2680 = vunpack.c.l.b16 %v408
  %v2681 = vunpack.c.l.b16 %v409
  %v2682 = vunpack.c.l.b16 %v410
  %v2683 = vunpack.c.l.b16 %v411
  %v2684 = vunpack.c.l.b16 %v412
  %v2685 = vunpack.c.l.b16 %v413
  %v2686 = vunpack.c.l.b16 %v414
  %v2687 = vunpack.c.l.b16 %v415
  %v2688 = vunpack.c.l.b16 %v416
  %v2689 = vunpack.c.l.b16 %v417
  %v2690 = vunpack.c.l.b16 %v418
  %v2691 = vunpack.c.l.b16 %v419
  %v2692 = vunpack.c.l.b16 %v420
  %v2693 = vunpack.c.l.b16 %v421
  %v2694 = vunpack.c.l.b16 %v422
  %v2695 = vunpack.c.l.b16 %v423
  %v2696 = vunpack.c.l.b16 %v424
  %v2697 = vunpack.c.l.b16 %v425
  %v2698 = vunpack.c.l.b16 %v426
  %v2699 = vunpack.c.l.b16 %v427
  %v2700 = vunpack.c.l.b16 %v428
  %v2701 = vunpack.c.l.b16 %v429
  %v2702 = vunpack.c.l.b16 %v430
  %v2703 = vunpack.c.l.b16 %v431
  %v2704 = vunpack.c.l.b16 %v432
  %v2705 = vunpack.c.l.b16 %v433
  %v2706 = vunpack.c.l.b16 %v434
  %v2707 = vunpack.c.l.b16 %v435
  %v2708 = vunpack.c.l.b16 %v436
  %v2709 = vunpack.c.l.b16 %v437
  %v2710 = vunpack.c.l.b16 %v438
  %v2711 = vunpack.c.l.b16 %v439
  %v2712 = vunpack.c.l.b16 %v440
  %v2713 = vunpack.c.l.b16 %v441
  %v2714 = vunpack.c.l.b16 %v442
  %v2715 = vunpack.c.l.b16 %v443
  %v2716 = vunpack.c.l.b16 %v444
  %v2717 = vunpack.c.l.b16 %v445
  %v2718 = vunpack.c.l.b16 %v446
  %v2719 = vunpack.c.l.b16 %v447
  %v2720 = vunpack.c.l.b16 %v448
  %v2721 = vunpack.c.l.b16 %v449
  %v2722 = vunpack.c.l.b16 %v450
  %v2723 = vunpack.c.l.b16 %v451
  %v2724 = vunpack.c.l.b16 %v452
  %v2725 = vunpack.c.l.b16 %v453
  %v2726 = vunpack.c.l.b16 %v454
  %v2727 = vunpack.c.l.b16 %v455
  %v2728 = vunpack.c.l.b16 %v456
  %v2729 = vunpack.c.l.b16 %v457
  %v2730 = vunpack.c.l.b16 %v458
  %v2731 = vunpack.c.l.b16 %v459
  %v2732 = vunpack.c.l.b16 %v460
  %v2733 = vunpack.c.l.b16 %v461
  %v2734 = vunpack.c.l.b16 %v462
  %v2735 = vunpack.c.l.b16 %v463
  %v2736 = vunpack.c.l.b16 %v464
  %v2737 = vunpack.c.l.b16 %v465
  %v2738 = vunpack.c.l.b16 %v466
  %v2739 = vunpack.c.l.b16 %v467
  %v2740 = vunpack.c.l.b16 %v468
  %v2741 = vunpack.c.l.b16 %v469
  %v2742 = vunpack.c.l.b16 %v470
  %v2743 = vunpack.c.l.b16 %v471
  %v2744 = vunpack.c.l.b16 %v472
  %v2745 = vunpack.c.l.b16 %v473
  %v2746 = vunpack.c.l.b16 %v474
  %v2747 = vunpack.c.l.b16 %v475
  %v2748 = vunpack.c.l.b16 %v476
  %v2749 = vunpack.c.l.b16 %v477
  %v2750 = vunpack.c.l.b16 %v478
  %v2751 = vunpack.c.l.b16 %v479
  %v2752 = vunpack.c.l.b16 %v480
  %v2753 = vunpack.c.l.b16 %v481
  %v2754 = vunpack.c.l.b16 %v482
  %v2755 = vunpack.c.l.b16 %v483
  %v2756 = vunpack.c.l.b16 %v484
  %v2757 = vunpack.c.l.b16 %v485
  %v2758 = vunpack.c.l.b16 %v486
  %v2759 = vunpack.c.l.b16 %v487
  %v2760 = vunpack.c.l.b16 %v488
  %v2761 = vunpack.c.l.b16 %v489
  %v2762 = vunpack.c.l.b16 %v490
  %v2763 = vunpack.c.l.b16 %v491
  %v2764 = vunpack.c.l.b16 %v492
  %v2765 = vunpack.c.l.b16 %v493
  %v2766 = vunpack.c.l.b16 %v494
  %v2767 = vunpack.c.l.b16 %v495
  %v2768 = vunpack.c.l.b16 %v496
  %v2769 = vunpack.c.l.b16 %v497
  %v2770 = vunpack.c.l.b16 %v498
  %v2771 = vunpack.c.l.b16 %v499
  %v2772 = vunpack.c.l.b16 %v500
  %v2773 = vunpack.c.l.b16 %v501
  %v2774 = vunpack.c.l.b16 %v502
  %v2775 = vunpack.c.l.b16 %v503
  %v2776 = vunpack.c.l.b16 %v504
  %v2777 = vunpack.c.l.b16 %v505
  %v2778 = vunpack.c.l.b16 %v506
  %v2779 = vunpack.c.l.b16 %v507
  %v2780 = vunpack.c.l.b16 %v508
  %v2781 = vunpack.c.l.b16 %v509
  %v2782 = vunpack.c.l.b16 %v510
  %v2783 = vunpack.c.l.b16 %v511
  %v2784 = vunpack.c.l.b16 %v512
  %v2785 = vunpack.c.l.b16 %v513
  %v2786 = vunpack.c.l.b16 %v514
  %v2787 = vunpack.c.l.b16 %v515
  %v2788 = vunpack.c.l.b16 %v516
  %v2789 = vunpack.c.l.b16 %v517
  %v2790 = vunpack.c.l.b16 %v518
  %v2791 = vunpack.c.l.b16 %v519
  %v2792 = vunpack.c.l.b16 %v520
  %v2793 = vunpack.c.l.b16 %v521
  %v2794 = vunpack.c.l.b16 %v522
  %v2795 = vunpack.c.l.b16 %v523
  %v2796 = vunpack.c.l.b16 %v524
  %v2797 = vunpack.c.l.b16 %v525
  %v2798 = vunpack.c.l.b16 %v526
  %v2799 = vunpack.c.l.b16 %v527
  %v2800 = vunpack.c.l.b16 %v528
  %v2801 = vunpack.c.l.b16 %v529
  %v2802 = vunpack.c.l.b16 %v530
  %v2803 = vunpack.c.l.b16 %v531
  %v2804 = vunpack.c.l.b16 %v532
  %v2805 = vunpack.c.l.b16 %v533
  %v2806 = vunpack.c.l.b16 %v534
  %v2807 = vunpack.c.l.b16 %v535
  %v2808 = vunpack.c.l.b16 %v536
  %v2809 = vunpack.c.l.b16 %v537
  %v2810 = vunpack.c.l.b16 %v538
  %v2811 = vunpack.c.l.b16 %v539
  %v2812 = vunpack.c.l.b16 %v540
  %v2813 = vunpack.c.l.b16 %v541
  %v2814 = vunpack.c.l.b16 %v542
  %v2815 = vunpack.c.l.b16 %v543
  %v2816 = vunpack.c.l.b16 %v544
  %v2817 = vunpack.c.l.b16 %v545
  %v2818 = vunpack.c.l.b16 %v546
  %v2819 = vunpack.c.l.b16 %v547
  %v2820 = vunpack.c.l.b16 %v548
  %v2821 = vunpack.c.l.b16 %v549
  %v2822 = vunpack.c.l.b16 %v550
  %v2823 = vunpack.c.l.b16 %v551
  %v2824 = vunpack.c.l.b16 %v552
  %v2825 = vunpack.c.l.b16 %v553
  %v2826 = vunpack.c.l.b16 %v554
  %v2827 = vunpack.c.l.b16 %v555
  %v2828 = vunpack.c.l.b16 %v556
  %v2829 = vunpack.c.l.b16 %v557
  %v2830 = vunpack.c.l.b16 %v558
  %v2831 = vunpack.c.l.b16 %v559
  %v2832 = vunpack.c.l.b16 %v560
  %v2833 = vunpack.c.l.b16 %v561
  %v2834 = vunpack.c.l.b16 %v562
  %v2835 = vunpack.c.l.b16 %v563
  %v2836 = vunpack.c.l.b16 %v564
  %v2837 = vunpack.c.l.b16 %v565
  %v2838 = vunpack.c.l.b16 %v566
  %v2839 = vunpack.c.l.b16 %v567
  %v2840 = vunpack.c.l.b16 %v568
  %v2841 = vunpack.c.l.b16 %v569
  %v2842 = vunpack.c.l.b16 %v570
  %v2843 = vunpack.c.l.b16 %v571
  %v2844 = vunpack.c.l.b16 %v572
  %v2845 = vunpack.c.l.b16 %v573
  %v2846 = vunpack.c.l.b16 %v574
  %v2847 = vunpack.c.l.b16 %v575
  %v2848 = vunpack.c.l.b16 %v576
  %v2849 = vunpack.c.l.b16 %v577
  %v2850 = vunpack.c.l.b16 %v578
  %v2851 = vunpack.c.l.b16 %v579
  %v2852 = vunpack.c.l.b16 %v580
  %v2853 = vunpack.c.l.b16 %v581
  %v2854 = vunpack.c.l.b16 %v582
  %v2855 = vunpack.c.l.b16 %v583
  %v2856 = vunpack.c.l.b16 %v584
  %v2857 = vunpack.c.l.b16 %v585
  %v2858 = vunpack.c.l.b16 %v586
  %v2859 = vunpack.c.l.b16 %v587
  %v2860 = vunpack.c.l.b16 %v588
  %v2861 = vunpack.c.l.b16 %v589
  %v2862 = vunpack.c.l.b16 %v590
  %v2863 = vunpack.c.l.b16 %v591
  %v2864 = vunpack.c.l.b16 %v592
  %v2865 = vunpack.c.l.b16 %v593
  %v2866 = vunpack.c.l.b16 %v594
  %v2867 = vunpack.c.l.b16 %v595
  %v2868 = vunpack.c.l.b16 %v596
  %v2869 = vunpack.c.l.b16 %v597
  %v2870 = vunpack.c.l.b16 %v598
  %v2871 = vunpack.c.l.b16 %v599
  %v2872 = vunpack.c.l.b16 %v600
  %v2873 = vunpack.c.l.b16 %v601
  %v2874 = vunpack.c.l.b16 %v602
  %v2875 = vunpack.c.l.b16 %v603
  %v2876 = vunpack.c.l.b16 %v604
  %v2877 = vunpack.c.l.b16 %v605
  %v2878 = vunpack.c.l.b16 %v606
  %v2879 = vunpack.c.l.b16 %v607
  %v2880 = vunpack.c.l.b16 %v608
  %v2881 = vunpack.c.l.b16 %v609
  %v2882 = vunpack.c.l.b16 %v610
  %v2883 = vunpack.c.l.b16 %v611
  %v2884 = vunpack.c.l.b16 %v612
  %v2885 = vunpack.c.l.b16 %v613
  %v2886 = vunpack.c.l.b16 %v614
  %v2887 = vunpack.c.l.b16 %v615
  %v2888 = vunpack.c.l.b16 %v616
  %v2889 = vunpack.c.l.b16 %v617
  %v2890 = vunpack.c.l.b16 %v618
  %v2891 = vunpack.c.l.b16 %v619
  %v2892 = vunpack.c.l.b16 %v620
  %v2893 = vunpack.c.l.b16 %v621
  %v2894 = vunpack.c.l.b16 %v622
  %v2895 = vunpack.c.l.b16 %v623
  %v2896 = vunpack.c.l.b16 %v624
  %v2897 = vunpack.c.l.b16 %v625
  %v2898 = vunpack.c.l.b16 %v626
  %v2899 = vunpack.c.l.b16 %v627
  %v2900 = vunpack.c.l.b16 %v628
  %v2901 = vunpack.c.l.b16 %v629
  %v2902 = vunpack.c.l.b16 %v630
  %v2903 = vunpack.c.l.b16 %v631
  %v2904 = vunpack.c.l.b16 %v632
  %v2905 = vunpack.c.l.b16 %v633
  %v2906 = vunpack.c.l.b16 %v634
  %v2907 = vunpack.c.l.b16 %v635
  %v2908 = vunpack.c.l.b16 %v636
  %v2909 = vunpack.c.l.b16 %v637
  %v2910 = vunpack.c.l.b16 %v638
  %v2911 = vunpack.c.l.b16 %v639
  %v2912 = vunpack.c.l.b16 %v640
  %v2913 = vunpack.c.l.b16 %v641
  %v2914 = vunpack.c.l.b16 %v642
  %v2915 = vunpack.c.l.b16 %v643
  %v2916 = vunpack.c.l.b16 %v644
  %v2917 = vunpack.c.l.b16 %v645
  %v2918 = vunpack.c.l.b16 %v646
  %v2919 = vunpack.c.l.b16 %v647
  %v2920 = vunpack.c.l.b16 %v648
  %v2921 = vunpack.c.l.b16 %v649
  %v2922 = vunpack.c.l.b16 %v650
  %v2923 = vunpack.c.l.b16 %v651
  %v2924 = vunpack.c.l.b16 %v652
  %v2925 = vunpack.c.l.b16 %v653
  %v2926 = vunpack.c.l.b16 %v654
  %v2927 = vunpack.c.l.b16 %v655
  %v2928 = vunpack.c.l.b16 %v656
  %v2929 = vunpack.c.l.b16 %v657
  %v2930 = vunpack.c.l.b16 %v658
  %v2931 = vunpack.c.l.b16 %v659
  %v2932 = vunpack.c.l.b16 %v660
  %v2933 = vunpack.c.l.b16 %v661
  %v2934 = vunpack.c.l.b16 %v662
  %v2935 = vunpack.c.l.b16 %v663
  %v2936 = vunpack.c.l.b16 %v664
  %v2937 = vunpack.c.l.b16 %v665
  %v2938 = vunpack.c.l.b16 %v666
  %v2939 = vunpack.c.l.b16 %v667
  %v2940 = vunpack.c.l.b16 %v668
  %v2941 = vunpack.c.l.b16 %v669
  %v2942 = vunpack.c.l.b16 %v670
  %v2943 = vunpack.c.l.b16 %v671
  %v2944 = vunpack.c.l.b16 %v672
  %v2945 = vunpack.c.l.b16 %v673
  %v2946 = vunpack.c.l.b16 %v674
  %v2947 = vunpack.c.l.b16 %v675
  %v2948 = vunpack.c.l.b16 %v676
  %v2949 = vunpack.c.l.b16 %v677
  %v2950 = vunpack.c.l.b16 %v678
  %v2951 = vunpack.c.l.b16 %v679
  %v2952 = vunpack.c.l.b16 %v680
  %v2953 = vunpack.c.l.b16 %v681
  %v2954 = vunpack.c.l.b16 %v682
  %v2955 = vunpack.c.l.b16 %v683
  %v2956 = vunpack.c.l.b16 %v684
  %v2957 = vunpack.c.l.b16 %v685
  %v2958 = vunpack.c.l.b16 %v686
  %v2959 = vunpack.c.l.b16 %v687
  %v2960 = vunpack.c.l.b16 %v688
  %v2961 = vunpack.c.l.b16 %v689
  %v2962 = vunpack.c.l.b16 %v690
  %v2963 = vunpack.c.l.b16 %v691
  %v2964 = vunpack.c.l.b16 %v692
  %v2965 = vunpack.c.l.b16 %v693
  %v2966 = vunpack.c.l.b16 %v694
  %v2967 = vunpack.c.l.b16 %v695
  %v2968 = vunpack.c.l.b16 %v696
  %v2969 = vunpack.c.l.b16 %v697
  %v2970 = vunpack.c.l.b16 %v698
  %v2971 = vunpack.c.l.b16 %v699
  %v2972 = vunpack.c.l.b16 %v700
  %v2973 = vunpack.c.l.b16 %v701
  %v2974 = vunpack.c.l.b16 %v702
  %v2975 = vunpack.c.l.b16 %v703
  %v2976 = vunpack.c.l.b16 %v704
  %v2977 = vunpack.c.l.b16 %v705
  %v2978 = vunpack.c.l.b16 %v706
  %v2979 = vunpack.c.l.b16 %v707
  %v2980 = vunpack.c.l.b16 %v708
  %v2981 = vunpack.c.l.b16 %v709
  %v2982 = vunpack.c.l.b16 %v710
  %v2983 = vunpack.c.l.b16 %v711
  %v2984 = vunpack.c.l.b16 %v712
  %v2985 = vunpack.c.l.b16 %v713
  %v2986 = vunpack.c.l.b16 %v714
  %v2987 = vunpack.c.l.b16 %v715
  %v2988 = vunpack.c.l.b16 %v716
  %v2989 = vunpack.c.l.b16 %v717
  %v2990 = vunpack.c.l.b16 %v718
  %v2991 = vunpack.c.l.b16 %v719
  %v2992 = vunpack.c.l.b16 %v720
  %v2993 = vunpack.c.l.b16 %v721
  %v2994 = vunpack.c.l.b16 %v722
  %v2995 = vunpack.c.l.b16 %v723
  %v2996 = vunpack.c.l.b16 %v724
  %v2997 = vunpack.c.l.b16 %v725
  %v2998 = vunpack.c.l.b16 %v726
  %v2999 = vunpack.c.l.b16 %v727
  %v3000 = vunpack.c.l.b16 %v728
  %v3001 = vunpack.c.l.b16 %v729
  %v3002 = vunpack.c.l.b16 %v730
  %v3003 = vunpack.c.l.b16 %v731
  %v3004 = vunpack.c.l.b16 %v732
  %v3005 = vunpack.c.l.b16 %v733
  %v3006 = vunpack.c.l.b16 %v734
  %v3007 = vunpack.c.l.b16 %v735
  %v3008 = vunpack.c.l.b16 %v736
  %v3009 = vunpack.c.l.b16 %v737
  %v3010 = vunpack.c.l.b16 %v738
  %v3011 = vunpack.c.l.b16 %v739
  %v3012 = vunpack.c.l.b16 %v740
  %v3013 = vunpack.c.l.b16 %v741
  %v3014 = vunpack.c.l.b16 %v742
  %v3015 = vunpack.c.l.b16 %v743
  %v3016 = vunpack.c.l.b16 %v744
  %v3017 = vunpack.c.l.b16 %v745
  %v3018 = vunpack.c.l.b16 %v746
  %v3019 = vunpack.c.l.b16 %v747
  %v3020 = vunpack.c.l.b16 %v748
  %v3021 = vunpack.c.l.b16 %v749
  %v3022 = vunpack.c.l.b16 %v750
  %v3023 = vunpack.c.l.b16 %v751
  %v3024 = vunpack.c.l.b16 %v752
  %v3025 = vunpack.c.l.b16 %v753
  %v3026 = vunpack.c.l.b16 %v754
  %v3027 = vunpack.c.l.b16 %v755
  %v3028 = vunpack.c.l.b16 %v756
  %v3029 = vunpack.c.l.b16 %v757
  %v3030 = vunpack.c.l.b16 %v758
  %v3031 = vunpack.c.l.b16 %v759
  %v3032 = vunpack.c.l.b16 %v760
  %v3033 = vunpack.c.l.b16 %v761
  %v3034 = vunpack.c.l.b16 %v762
  %v3035 = vunpack.c.l.b16 %v763
  %v3036 = vunpack.c.l.b16 %v764
  %v3037 = vunpack.c.l.b16 %v765
  %v3038 = vunpack.c.l.b16 %v766
  %v3039 = vunpack.c.l.b16 %v767
  %v3040 = vunpack.c.l.b16 %v768
  %v3041 = vunpack.c.l.b16 %v769
  %v3042 = vunpack.c.l.b16 %v770
  %v3043 = vunpack.c.l.b16 %v771
  %v3044 = vunpack.c.l.b16 %v772
  %v3045 = vunpack.c.l.b16 %v773
  %v3046 = vunpack.c.l.b16 %v774
  %v3047 = vunpack.c.l.b16 %v775
  %v3048 = vunpack.c.l.b16 %v776
  %v3049 = vunpack.c.l.b16 %v777
  %v3050 = vunpack.c.l.b16 %v778
  %v3051 = vunpack.c.l.b16 %v779
  %v3052 = vunpack.c.l.b16 %v780
  %v3053 = vunpack.c.l.b16 %v781
  %v3054 = vunpack.c.l.b16 %v782
  %v3055 = vunpack.c.l.b16 %v783
  %v3056 = vunpack.c.l.b16 %v784
  %v3057 = vunpack.c.l.b16 %v785
  %v3058 = vunpack.c.l.b16 %v786
  %v3059 = vunpack.c.l.b16 %v787
  %v3060 = vunpack.c.l.b16 %v788
  %v3061 = vunpack.c.l.b16 %v789
  %v3062 = vunpack.c.l.b16 %v790
  %v3063 = vunpack.c.l.b16 %v791
  %v3064 = vunpack.c.l.b16 %v792
  %v3065 = vunpack.c.l.b16 %v793
  %v3066 = vunpack.c.l.b16 %v794
  %v3067 = vunpack.c.l.b16 %v795
  %v3068 = vunpack.c.l.b16 %v796
  %v3069 = vunpack.c.l.b16 %v797
  %v3070 = vunpack.c.l.b16 %v798
  %v3071 = vunpack.c.l.b16 %v799
  %v3072 = vunpack.c.l.b16 %v800
  %v3073 = vunpack.c.l.b16 %v801
  %v3074 = vunpack.c.l.b16 %v802
  %v3075 = vunpack.c.l.b16 %v803
  %v3076 = vunpack.c.l.b16 %v804
  %v3077 = vunpack.c.l.b16 %v805
  %v3078 = vunpack.c.l.b16 %v806
  %v3079 = vunpack.c.l.b16 %v807
  %v3080 = vunpack.c.l.b16 %v808
  %v3081 = vunpack.c.l.b16 %v809
  %v3082 = vunpack.c.l.b16 %v810
  %v3083 = vunpack.c.l.b16 %v811
  %v3084 = vunpack.c.l.b16 %v812
  %v3085 = vunpack.c.l.b16 %v813
  %v3086 = vunpack.c.l.b16 %v814
  %v3087 = vunpack.c.l.b16 %v815
  %v3088 = vunpack.c.l.b16 %v816
  %v3089 = vunpack.c.l.b16 %v817
  %v3090 = vunpack.c.l.b16 %v818
  %v3091 = vunpack.c.l.b16 %v819
  %v3092 = vunpack.c.l.b16 %v820
  %v3093 = vunpack.c.l.b16 %v821
  %v3094 = vunpack.c.l.b16 %v822
  %v3095 = vunpack.c.l.b16 %v823
  %v3096 = vunpack.c.l.b16 %v824
  %v3097 = vunpack.c.l.b16 %v825
  %v3098 = vunpack.c.l.b16 %v826
  %v3099 = vunpack.c.l.b16 %v827
  %v3100 = vunpack.c.l.b16 %v828
  %v3101 = vunpack.c.l.b16 %v829
  %v3102 = vunpack.c.l.b16 %v830
  %v3103 = vunpack.c.l.b16 %v831
  %v3104 = vunpack.c.l.b16 %v832
  %v3105 = vunpack.c.l.b16 %v833
  %v3106 = vunpack.c.l.b16 %v834
  %v3107 = vunpack.c.l.b16 %v835
  %v3108 = vunpack.c.l.b16 %v836
  %v3109 = vunpack.c.l.b16 %v837
  %v3110 = vunpack.c.l.b16 %v838
  %v3111 = vunpack.c.l.b16 %v839
  %v3112 = vunpack.c.l.b16 %v840
  %v3113 = vunpack.c.l.b16 %v841
  %v3114 = vunpack.c.l.b16 %v842
  %v3115 = vunpack.c.l.b16 %v843
  %v3116 = vunpack.c.l.b16 %v844
  %v3117 = vunpack.c.l.b16 %v845
  %v3118 = vunpack.c.l.b16 %v846
  %v3119 = vunpack.c.l.b16 %v847
  %v3120 = vunpack.c.l.b16 %v848
  %v3121 = vunpack.c.l.b16 %v849
  %v3122 = vunpack.c.l.b16 %v850
  %v3123 = vunpack.c.l.b16 %v851
  %v3124 = vunpack.c.l.b16 %v852
  %v3125 = vunpack.c.l.b16 %v853
  %v3126 = vunpack.c.l.b16 %v854
  %v3127 = vunpack.c.l.b16 %v855
  %v3128 = vunpack.c.l.b16 %v856
  %v3129 = vunpack.c.l.b16 %v857
  %v3130 = vunpack.c.l.b16 %v858
  %v3131 = vunpack.c.l.b16 %v859
  %v3132 = vunpack.c.l.b16 %v860
  %v3133 = vunpack.c.l.b16 %v861
  %v3134 = vunpack.c.l.b16 %v862
  %v3135 = vunpack.c.l.b16 %v863
  %v3136 = vunpack.c.l.b16 %v864
  %v3137 = vunpack.c.l.b16 %v865
  %v3138 = vunpack.c.l.b16 %v866
  %v3139 = vunpack.c.l.b16 %v867
  %v3140 = vunpack.c.l.b16 %v868
  %v3141 = vunpack.c.l.b16 %v869
  %v3142 = vunpack.c.l.b16 %v870
  %v3143 = vunpack.c.l.b16 %v871
  %v3144 = vunpack.c.l.b16 %v872
  %v3145 = vunpack.c.l.b16 %v873
  %v3146 = vunpack.c.l.b16 %v874
  %v3147 = vunpack.c.l.b16 %v875
  %v3148 = vunpack.c.l.b16 %v876
  %v3149 = vunpack.c.l.b16 %v877
  %v3150 = vunpack.c.l.b16 %v878
  %v3151 = vunpack.c.l.b16 %v879
  %v3152 = vunpack.c.l.b16 %v880
  %v3153 = vunpack.c.l.b16 %v881
  %v3154 = vunpack.c.l.b16 %v882
  %v3155 = vunpack.c.l.b16 %v883
  %v3156 = vunpack.c.l.b16 %v884
  %v3157 = vunpack.c.l.b16 %v885
  %v3158 = vunpack.c.l.b16 %v886
  %v3159 = vunpack.c.l.b16 %v887
  %v3160 = vunpack.c.l.b16 %v888
  %v3161 = vunpack.c.l.b16 %v889
  %v3162 = vunpack.c.l.b16 %v890
  %v3163 = vunpack.c.l.b16 %v891
  %v3164 = vunpack.c.l.b16 %v892
  %v3165 = vunpack.c.l.b16 %v893
  %v3166 = vunpack.c.l.b16 %v894
  %v3167 = vunpack.c.l.b16 %v895
  %v3168 = vunpack.c.l.b16 %v896
  %v3169 = vunpack.c.l.b16 %v897
  %v3170 = vunpack.c.l.b16 %v898
  %v3171 = vunpack.c.l.b16 %v899
  %v3172 = vunpack.c.l.b16 %v900
  %v3173 = vunpack.c.l.b16 %v901
  %v3174 = vunpack.c.l.b16 %v902
  %v3175 = vunpack.c.l.b16 %v903
  %v3176 = vunpack.c.l.b16 %v904
  %v3177 = vunpack.c.l.b16 %v905
  %v3178 = vunpack.c.l.b16 %v906
  %v3179 = vunpack.c.l.b16 %v907
  %v3180 = vunpack.c.l.b16 %v908
  %v3181 = vunpack.c.l.b16 %v909
  %v3182 = vunpack.c.l.b16 %v910
  %v3183 = vunpack.c.l.b16 %v911
  %v3184 = vunpack.c.l.b16 %v912
  %v3185 = vunpack.c.l.b16 %v913
  %v3186 = vunpack.c.l.b16 %v914
  %v3187 = vunpack.c.l.b16 %v915
  %v3188 = vunpack.c.l.b16 %v916
  %v3189 = vunpack.c.l.b16 %v917
  %v3190 = vunpack.c.l.b16 %v918
  %v3191 = vunpack.c.l.b16 %v919
  %v3192 = vunpack.c.l.b16 %v920
  %v3193 = vunpack.c.l.b16 %v921
  %v3194 = vunpack.c.l.b16 %v922
  %v3195 = vunpack.c.l.b16 %v923
  %v3196 = vunpack.c.l.b16 %v924
  %v3197 = vunpack.c.l.b16 %v925
  %v3198 = vunpack.c.l.b16 %v926
  %v3199 = vunpack.c.l.b16 %v927
  %v3200 = vunpack.c.l.b16 %v928
  %v3201 = vunpack.c.l.b16 %v929
  %v3202 = vunpack.c.l.b16 %v930
  %v3203 = vunpack.c.l.b16 %v931
  %v3204 = vunpack.c.l.b16 %v932
  %v3205 = vunpack.c.l.b16 %v933
  %v3206 = vunpack.c.l.b16 %v934
  %v3207 = vunpack.c.l.b16 %v935
  %v3208 = vunpack.c.l.b16 %v936
  %v3209 = vunpack.c.l.b16 %v937
  %v3210 = vunpack.c.l.b16 %v938
  %v3211 = vunpack.c.l.b16 %v939
  %v3212 = vunpack.c.l.b16 %v940
  %v3213 = vunpack.c.l.b16 %v941
  %v3214 = vunpack.c.l.b16 %v942
  %v3215 = vunpack.c.l.b16 %v943
  %v3216 = vunpack.c.l.b16 %v944
  %v3217 = vunpack.c.l.b16 %v945
  %v3218 = vunpack.c.l.b16 %v946
  %v3219 = vunpack.c.l.b16 %v947
  %v3220 = vunpack.c.l.b16 %v948
  %v3221 = vunpack.c.l.b16 %v949
  %v3222 = vunpack.c.l.b16 %v950
  %v3223 = vunpack.c.l.b16 %v951
  %v3224 = vunpack.c.l.b16 %v952
  %v3225 = vunpack.c.l.b16 %v953
  %v3226 = vunpack.c.l.b16 %v954
  %v3227 = vunpack.c.l.b16 %v955
  %v3228 = vunpack.c.l.b16 %v956
  %v3229 = vunpack.c.l.b16 %v957
  %v3230 = vunpack.c.l.b16 %v958
  %v3231 = vunpack.c.l.b16 %v959
  %v3232 = vunpack.c.l.b16 %v960
  %v3233 = vunpack.c.l.b16 %v961
  %v3234 = vunpack.c.l.b16 %v962
  %v3235 = vunpack.c.l.b16 %v963
  %v3236 = vunpack.c.l.b16 %v964
  %v3237 = vunpack.c.l.b16 %v965
  %v3238 = vunpack.c.l.b16 %v966
  %v3239 = vunpack.c.l.b16 %v967
  %v3240 = vunpack.c.l.b16 %v968
  %v3241 = vunpack.c.l.b16 %v969
  %v3242 = vunpack.c.l.b16 %v970
  %v3243 = vunpack.c.l.b16 %v971
  %v3244 = vunpack.c.l.b16 %v972
  %v3245 = vunpack.c.l.b16 %v973
  %v3246 = vunpack.c.l.b16 %v974
  %v3247 = vunpack.c.l.b16 %v975
  %v3248 = vunpack.c.l.b16 %v976
  %v3249 = vunpack.c.l.b16 %v977
  %v3250 = vunpack.c.l.b16 %v978
  %v3251 = vunpack.c.l.b16 %v979
  %v3252 = vunpack.c.l.b16 %v980
  %v3253 = vunpack.c.l.b16 %v981
  %v3254 = vunpack.c.l.b16 %v982
  %v3255 = vunpack.c.l.b16 %v983
  %v3256 = vunpack.c.l.b16 %v984
  %v3257 = vunpack.c.l.b16 %v985
  %v3258 = vunpack.c.l.b16 %v986
  %v3259 = vunpack.c.l.b16 %v987
  %v3260 = vunpack.c.l.b16 %v988
  %v3261 = vunpack.c.l.b16 %v989
  %v3262 = vunpack.c.l.b16 %v990
  %v3263 = vunpack.c.l.b16 %v991
  %v3264 = vunpack.c.l.b16 %v992
  %v3265 = vunpack.c.l.b16 %v993
  %v3266 = vunpack.c.l.b16 %v994
  %v3267 = vunpack.c.l.b16 %v995
  %v3268 = vunpack.c.l.b16 %v996
  %v3269 = vunpack.c.l.b16 %v997
  %v3270 = vunpack.c.l.b16 %v998
  %v3271 = vunpack.c.l.b16 %v999
  %v3272 = vunpack.c.l.b16 %v1000
  %v3273 = vunpack.c.l.b16 %v1001
  %v3274 = vunpack.c.l.b16 %v1002
  %v3275 = vunpack.c.l.b16 %v1003
  %v3276 = vunpack.c.l.b16 %v1004
  %v3277 = vunpack.c.l.b16 %v1005
  %v3278 = vunpack.c.l.b16 %v1006
  %v3279 = vunpack.c.l.b16 %v1007
  %v3280 = vunpack.c.l.b16 %v1008
  %v3281 = vunpack.c.l.b16 %v1009
  %v3282 = vunpack.c.l.b16 %v1010
  %v3283 = vunpack.c.l.b16 %v1011
  %v3284 = vunpack.c.l.b16 %v1012
  %v3285 = vunpack.c.l.b16 %v1013
  %v3286 = vunpack.c.l.b16 %v1014
  %v3287 = vunpack.c.l.b16 %v1015
  %v3288 = vunpack.c.l.b16 %v1016
  %v3289 = vunpack.c.l.b16 %v1017
  %v3290 = vunpack.c.l.b16 %v1018
  %v3291 = vunpack.c.l.b16 %v1019
  %v3292 = vunpack.c.l.b16 %v1020
  %v3293 = vunpack.c.l.b16 %v1021
  %v3294 = vunpack.c.l.b16 %v1022
  %v3295 = vunpack.c.l.b16 %v1023
  %v3296 = vunpack.c.l.b16 %v1024
  %v3297 = vunpack.c.l.b16 %v1025
  %v3298 = vunpack.c.l.b16 %v1026
  %v3299 = vunpack.c.l.b16 %v1027
  %v3300 = vunpack.c.l.b16 %v1028
  %v3301 = vunpack.c.l.b16 %v1029
  %v3302 = vunpack.c.l.b16 %v1030
  %v3303 = vunpack.c.l.b16 %v1031
  %v3304 = vunpack.c.l.b16 %v1032
  %v3305 = vunpack.c.l.b16 %v1033
  %v3306 = vunpack.c.l.b16 %v1034
  %v3307 = vunpack.c.l.b16 %v1035
  %v3308 = vunpack.c.l.b16 %v1036
  %v3309 = vunpack.c.l.b16 %v1037
  %v3310 = vunpack.c.l.b16 %v1038
  %v3311 = vunpack.c.l.b16 %v1039
  %v3312 = vunpack.c.l.b16 %v1040
  %v3313 = vunpack.c.l.b16 %v1041
  %v3314 = vunpack.c.l.b16 %v1042
  %v3315 = vunpack.c.l.b16 %v1043
  %v3316 = vunpack.c.l.b16 %v1044
  %v3317 = vunpack.c.l.b16 %v1045
  %v3318 = vunpack.c.l.b16 %v1046
  %v3319 = vunpack.c.l.b16 %v1047
  %v3320 = vunpack.c.l.b16 %v1048
  %v3321 = vunpack.c.l.b16 %v1049
  %v3322 = vunpack.c.l.b16 %v1050
  %v3323 = vunpack.c.l.b16 %v1051
  %v3324 = vunpack.c.l.b16 %v1052
  %v3325 = vunpack.c.l.b16 %v1053
  %v3326 = vunpack.c.l.b16 %v1054
  %v3327 = vunpack.c.l.b16 %v1055
  %v3328 = vunpack.c.l.b16 %v1056
  %v3329 = vunpack.c.l.b16 %v1057
  %v3330 = vunpack.c.l.b16 %v1058
  %v3331 = vunpack.c.l.b16 %v1059
  %v3332 = vunpack.c.l.b16 %v1060
  %v3333 = vunpack.c.l.b16 %v1061
  %v3334 = vunpack.c.l.b16 %v1062
  %v3335 = vunpack.c.l.b16 %v1063
  %v3336 = vunpack.c.l.b16 %v1064
  %v3337 = vunpack.c.l.b16 %v1065
  %v3338 = vunpack.c.l.b16 %v1066
  %v3339 = vunpack.c.l.b16 %v1067
  %v3340 = vunpack.c.l.b16 %v1068
  %v3341 = vunpack.c.l.b16 %v1069
  %v3342 = vunpack.c.l.b16 %v1070
  %v3343 = vunpack.c.l.b16 %v1071
  %v3344 = vunpack.c.l.b16 %v1072
  %v3345 = vunpack.c.l.b16 %v1073
  %v3346 = vunpack.c.l.b16 %v1074
  %v3347 = vunpack.c.l.b16 %v1075
  %v3348 = vunpack.c.l.b16 %v1076
  %v3349 = vpack.c.b16 %v2326, %v2325
  %v3350 = vpack.c.b16 %v2328, %v2327
  %v3351 = vpack.c.b16 %v2330, %v2329
  %v3352 = vpack.c.b16 %v2332, %v2331
  %v3353 = vpack.c.b16 %v2334, %v2333
  %v3354 = vpack.c.b16 %v2336, %v2335
  %v3355 = vpack.c.b16 %v2338, %v2337
  %v3356 = vpack.c.b16 %v2340, %v2339
  %v3357 = vpack.c.b16 %v2342, %v2341
  %v3358 = vpack.c.b16 %v2344, %v2343
  %v3359 = vpack.c.b16 %v2346, %v2345
  %v3360 = vpack.c.b16 %v2348, %v2347
  %v3361 = vpack.c.b16 %v2350, %v2349
  %v3362 = vpack.c.b16 %v2352, %v2351
  %v3363 = vpack.c.b16 %v2354, %v2353
  %v3364 = vpack.c.b16 %v2356, %v2355
  %v3365 = vpack.c.b16 %v2358, %v2357
  %v3366 = vpack.c.b16 %v2360, %v2359
  %v3367 = vpack.c.b16 %v2362, %v2361
  %v3368 = vpack.c.b16 %v2364, %v2363
  %v3369 = vpack.c.b16 %v2366, %v2365
  %v3370 = vpack.c.b16 %v2368, %v2367
  %v3371 = vpack.c.b16 %v2370, %v2369
  %v3372 = vpack.c.b16 %v2372, %v2371
  %v3373 = vpack.c.b16 %v2374, %v2373
  %v3374 = vpack.c.b16 %v2376, %v2375
  %v3375 = vpack.c.b16 %v2378, %v2377
  %v3376 = vpack.c.b16 %v2380, %v2379
  %v3377 = vpack.c.b16 %v2382, %v2381
  %v3378 = vpack.c.b16 %v2384, %v2383
  %v3379 = vpack.c.b16 %v2386, %v2385
  %v3380 = vpack.c.b16 %v2388, %v2387
  %v3381 = vpack.c.b16 %v2390, %v2389
  %v3382 = vpack.c.b16 %v2392, %v2391
  %v3383 = vpack.c.b16 %v2394, %v2393
  %v3384 = vpack.c.b16 %v2396, %v2395
  %v3385 = vpack.c.b16 %v2398, %v2397
  %v3386 = vpack.c.b16 %v2400, %v2399
  %v3387 = vpack.c.b16 %v2402, %v2401
  %v3388 = vpack.c.b16 %v2404, %v2403
  %v3389 = vpack.c.b16 %v2406, %v2405
  %v3390 = vpack.c.b16 %v2408, %v2407
  %v3391 = vpack.c.b16 %v2410, %v2409
  %v3392 = vpack.c.b16 %v2412, %v2411
  %v3393 = vpack.c.b16 %v2414, %v2413
  %v3394 = vpack.c.b16 %v2416, %v2415
  %v3395 = vpack.c.b16 %v2418, %v2417
  %v3396 = vpack.c.b16 %v2420, %v2419
  %v3397 = vpack.c.b16 %v2422, %v2421
  %v3398 = vpack.c.b16 %v2424, %v2423
  %v3399 = vpack.c.b16 %v2426, %v2425
  %v3400 = vpack.c.b16 %v2428, %v2427
  %v3401 = vpack.c.b16 %v2430, %v2429
  %v3402 = vpack.c.b16 %v2432, %v2431
  %v3403 = vpack.c.b16 %v2434, %v2433
  %v3404 = vpack.c.b16 %v2436, %v2435
  %v3405 = vpack.c.b16 %v2438, %v2437
  %v3406 = vpack.c.b16 %v2440, %v2439
  %v3407 = vpack.c.b16 %v2442, %v2441
  %v3408 = vpack.c.b16 %v2444, %v2443
  %v3409 = vpack.c.b16 %v2446, %v2445
  %v3410 = vpack.c.b16 %v2448, %v2447
  %v3411 = vpack.c.b16 %v2450, %v2449
  %v3412 = vpack.c.b16 %v2452, %v2451
  %v3413 = vpack.c.b16 %v2454, %v2453
  %v3414 = vpack.c.b16 %v2456, %v2455
  %v3415 = vpack.c.b16 %v2458, %v2457
  %v3416 = vpack.c.b16 %v2460, %v2459
  %v3417 = vpack.c.b16 %v2462, %v2461
  %v3418 = vpack.c.b16 %v2464, %v2463
  %v3419 = vpack.c.b16 %v2466, %v2465
  %v3420 = vpack.c.b16 %v2468, %v2467
  %v3421 = vpack.c.b16 %v2470, %v2469
  %v3422 = vpack.c.b16 %v2472, %v2471
  %v3423 = vpack.c.b16 %v2474, %v2473
  %v3424 = vpack.c.b16 %v2476, %v2475
  %v3425 = vpack.c.b16 %v2478, %v2477
  %v3426 = vpack.c.b16 %v2480, %v2479
  %v3427 = vpack.c.b16 %v2482, %v2481
  %v3428 = vpack.c.b16 %v2484, %v2483
  %v3429 = vpack.c.b16 %v2486, %v2485
  %v3430 = vpack.c.b16 %v2488, %v2487
  %v3431 = vpack.c.b16 %v2490, %v2489
  %v3432 = vpack.c.b16 %v2492, %v2491
  %v3433 = vpack.c.b16 %v2494, %v2493
  %v3434 = vpack.c.b16 %v2496, %v2495
  %v3435 = vpack.c.b16 %v2498, %v2497
  %v3436 = vpack.c.b16 %v2500, %v2499
  %v3437 = vpack.c.b16 %v2502, %v2501
  %v3438 = vpack.c.b16 %v2504, %v2503
  %v3439 = vpack.c.b16 %v2506, %v2505
  %v3440 = vpack.c.b16 %v2508, %v2507
  %v3441 = vpack.c.b16 %v2510, %v2509
  %v3442 = vpack.c.b16 %v2512, %v2511
  %v3443 = vpack.c.b16 %v2514, %v2513
  %v3444 = vpack.c.b16 %v2516, %v2515
  %v3445 = vpack.c.b16 %v2518, %v2517
  %v3446 = vpack.c.b16 %v2520, %v2519
  %v3447 = vpack.c.b16 %v2522, %v2521
  %v3448 = vpack.c.b16 %v2524, %v2523
  %v3449 = vpack.c.b16 %v2526, %v2525
  %v3450 = vpack.c.b16 %v2528, %v2527
  %v3451 = vpack.c.b16 %v2530, %v2529
  %v3452 = vpack.c.b16 %v2532, %v2531
  %v3453 = vpack.c.b16 %v2534, %v2533
  %v3454 = vpack.c.b16 %v2536, %v2535
  %v3455 = vpack.c.b16 %v2538, %v2537
  %v3456 = vpack.c.b16 %v2540, %v2539
  %v3457 = vpack.c.b16 %v2542, %v2541
  %v3458 = vpack.c.b16 %v2544, %v2543
  %v3459 = vpack.c.b16 %v2546, %v2545
  %v3460 = vpack.c.b16 %v2548, %v2547
  %v3461 = vpack.c.b16 %v2550, %v2549
  %v3462 = vpack.c.b16 %v2552, %v2551
  %v3463 = vpack.c.b16 %v2554, %v2553
  %v3464 = vpack.c.b16 %v2556, %v2555
  %v3465 = vpack.c.b16 %v2558, %v2557
  %v3466 = vpack.c.b16 %v2560, %v2559
  %v3467 = vpack.c.b16 %v2562, %v2561
  %v3468 = vpack.c.b16 %v2564, %v2563
  %v3469 = vpack.c.b16 %v2566, %v2565
  %v3470 = vpack.c.b16 %v2568, %v2567
  %v3471 = vpack.c.b16 %v2570, %v2569
  %v3472 = vpack.c.b16 %v2572, %v2571
  %v3473 = vpack.c.b16 %v2574, %v2573
  %v3474 = vpack.c.b16 %v2576, %v2575
  %v3475 = vpack.c.b16 %v2578, %v2577
  %v3476 = vpack.c.b16 %v2580, %v2579
  %v3477 = vpack.c.b16 %v2582, %v2581
  %v3478 = vpack.c.b16 %v2584, %v2583
  %v3479 = vpack.c.b16 %v2586, %v2585
  %v3480 = vpack.c.b16 %v2588, %v2587
  %v3481 = vpack.c.b16 %v2590, %v2589
  %v3482 = vpack.c.b16 %v2592, %v2591
  %v3483 = vpack.c.b16 %v2594, %v2593
  %v3484 = vpack.c.b16 %v2596, %v2595
  %v3485 = vpack.c.b16 %v2598, %v2597
  %v3486 = vpack.c.b16 %v2600, %v2599
  %v3487 = vpack.c.b16 %v2602, %v2601
  %v3488 = vpack.c.b16 %v2604, %v2603
  %v3489 = vpack.c.b16 %v2606, %v2605
  %v3490 = vpack.c.b16 %v2608, %v2607
  %v3491 = vpack.c.b16 %v2610, %v2609
  %v3492 = vpack.c.b16 %v2612, %v2611
  %v3493 = vpack.c.b16 %v2614, %v2613
  %v3494 = vpack.c.b16 %v2616, %v2615
  %v3495 = vpack.c.b16 %v2618, %v2617
  %v3496 = vpack.c.b16 %v2620, %v2619
  %v3497 = vpack.c.b16 %v2622, %v2621
  %v3498 = vpack.c.b16 %v2624, %v2623
  %v3499 = vpack.c.b16 %v2626, %v2625
  %v3500 = vpack.c.b16 %v2628, %v2627
  %v3501 = vpack.c.b16 %v2630, %v2629
  %v3502 = vpack.c.b16 %v2632, %v2631
  %v3503 = vpack.c.b16 %v2634, %v2633
  %v3504 = vpack.c.b16 %v2636, %v2635
  %v3505 = vpack.c.b16 %v2638, %v2637
  %v3506 = vpack.c.b16 %v2640, %v2639
  %v3507 = vpack.c.b16 %v2642, %v2641
  %v3508 = vpack.c.b16 %v2644, %v2643
  %v3509 = vpack.c.b16 %v2646, %v2645
  %v3510 = vpack.c.b16 %v2648, %v2647
  %v3511 = vpack.c.b16 %v2650, %v2649
  %v3512 = vpack.c.b16 %v2652, %v2651
  %v3513 = vpack.c.b16 %v2654, %v2653
  %v3514 = vpack.c.b16 %v2656, %v2655
  %v3515 = vpack.c.b16 %v2658, %v2657
  %v3516 = vpack.c.b16 %v2660, %v2659
  %v3517 = vpack.c.b16 %v2662, %v2661
  %v3518 = vpack.c.b16 %v2664, %v2663
  %v3519 = vpack.c.b16 %v2666, %v2665
  %v3520 = vpack.c.b16 %v2668, %v2667
  %v3521 = vpack.c.b16 %v2670, %v2669
  %v3522 = vpack.c.b16 %v2672, %v2671
  %v3523 = vpack.c.b16 %v2674, %v2673
  %v3524 = vpack.c.b16 %v2676, %v2675
  %v3525 = vpack.c.b16 %v2678, %v2677
  %v3526 = vpack.c.b16 %v2680, %v2679
  %v3527 = vpack.c.b16 %v2682, %v2681
  %v3528 = vpack.c.b16 %v2684, %v2683
  %v3529 = vpack.c.b16 %v2686, %v2685
  %v3530 = vpack.c.b16 %v2688, %v2687
  %v3531 = vpack.c.b16 %v2690, %v2689
  %v3532 = vpack.c.b16 %v2692, %v2691
  %v3533 = vpack.c.b16 %v2694, %v2693
  %v3534 = vpack.c.b16 %v2696, %v2695
  %v3535 = vpack.c.b16 %v2698, %v2697
  %v3536 = vpack.c.b16 %v2700, %v2699
  %v3537 = vpack.c.b16 %v2702, %v2701
  %v3538 = vpack.c.b16 %v2704, %v2703
  %v3539 = vpack.c.b16 %v2706, %v2705
  %v3540 = vpack.c.b16 %v2708, %v2707
  %v3541 = vpack.c.b16 %v2710, %v2709
  %v3542 = vpack.c.b16 %v2712, %v2711
  %v3543 = vpack.c.b16 %v2714, %v2713
  %v3544 = vpack.c.b16 %v2716, %v2715
  %v3545 = vpack.c.b16 %v2718, %v2717
  %v3546 = vpack.c.b16 %v2720, %v2719
  %v3547 = vpack.c.b16 %v2722, %v2721
  %v3548 = vpack.c.b16 %v2724, %v2723
  %v3549 = vpack.c.b16 %v2726, %v2725
  %v3550 = vpack.c.b16 %v2728, %v2727
  %v3551 = vpack.c.b16 %v2730, %v2729
  %v3552 = vpack.c.b16 %v2732, %v2731
  %v3553 = vpack.c.b16 %v2734, %v2733
  %v3554 = vpack.c.b16 %v2736, %v2735
  %v3555 = vpack.c.b16 %v2738, %v2737
  %v3556 = vpack.c.b16 %v2740, %v2739
  %v3557 = vpack.c.b16 %v2742, %v2741
  %v3558 = vpack.c.b16 %v2744, %v2743
  %v3559 = vpack.c.b16 %v2746, %v2745
  %v3560 = vpack.c.b16 %v2748, %v2747
  %v3561 = vpack.c.b16 %v2750, %v2749
  %v3562 = vpack.c.b16 %v2752, %v2751
  %v3563 = vpack.c.b16 %v2754, %v2753
  %v3564 = vpack.c.b16 %v2756, %v2755
  %v3565 = vpack.c.b16 %v2758, %v2757
  %v3566 = vpack.c.b16 %v2760, %v2759
  %v3567 = vpack.c.b16 %v2762, %v2761
  %v3568 = vpack.c.b16 %v2764, %v2763
  %v3569 = vpack.c.b16 %v2766, %v2765
  %v3570 = vpack.c.b16 %v2768, %v2767
  %v3571 = vpack.c.b16 %v2770, %v2769
  %v3572 = vpack.c.b16 %v2772, %v2771
  %v3573 = vpack.c.b16 %v2774, %v2773
  %v3574 = vpack.c.b16 %v2776, %v2775
  %v3575 = vpack.c.b16 %v2778, %v2777
  %v3576 = vpack.c.b16 %v2780, %v2779
  %v3577 = vpack.c.b16 %v2782, %v2781
  %v3578 = vpack.c.b16 %v2784, %v2783
  %v3579 = vpack.c.b16 %v2786, %v2785
  %v3580 = vpack.c.b16 %v2788, %v2787
  %v3581 = vpack.c.b16 %v2790, %v2789
  %v3582 = vpack.c.b16 %v2792, %v2791
  %v3583 = vpack.c.b16 %v2794, %v2793
  %v3584 = vpack.c.b16 %v2796, %v2795
  %v3585 = vpack.c.b16 %v2798, %v2797
  %v3586 = vpack.c.b16 %v2800, %v2799
  %v3587 = vpack.c.b16 %v2802, %v2801
  %v3588 = vpack.c.b16 %v2804, %v2803
  %v3589 = vpack.c.b16 %v2806, %v2805
  %v3590 = vpack.c.b16 %v2808, %v2807
  %v3591 = vpack.c.b16 %v2810, %v2809
  %v3592 = vpack.c.b16 %v2812, %v2811
  %v3593 = vpack.c.b16 %v2814, %v2813
  %v3594 = vpack.c.b16 %v2816, %v2815
  %v3595 = vpack.c.b16 %v2818, %v2817
  %v3596 = vpack.c.b16 %v2820, %v2819
  %v3597 = vpack.c.b16 %v2822, %v2821
  %v3598 = vpack.c.b16 %v2824, %v2823
  %v3599 = vpack.c.b16 %v2826, %v2825
  %v3600 = vpack.c.b16 %v2828, %v2827
  %v3601 = vpack.c.b16 %v2830, %v2829
  %v3602 = vpack.c.b16 %v2832, %v2831
  %v3603 = vpack.c.b16 %v2834, %v2833
  %v3604 = vpack.c.b16 %v2836, %v2835
  %v3605 = vpack.c.b16 %v2838, %v2837
  %v3606 = vpack.c.b16 %v2840, %v2839
  %v3607 = vpack.c.b16 %v2842, %v2841
  %v3608 = vpack.c.b16 %v2844, %v2843
  %v3609 = vpack.c.b16 %v2846, %v2845
  %v3610 = vpack.c.b16 %v2848, %v2847
  %v3611 = vpack.c.b16 %v2850, %v2849
  %v3612 = vpack.c.b16 %v2852, %v2851
  %v3613 = vpack.c.b16 %v2854, %v2853
  %v3614 = vpack.c.b16 %v2856, %v2855
  %v3615 = vpack.c.b16 %v2858, %v2857
  %v3616 = vpack.c.b16 %v2860, %v2859
  %v3617 = vpack.c.b16 %v2862, %v2861
  %v3618 = vpack.c.b16 %v2864, %v2863
  %v3619 = vpack.c.b16 %v2866, %v2865
  %v3620 = vpack.c.b16 %v2868, %v2867
  %v3621 = vpack.c.b16 %v2870, %v2869
  %v3622 = vpack.c.b16 %v2872, %v2871
  %v3623 = vpack.c.b16 %v2874, %v2873
  %v3624 = vpack.c.b16 %v2876, %v2875
  %v3625 = vpack.c.b16 %v2878, %v2877
  %v3626 = vpack.c.b16 %v2880, %v2879
  %v3627 = vpack.c.b16 %v2882, %v2881
  %v3628 = vpack.c.b16 %v2884, %v2883
  %v3629 = vpack.c.b16 %v2886, %v2885
  %v3630 = vpack.c.b16 %v2888, %v2887
  %v3631 = vpack.c.b16 %v2890, %v2889
  %v3632 = vpack.c.b16 %v2892, %v2891
  %v3633 = vpack.c.b16 %v2894, %v2893
  %v3634 = vpack.c.b16 %v2896, %v2895
  %v3635 = vpack.c.b16 %v2898, %v2897
  %v3636 = vpack.c.b16 %v2900, %v2899
  %v3637 = vpack.c.b16 %v2902, %v2901
  %v3638 = vpack.c.b16 %v2904, %v2903
  %v3639 = vpack.c.b16 %v2906, %v2905
  %v3640 = vpack.c.b16 %v2908, %v2907
  %v3641 = vpack.c.b16 %v2910, %v2909
  %v3642 = vpack.c.b16 %v2912, %v2911
  %v3643 = vpack.c.b16 %v2914, %v2913
  %v3644 = vpack.c.b16 %v2916, %v2915
  %v3645 = vpack.c.b16 %v2918, %v2917
  %v3646 = vpack.c.b16 %v2920, %v2919
  %v3647 = vpack.c.b16 %v2922, %v2921
  %v3648 = vpack.c.b16 %v2924, %v2923
  %v3649 = vpack.c.b16 %v2926, %v2925
  %v3650 = vpack.c.b16 %v2928, %v2927
  %v3651 = vpack.c.b16 %v2930, %v2929
  %v3652 = vpack.c.b16 %v2932, %v2931
  %v3653 = vpack.c.b16 %v2934, %v2933
  %v3654 = vpack.c.b16 %v2936, %v2935
  %v3655 = vpack.c.b16 %v2938, %v2937
  %v3656 = vpack.c.b16 %v2940, %v2939
  %v3657 = vpack.c.b16 %v2942, %v2941
  %v3658 = vpack.c.b16 %v2944, %v2943
  %v3659 = vpack.c.b16 %v2946, %v2945
  %v3660 = vpack.c.b16 %v2948, %v2947
  %v3661 = vpack.c.b16 %v2950, %v2949
  %v3662 = vpack.c.b16 %v2952, %v2951
  %v3663 = vpack.c.b16 %v2954, %v2953
  %v3664 = vpack.c.b16 %v2956, %v2955
  %v3665 = vpack.c.b16 %v2958, %v2957
  %v3666 = vpack.c.b16 %v2960, %v2959
  %v3667 = vpack.c.b16 %v2962, %v2961
  %v3668 = vpack.c.b16 %v2964, %v2963
  %v3669 = vpack.c.b16 %v2966, %v2965
  %v3670 = vpack.c.b16 %v2968, %v2967
  %v3671 = vpack.c.b16 %v2970, %v2969
  %v3672 = vpack.c.b16 %v2972, %v2971
  %v3673 = vpack.c.b16 %v2974, %v2973
  %v3674 = vpack.c.b16 %v2976, %v2975
  %v3675 = vpack.c.b16 %v2978, %v2977
  %v3676 = vpack.c.b16 %v2980, %v2979
  %v3677 = vpack.c.b16 %v2982, %v2981
  %v3678 = vpack.c.b16 %v2984, %v2983
  %v3679 = vpack.c.b16 %v2986, %v2985
  %v3680 = vpack.c.b16 %v2988, %v2987
  %v3681 = vpack.c.b16 %v2990, %v2989
  %v3682 = vpack.c.b16 %v2992, %v2991
  %v3683 = vpack.c.b16 %v2994, %v2993
  %v3684 = vpack.c.b16 %v2996, %v2995
  %v3685 = vpack.c.b16 %v2998, %v2997
  %v3686 = vpack.c.b16 %v3000, %v2999
  %v3687 = vpack.c.b16 %v3002, %v3001
  %v3688 = vpack.c.b16 %v3004, %v3003
  %v3689 = vpack.c.b16 %v3006, %v3005
  %v3690 = vpack.c.b16 %v3008, %v3007
  %v3691 = vpack.c.b16 %v3010, %v3009
  %v3692 = vpack.c.b16 %v3012, %v3011
  %v3693 = vpack.c.b16 %v3014, %v3013
  %v3694 = vpack.c.b16 %v3016, %v3015
  %v3695 = vpack.c.b16 %v3018, %v3017
  %v3696 = vpack.c.b16 %v3020, %v3019
  %v3697 = vpack.c.b16 %v3022, %v3021
  %v3698 = vpack.c.b16 %v3024, %v3023
  %v3699 = vpack.c.b16 %v3026, %v3025
  %v3700 = vpack.c.b16 %v3028, %v3027
  %v3701 = vpack.c.b16 %v3030, %v3029
  %v3702 = vpack.c.b16 %v3032, %v3031
  %v3703 = vpack.c.b16 %v3034, %v3033
  %v3704 = vpack.c.b16 %v3036, %v3035
  %v3705 = vpack.c.b16 %v3038, %v3037
  %v3706 = vpack.c.b16 %v3040, %v3039
  %v3707 = vpack.c.b16 %v3042, %v3041
  %v3708 = vpack.c.b16 %v3044, %v3043
  %v3709 = vpack.c.b16 %v3046, %v3045
  %v3710 = vpack.c.b16 %v3048, %v3047
  %v3711 = vpack.c.b16 %v3050, %v3049
  %v3712 = vpack.c.b16 %v3052, %v3051
  %v3713 = vpack.c.b16 %v3054, %v3053
  %v3714 = vpack.c.b16 %v3056, %v3055
  %v3715 = vpack.c.b16 %v3058, %v3057
  %v3716 = vpack.c.b16 %v3060, %v3059
  %v3717 = vpack.c.b16 %v3062, %v3061
  %v3718 = vpack.c.b16 %v3064, %v3063
  %v3719 = vpack.c.b16 %v3066, %v3065
  %v3720 = vpack.c.b16 %v3068, %v3067
  %v3721 = vpack.c.b16 %v3070, %v3069
  %v3722 = vpack.c.b16 %v3072, %v3071
  %v3723 = vpack.c.b16 %v3074, %v3073
  %v3724 = vpack.c.b16 %v3076, %v3075
  %v3725 = vpack.c.b16 %v3078, %v3077
  %v3726 = vpack.c.b16 %v3080, %v3079
  %v3727 = vpack.c.b16 %v3082, %v3081
  %v3728 = vpack.c.b16 %v3084, %v3083
  %v3729 = vpack.c.b16 %v3086, %v3085
  %v3730 = vpack.c.b16 %v3088, %v3087
  %v3731 = vpack.c.b16 %v3090, %v3089
  %v3732 = vpack.c.b16 %v3092, %v3091
  %v3733 = vpack.c.b16 %v3094, %v3093
  %v3734 = vpack.c.b16 %v3096, %v3095
  %v3735 = vpack.c.b16 %v3098, %v3097
  %v3736 = vpack.c.b16 %v3100, %v3099
  %v3737 = vpack.c.b16 %v3102, %v3101
  %v3738 = vpack.c.b16 %v3104, %v3103
  %v3739 = vpack.c.b16 %v3106, %v3105
  %v3740 = vpack.c.b16 %v3108, %v3107
  %v3741 = vpack.c.b16 %v3110, %v3109
  %v3742 = vpack.c.b16 %v3112, %v3111
  %v3743 = vpack.c.b16 %v3114, %v3113
  %v3744 = vpack.c.b16 %v3116, %v3115
  %v3745 = vpack.c.b16 %v3118, %v3117
  %v3746 = vpack.c.b16 %v3120, %v3119
  %v3747 = vpack.c.b16 %v3122, %v3121
  %v3748 = vpack.c.b16 %v3124, %v3123
  %v3749 = vpack.c.b16 %v3126, %v3125
  %v3750 = vpack.c.b16 %v3128, %v3127
  %v3751 = vpack.c.b16 %v3130, %v3129
  %v3752 = vpack.c.b16 %v3132, %v3131
  %v3753 = vpack.c.b16 %v3134, %v3133
  %v3754 = vpack.c.b16 %v3136, %v3135
  %v3755 = vpack.c.b16 %v3138, %v3137
  %v3756 = vpack.c.b16 %v3140, %v3139
  %v3757 = vpack.c.b16 %v3142, %v3141
  %v3758 = vpack.c.b16 %v3144, %v3143
  %v3759 = vpack.c.b16 %v3146, %v3145
  %v3760 = vpack.c.b16 %v3148, %v3147
  %v3761 = vpack.c.b16 %v3150, %v3149
  %v3762 = vpack.c.b16 %v3152, %v3151
  %v3763 = vpack.c.b16 %v3154, %v3153
  %v3764 = vpack.c.b16 %v3156, %v3155
  %v3765 = vpack.c.b16 %v3158, %v3157
  %v3766 = vpack.c.b16 %v3160, %v3159
  %v3767 = vpack.c.b16 %v3162, %v3161
  %v3768 = vpack.c.b16 %v3164, %v3163
  %v3769 = vpack.c.b16 %v3166, %v3165
  %v3770 = vpack.c.b16 %v3168, %v3167
  %v3771 = vpack.c.b16 %v3170, %v3169
  %v3772 = vpack.c.b16 %v3172, %v3171
  %v3773 = vpack.c.b16 %v3174, %v3173
  %v3774 = vpack.c.b16 %v3176, %v3175
  %v3775 = vpack.c.b16 %v3178, %v3177
  %v3776 = vpack.c.b16 %v3180, %v3179
  %v3777 = vpack.c.b16 %v3182, %v3181
  %v3778 = vpack.c.b16 %v3184, %v3183
  %v3779 = vpack.c.b16 %v3186, %v3185
  %v3780 = vpack.c.b16 %v3188, %v3187
  %v3781 = vpack.c.b16 %v3190, %v3189
  %v3782 = vpack.c.b16 %v3192, %v3191
  %v3783 = vpack.c.b16 %v3194, %v3193
  %v3784 = vpack.c.b16 %v3196, %v3195
  %v3785 = vpack.c.b16 %v3198, %v3197
  %v3786 = vpack.c.b16 %v3200, %v3199
  %v3787 = vpack.c.b16 %v3202, %v3201
  %v3788 = vpack.c.b16 %v3204, %v3203
  %v3789 = vpack.c.b16 %v3206, %v3205
  %v3790 = vpack.c.b16 %v3208, %v3207
  %v3791 = vpack.c.b16 %v3210, %v3209
  %v3792 = vpack.c.b16 %v3212, %v3211
  %v3793 = vpack.c.b16 %v3214, %v3213
  %v3794 = vpack.c.b16 %v3216, %v3215
  %v3795 = vpack.c.b16 %v3218, %v3217
  %v3796 = vpack.c.b16 %v3220, %v3219
  %v3797 = vpack.c.b16 %v3222, %v3221
  %v3798 = vpack.c.b16 %v3224, %v3223
  %v3799 = vpack.c.b16 %v3226, %v3225
  %v3800 = vpack.c.b16 %v3228, %v3227
  %v3801 = vpack.c.b16 %v3230, %v3229
  %v3802 = vpack.c.b16 %v3232, %v3231
  %v3803 = vpack.c.b16 %v3234, %v3233
  %v3804 = vpack.c.b16 %v3236, %v3235
  %v3805 = vpack.c.b16 %v3238, %v3237
  %v3806 = vpack.c.b16 %v3240, %v3239
  %v3807 = vpack.c.b16 %v3242, %v3241
  %v3808 = vpack.c.b16 %v3244, %v3243
  %v3809 = vpack.c.b16 %v3246, %v3245
  %v3810 = vpack.c.b16 %v3248, %v3247
  %v3811 = vpack.c.b16 %v3250, %v3249
  %v3812 = vpack.c.b16 %v3252, %v3251
  %v3813 = vpack.c.b16 %v3254, %v3253
  %v3814 = vpack.c.b16 %v3256, %v3255
  %v3815 = vpack.c.b16 %v3258, %v3257
  %v3816 = vpack.c.b16 %v3260, %v3259
  %v3817 = vpack.c.b16 %v3262, %v3261
  %v3818 = vpack.c.b16 %v3264, %v3263
  %v3819 = vpack.c.b16 %v3266, %v3265
  %v3820 = vpack.c.b16 %v3268, %v3267
  %v3821 = vpack.c.b16 %v3270, %v3269
  %v3822 = vpack.c.b16 %v3272, %v3271
  %v3823 = vpack.c.b16 %v3274, %v3273
  %v3824 = vpack.c.b16 %v3276, %v3275
  %v3825 = vpack.c.b16 %v3278, %v3277
  %v3826 = vpack.c.b16 %v3280, %v3279
  %v3827 = vpack.c.b16 %v3282, %v3281
  %v3828 = vpack.c.b16 %v3284, %v3283
  %v3829 = vpack.c.b16 %v3286, %v3285
  %v3830 = vpack.c.b16 %v3288, %v3287
  %v3831 = vpack.c.b16 %v3290, %v3289
  %v3832 = vpack.c.b16 %v3292, %v3291
  %v3833 = vpack.c.b16 %v3294, %v3293
  %v3834 = vpack.c.b16 %v3296, %v3295
  %v3835 = vpack.c.b16 %v3298, %v3297
  %v3836 = vpack.c.b16 %v3300, %v3299
  %v3837 = vpack.c.b16 %v3302, %v3301
  %v3838 = vpack.c.b16 %v3304, %v3303
  %v3839 = vpack.c.b16 %v3306, %v3305
  %v3840 = vpack.c.b16 %v3308, %v3307
  %v3841 = vpack.c.b16 %v3310, %v3309
  %v3842 = vpack.c.b16 %v3312, %v3311
  %v3843 = vpack.c.b16 %v3314, %v3313
  %v3844 = vpack.c.b16 %v3316, %v3315
  %v3845 = vpack.c.b16 %v3318, %v3317
  %v3846 = vpack.c.b16 %v3320, %v3319
  %v3847 = vpack.c.b16 %v3322, %v3321
  %v3848 = vpack.c.b16 %v3324, %v3323
  %v3849 = vpack.c.b16 %v3326, %v3325
  %v3850 = vpack.c.b16 %v3328, %v3327
  %v3851 = vpack.c.b16 %v3330, %v3329
  %v3852 = vpack.c.b16 %v3332, %v3331
  %v3853 = vpack.c.b16 %v3334, %v3333
  %v3854 = vpack.c.b16 %v3336, %v3335
  %v3855 = vpack.c.b16 %v3338, %v3337
  %v3856 = vpack.c.b16 %v3340, %v3339
  %v3857 = vpack.c.b16 %v3342, %v3341
  %v3858 = vpack.c.b16 %v3344, %v3343
  %v3859 = vpack.c.b16 %v3346, %v3345
  %v3860 = vpack.c.b16 %v3348, %v3347
  %4373 = vmatprep.subr.bf16.mxu0 0
  %4374 = vmatpush1.bf16.msra.mxu0 %v3349
  %4375 = vmatprep.subr.bf16.mxu0 0
  %4376 = vmatpush1.bf16.msra.mxu0 %v3350
  %4377 = vmatprep.subr.bf16.mxu0 0
  %4378 = vmatpush1.bf16.msra.mxu0 %v3351
  %4379 = vmatprep.subr.bf16.mxu0 0
  %4380 = vmatpush1.bf16.msra.mxu0 %v3352
  %4381 = vmatprep.subr.bf16.mxu0 0
  %4382 = vmatpush1.bf16.msra.mxu0 %v3353
  %4383 = vmatprep.subr.bf16.mxu0 0
  %4384 = vmatpush1.bf16.msra.mxu0 %v3354
  %4385 = vmatprep.subr.bf16.mxu0 0
  %4386 = vmatpush1.bf16.msra.mxu0 %v3355
  %4387 = vmatprep.subr.bf16.mxu0 0
  %4388 = vmatpush1.bf16.msra.mxu0 %v3356
  %4389 = vmatprep.subr.bf16.mxu0 0
  %4390 = vmatpush1.bf16.msra.mxu0 %v3357
  %4391 = vmatprep.subr.bf16.mxu0 0
  %4392 = vmatpush1.bf16.msra.mxu0 %v3358
  %4393 = vmatprep.subr.bf16.mxu0 0
  %4394 = vmatpush1.bf16.msra.mxu0 %v3359
  %4395 = vmatprep.subr.bf16.mxu0 0
  %4396 = vmatpush1.bf16.msra.mxu0 %v3360
  %4397 = vmatprep.subr.bf16.mxu0 0
  %4398 = vmatpush1.bf16.msra.mxu0 %v3361
  %4399 = vmatprep.subr.bf16.mxu0 0
  %4400 = vmatpush1.bf16.msra.mxu0 %v3362
  %4401 = vmatprep.subr.bf16.mxu0 0
  %4402 = vmatpush1.bf16.msra.mxu0 %v3363
  %4403 = vmatprep.subr.bf16.mxu0 0
  %4404 = vmatpush1.bf16.msra.mxu0 %v3364
  %4405 = vmatprep.mubr.bf16.mxu0 %v1174
  %4406 = vmatmul.mubr.bf16.gmra.mrb[0].mxu0 %v1173
  %v4407 = vpop.f32.mrb[0].mxu0
  %v4408 = vadd.f32 0.0, %v4407
  %v4409 = vpop.f32.mrb[0].mxu0
  %v4410 = vpop.f32.mrb[0].mxu0
  %v4411 = vpop.f32.mrb[0].mxu0
  %4412 = vdwg.mxu0
  %4413 = vmatprep.subr.bf16.mxu0 0
  %4414 = vmatpush1.bf16.msra.mxu0 %v3365
  %4415 = vmatprep.subr.bf16.mxu0 0
  %4416 = vmatpush1.bf16.msra.mxu0 %v3366
  %4417 = vmatprep.subr.bf16.mxu0 0
  %4418 = vmatpush1.bf16.msra.mxu0 %v3367
  %4419 = vmatprep.subr.bf16.mxu0 0
  %4420 = vmatpush1.bf16.msra.mxu0 %v3368
  %4421 = vmatprep.subr.bf16.mxu0 0
  %4422 = vmatpush1.bf16.msra.mxu0 %v3369
  %4423 = vmatprep.subr.bf16.mxu0 0
  %4424 = vmatpush1.bf16.msra.mxu0 %v3370
  %4425 = vmatprep.subr.bf16.mxu0 0
  %4426 = vmatpush1.bf16.msra.mxu0 %v3371
  %4427 = vmatprep.subr.bf16.mxu0 0
  %4428 = vmatpush1.bf16.msra.mxu0 %v3372
  %4429 = vmatprep.subr.bf16.mxu0 0
  %4430 = vmatpush1.bf16.msra.mxu0 %v3373
  %4431 = vmatprep.subr.bf16.mxu0 0
  %4432 = vmatpush1.bf16.msra.mxu0 %v3374
  %4433 = vmatprep.subr.bf16.mxu0 0
  %4434 = vmatpush1.bf16.msra.mxu0 %v3375
  %4435 = vmatprep.subr.bf16.mxu0 0
  %4436 = vmatpush1.bf16.msra.mxu0 %v3376
  %4437 = vmatprep.subr.bf16.mxu0 0
  %4438 = vmatpush1.bf16.msra.mxu0 %v3377
  %4439 = vmatprep.subr.bf16.mxu0 0
  %4440 = vmatpush1.bf16.msra.mxu0 %v3378
  %4441 = vmatprep.subr.bf16.mxu0 0
  %4442 = vmatpush1.bf16.msra.mxu0 %v3379
  %4443 = vmatprep.subr.bf16.mxu0 0
  %4444 = vmatpush1.bf16.msra.mxu0 %v3380
  %4445 = vmatprep.mubr.bf16.mxu0 %v1176
  %4446 = vmatmul.mubr.bf16.gmra.mrb[0].mxu0 %v1175
  %v4447 = vpop.f32.mrb[0].mxu0
  %v4448 = vadd.f32 %v4408, %v4447
  %v4449 = vpop.f32.mrb[0].mxu0
  %v4450 = vpop.f32.mrb[0].mxu0
  %v4451 = vpop.f32.mrb[0].mxu0
  %4452 = vdwg.mxu0
  %4453 = vmatprep.subr.bf16.mxu0 0
  %4454 = vmatpush1.bf16.msra.mxu0 %v3381
  %4455 = vmatprep.subr.bf16.mxu0 0
  %4456 = vmatpush1.bf16.msra.mxu0 %v3382
  %4457 = vmatprep.subr.bf16.mxu0 0
  %4458 = vmatpush1.bf16.msra.mxu0 %v3383
  %4459 = vmatprep.subr.bf16.mxu0 0
  %4460 = vmatpush1.bf16.msra.mxu0 %v3384
  %4461 = vmatprep.subr.bf16.mxu0 0
  %4462 = vmatpush1.bf16.msra.mxu0 %v3385
  %4463 = vmatprep.subr.bf16.mxu0 0
  %4464 = vmatpush1.bf16.msra.mxu0 %v3386
  %4465 = vmatprep.subr.bf16.mxu0 0
  %4466 = vmatpush1.bf16.msra.mxu0 %v3387
  %4467 = vmatprep.subr.bf16.mxu0 0
  %4468 = vmatpush1.bf16.msra.mxu0 %v3388
  %4469 = vmatprep.subr.bf16.mxu0 0
  %4470 = vmatpush1.bf16.msra.mxu0 %v3389
  %4471 = vmatprep.subr.bf16.mxu0 0
  %4472 = vmatpush1.bf16.msra.mxu0 %v3390
  %4473 = vmatprep.subr.bf16.mxu0 0
  %4474 = vmatpush1.bf16.msra.mxu0 %v3391
  %4475 = vmatprep.subr.bf16.mxu0 0
  %4476 = vmatpush1.bf16.msra.mxu0 %v3392
  %4477 = vmatprep.subr.bf16.mxu0 0
  %4478 = vmatpush1.bf16.msra.mxu0 %v3393
  %4479 = vmatprep.subr.bf16.mxu0 0
  %4480 = vmatpush1.bf16.msra.mxu0 %v3394
  %4481 = vmatprep.subr.bf16.mxu0 0
  %4482 = vmatpush1.bf16.msra.mxu0 %v3395
  %4483 = vmatprep.subr.bf16.mxu0 0
  %4484 = vmatpush1.bf16.msra.mxu0 %v3396
  %4485 = vmatprep.mubr.bf16.mxu0 %v1178
  %4486 = vmatmul.mubr.bf16.gmra.mrb[0].mxu0 %v1177
  %v4487 = vpop.f32.mrb[0].mxu0
  %v4488 = vadd.f32 %v4448, %v4487
  %v4489 = vpop.f32.mrb[0].mxu0
  %v4490 = vpop.f32.mrb[0].mxu0
  %v4491 = vpop.f32.mrb[0].mxu0
  %4492 = vdwg.mxu0
  %4493 = vmatprep.subr.bf16.mxu0 0
  %4494 = vmatpush1.bf16.msra.mxu0 %v3397
  %4495 = vmatprep.subr.bf16.mxu0 0
  %4496 = vmatpush1.bf16.msra.mxu0 %v3398
  %4497 = vmatprep.subr.bf16.mxu0 0
  %4498 = vmatpush1.bf16.msra.mxu0 %v3399
  %4499 = vmatprep.subr.bf16.mxu0 0
  %4500 = vmatpush1.bf16.msra.mxu0 %v3400
  %4501 = vmatprep.subr.bf16.mxu0 0
  %4502 = vmatpush1.bf16.msra.mxu0 %v3401
  %4503 = vmatprep.subr.bf16.mxu0 0
  %4504 = vmatpush1.bf16.msra.mxu0 %v3402
  %4505 = vmatprep.subr.bf16.mxu0 0
  %4506 = vmatpush1.bf16.msra.mxu0 %v3403
  %4507 = vmatprep.subr.bf16.mxu0 0
  %4508 = vmatpush1.bf16.msra.mxu0 %v3404
  %4509 = vmatprep.subr.bf16.mxu0 0
  %4510 = vmatpush1.bf16.msra.mxu0 %v3405
  %4511 = vmatprep.subr.bf16.mxu0 0
  %4512 = vmatpush1.bf16.msra.mxu0 %v3406
  %4513 = vmatprep.subr.bf16.mxu0 0
  %4514 = vmatpush1.bf16.msra.mxu0 %v3407
  %4515 = vmatprep.subr.bf16.mxu0 0
  %4516 = vmatpush1.bf16.msra.mxu0 %v3408
  %4517 = vmatprep.subr.bf16.mxu0 0
  %4518 = vmatpush1.bf16.msra.mxu0 %v3409
  %4519 = vmatprep.subr.bf16.mxu0 0
  %4520 = vmatpush1.bf16.msra.mxu0 %v3410
  %4521 = vmatprep.subr.bf16.mxu0 0
  %4522 = vmatpush1.bf16.msra.mxu0 %v3411
  %4523 = vmatprep.subr.bf16.mxu0 0
  %4524 = vmatpush1.bf16.msra.mxu0 %v3412
  %4525 = vmatprep.mubr.bf16.mxu0 %v1180
  %4526 = vmatmul.mubr.bf16.gmra.mrb[0].mxu0 %v1179
  %v4527 = vpop.f32.mrb[0].mxu0
  %v4528 = vadd.f32 %v4488, %v4527
  %v4529 = vpop.f32.mrb[0].mxu0
  %v4530 = vpop.f32.mrb[0].mxu0
  %v4531 = vpop.f32.mrb[0].mxu0
  %4532 = vdwg.mxu0
  %4533 = vmatprep.subr.bf16.mxu0 0
  %4534 = vmatpush1.bf16.msra.mxu0 %v3413
  %4535 = vmatprep.subr.bf16.mxu0 0
  %4536 = vmatpush1.bf16.msra.mxu0 %v3414
  %4537 = vmatprep.subr.bf16.mxu0 0
  %4538 = vmatpush1.bf16.msra.mxu0 %v3415
  %4539 = vmatprep.subr.bf16.mxu0 0
  %4540 = vmatpush1.bf16.msra.mxu0 %v3416
  %4541 = vmatprep.subr.bf16.mxu0 0
  %4542 = vmatpush1.bf16.msra.mxu0 %v3417
  %4543 = vmatprep.subr.bf16.mxu0 0
  %4544 = vmatpush1.bf16.msra.mxu0 %v3418
  %4545 = vmatprep.subr.bf16.mxu0 0
  %4546 = vmatpush1.bf16.msra.mxu0 %v3419
  %4547 = vmatprep.subr.bf16.mxu0 0
  %4548 = vmatpush1.bf16.msra.mxu0 %v3420
  %4549 = vmatprep.subr.bf16.mxu0 0
  %4550 = vmatpush1.bf16.msra.mxu0 %v3421
  %4551 = vmatprep.subr.bf16.mxu0 0
  %4552 = vmatpush1.bf16.msra.mxu0 %v3422
  %4553 = vmatprep.subr.bf16.mxu0 0
  %4554 = vmatpush1.bf16.msra.mxu0 %v3423
  %4555 = vmatprep.subr.bf16.mxu0 0
  %4556 = vmatpush1.bf16.msra.mxu0 %v3424
  %4557 = vmatprep.subr.bf16.mxu0 0
  %4558 = vmatpush1.bf16.msra.mxu0 %v3425
  %4559 = vmatprep.subr.bf16.mxu0 0
  %4560 = vmatpush1.bf16.msra.mxu0 %v3426
  %4561 = vmatprep.subr.bf16.mxu0 0
  %4562 = vmatpush1.bf16.msra.mxu0 %v3427
  %4563 = vmatprep.subr.bf16.mxu0 0
  %4564 = vmatpush1.bf16.msra.mxu0 %v3428
  %4565 = vmatprep.mubr.bf16.mxu0 %v1182
  %4566 = vmatmul.mubr.bf16.gmra.mrb[0].mxu0 %v1181
  %v4567 = vpop.f32.mrb[0].mxu0
  %v4568 = vadd.f32 %v4528, %v4567
  %v4569 = vpop.f32.mrb[0].mxu0
  %v4570 = vpop.f32.mrb[0].mxu0
  %v4571 = vpop.f32.mrb[0].mxu0
  %4572 = vdwg.mxu0
  %4573 = vmatprep.subr.bf16.mxu0 0
  %4574 = vmatpush1.bf16.msra.mxu0 %v3429
  %4575 = vmatprep.subr.bf16.mxu0 0
  %4576 = vmatpush1.bf16.msra.mxu0 %v3430
  %4577 = vmatprep.subr.bf16.mxu0 0
  %4578 = vmatpush1.bf16.msra.mxu0 %v3431
  %4579 = vmatprep.subr.bf16.mxu0 0
  %4580 = vmatpush1.bf16.msra.mxu0 %v3432
  %4581 = vmatprep.subr.bf16.mxu0 0
  %4582 = vmatpush1.bf16.msra.mxu0 %v3433
  %4583 = vmatprep.subr.bf16.mxu0 0
  %4584 = vmatpush1.bf16.msra.mxu0 %v3434
  %4585 = vmatprep.subr.bf16.mxu0 0
  %4586 = vmatpush1.bf16.msra.mxu0 %v3435
  %4587 = vmatprep.subr.bf16.mxu0 0
  %4588 = vmatpush1.bf16.msra.mxu0 %v3436
  %4589 = vmatprep.subr.bf16.mxu0 0
  %4590 = vmatpush1.bf16.msra.mxu0 %v3437
  %4591 = vmatprep.subr.bf16.mxu0 0
  %4592 = vmatpush1.bf16.msra.mxu0 %v3438
  %4593 = vmatprep.subr.bf16.mxu0 0
  %4594 = vmatpush1.bf16.msra.mxu0 %v3439
  %4595 = vmatprep.subr.bf16.mxu0 0
  %4596 = vmatpush1.bf16.msra.mxu0 %v3440
  %4597 = vmatprep.subr.bf16.mxu0 0
  %4598 = vmatpush1.bf16.msra.mxu0 %v3441
  %4599 = vmatprep.subr.bf16.mxu0 0
  %4600 = vmatpush1.bf16.msra.mxu0 %v3442
  %4601 = vmatprep.subr.bf16.mxu0 0
  %4602 = vmatpush1.bf16.msra.mxu0 %v3443
  %4603 = vmatprep.subr.bf16.mxu0 0
  %4604 = vmatpush1.bf16.msra.mxu0 %v3444
  %4605 = vmatprep.mubr.bf16.mxu0 %v1184
  %4606 = vmatmul.mubr.bf16.gmra.mrb[0].mxu0 %v1183
  %v4607 = vpop.f32.mrb[0].mxu0
  %v4608 = vadd.f32 %v4568, %v4607
  %v4609 = vpop.f32.mrb[0].mxu0
  %v4610 = vpop.f32.mrb[0].mxu0
  %v4611 = vpop.f32.mrb[0].mxu0
  %4612 = vdwg.mxu0
  %4613 = vmatprep.subr.bf16.mxu0 0
  %4614 = vmatpush1.bf16.msra.mxu0 %v3445
  %4615 = vmatprep.subr.bf16.mxu0 0
  %4616 = vmatpush1.bf16.msra.mxu0 %v3446
  %4617 = vmatprep.subr.bf16.mxu0 0
  %4618 = vmatpush1.bf16.msra.mxu0 %v3447
  %4619 = vmatprep.subr.bf16.mxu0 0
  %4620 = vmatpush1.bf16.msra.mxu0 %v3448
  %4621 = vmatprep.subr.bf16.mxu0 0
  %4622 = vmatpush1.bf16.msra.mxu0 %v3449
  %4623 = vmatprep.subr.bf16.mxu0 0
  %4624 = vmatpush1.bf16.msra.mxu0 %v3450
  %4625 = vmatprep.subr.bf16.mxu0 0
  %4626 = vmatpush1.bf16.msra.mxu0 %v3451
  %4627 = vmatprep.subr.bf16.mxu0 0
  %4628 = vmatpush1.bf16.msra.mxu0 %v3452
  %4629 = vmatprep.subr.bf16.mxu0 0
  %4630 = vmatpush1.bf16.msra.mxu0 %v3453
  %4631 = vmatprep.subr.bf16.mxu0 0
  %4632 = vmatpush1.bf16.msra.mxu0 %v3454
  %4633 = vmatprep.subr.bf16.mxu0 0
  %4634 = vmatpush1.bf16.msra.mxu0 %v3455
  %4635 = vmatprep.subr.bf16.mxu0 0
  %4636 = vmatpush1.bf16.msra.mxu0 %v3456
  %4637 = vmatprep.subr.bf16.mxu0 0
  %4638 = vmatpush1.bf16.msra.mxu0 %v3457
  %4639 = vmatprep.subr.bf16.mxu0 0
  %4640 = vmatpush1.bf16.msra.mxu0 %v3458
  %4641 = vmatprep.subr.bf16.mxu0 0
  %4642 = vmatpush1.bf16.msra.mxu0 %v3459
  %4643 = vmatprep.subr.bf16.mxu0 0
  %4644 = vmatpush1.bf16.msra.mxu0 %v3460
  %4645 = vmatprep.mubr.bf16.mxu0 %v1186
  %4646 = vmatmul.mubr.bf16.gmra.mrb[0].mxu0 %v1185
  %v4647 = vpop.f32.mrb[0].mxu0
  %v4648 = vadd.f32 %v4608, %v4647
  %v4649 = vpop.f32.mrb[0].mxu0
  %v4650 = vpop.f32.mrb[0].mxu0
  %v4651 = vpop.f32.mrb[0].mxu0
  %4652 = vdwg.mxu0
  %4653 = vmatprep.subr.bf16.mxu0 0
  %4654 = vmatpush1.bf16.msra.mxu0 %v3461
  %4655 = vmatprep.subr.bf16.mxu0 0
  %4656 = vmatpush1.bf16.msra.mxu0 %v3462
  %4657 = vmatprep.subr.bf16.mxu0 0
  %4658 = vmatpush1.bf16.msra.mxu0 %v3463
  %4659 = vmatprep.subr.bf16.mxu0 0
  %4660 = vmatpush1.bf16.msra.mxu0 %v3464
  %4661 = vmatprep.subr.bf16.mxu0 0
  %4662 = vmatpush1.bf16.msra.mxu0 %v3465
  %4663 = vmatprep.subr.bf16.mxu0 0
  %4664 = vmatpush1.bf16.msra.mxu0 %v3466
  %4665 = vmatprep.subr.bf16.mxu0 0
  %4666 = vmatpush1.bf16.msra.mxu0 %v3467
  %4667 = vmatprep.subr.bf16.mxu0 0
  %4668 = vmatpush1.bf16.msra.mxu0 %v3468
  %4669 = vmatprep.subr.bf16.mxu0 0
  %4670 = vmatpush1.bf16.msra.mxu0 %v3469
  %4671 = vmatprep.subr.bf16.mxu0 0
  %4672 = vmatpush1.bf16.msra.mxu0 %v3470
  %4673 = vmatprep.subr.bf16.mxu0 0
  %4674 = vmatpush1.bf16.msra.mxu0 %v3471
  %4675 = vmatprep.subr.bf16.mxu0 0
  %4676 = vmatpush1.bf16.msra.mxu0 %v3472
  %4677 = vmatprep.subr.bf16.mxu0 0
  %4678 = vmatpush1.bf16.msra.mxu0 %v3473
  %4679 = vmatprep.subr.bf16.mxu0 0
  %4680 = vmatpush1.bf16.msra.mxu0 %v3474
  %4681 = vmatprep.subr.bf16.mxu0 0
  %4682 = vmatpush1.bf16.msra.mxu0 %v3475
  %4683 = vmatprep.subr.bf16.mxu0 0
  %4684 = vmatpush1.bf16.msra.mxu0 %v3476
  %4685 = vmatprep.mubr.bf16.mxu0 %v1188
  %4686 = vmatmul.mubr.bf16.gmra.mrb[0].mxu0 %v1187
  %v4687 = vpop.f32.mrb[0].mxu0
  %v4688 = vadd.f32 %v4648, %v4687
  %v4689 = vpop.f32.mrb[0].mxu0
  %v4690 = vpop.f32.mrb[0].mxu0
  %v4691 = vpop.f32.mrb[0].mxu0
  %4692 = vdwg.mxu0
  %4693 = vmatprep.subr.bf16.mxu0 0
  %4694 = vmatpush1.bf16.msra.mxu0 %v3477
  %4695 = vmatprep.subr.bf16.mxu0 0
  %4696 = vmatpush1.bf16.msra.mxu0 %v3478
  %4697 = vmatprep.subr.bf16.mxu0 0
  %4698 = vmatpush1.bf16.msra.mxu0 %v3479
  %4699 = vmatprep.subr.bf16.mxu0 0
  %4700 = vmatpush1.bf16.msra.mxu0 %v3480
  %4701 = vmatprep.subr.bf16.mxu0 0
  %4702 = vmatpush1.bf16.msra.mxu0 %v3481
  %4703 = vmatprep.subr.bf16.mxu0 0
  %4704 = vmatpush1.bf16.msra.mxu0 %v3482
  %4705 = vmatprep.subr.bf16.mxu0 0
  %4706 = vmatpush1.bf16.msra.mxu0 %v3483
  %4707 = vmatprep.subr.bf16.mxu0 0
  %4708 = vmatpush1.bf16.msra.mxu0 %v3484
  %4709 = vmatprep.subr.bf16.mxu0 0
  %4710 = vmatpush1.bf16.msra.mxu0 %v3485
  %4711 = vmatprep.subr.bf16.mxu0 0
  %4712 = vmatpush1.bf16.msra.mxu0 %v3486
  %4713 = vmatprep.subr.bf16.mxu0 0
  %4714 = vmatpush1.bf16.msra.mxu0 %v3487
  %4715 = vmatprep.subr.bf16.mxu0 0
  %4716 = vmatpush1.bf16.msra.mxu0 %v3488
  %4717 = vmatprep.subr.bf16.mxu0 0
  %4718 = vmatpush1.bf16.msra.mxu0 %v3489
  %4719 = vmatprep.subr.bf16.mxu0 0
  %4720 = vmatpush1.bf16.msra.mxu0 %v3490
  %4721 = vmatprep.subr.bf16.mxu0 0
  %4722 = vmatpush1.bf16.msra.mxu0 %v3491
  %4723 = vmatprep.subr.bf16.mxu0 0
  %4724 = vmatpush1.bf16.msra.mxu0 %v3492
  %4725 = vmatprep.mubr.bf16.mxu0 %v1190
  %4726 = vmatmul.mubr.bf16.gmra.mrb[0].mxu0 %v1189
  %v4727 = vpop.f32.mrb[0].mxu0
  %v4728 = vadd.f32 %v4688, %v4727
  %v4729 = vpop.f32.mrb[0].mxu0
  %v4730 = vpop.f32.mrb[0].mxu0
  %v4731 = vpop.f32.mrb[0].mxu0
  %4732 = vdwg.mxu0
  %4733 = vmatprep.subr.bf16.mxu0 0
  %4734 = vmatpush1.bf16.msra.mxu0 %v3493
  %4735 = vmatprep.subr.bf16.mxu0 0
  %4736 = vmatpush1.bf16.msra.mxu0 %v3494
  %4737 = vmatprep.subr.bf16.mxu0 0
  %4738 = vmatpush1.bf16.msra.mxu0 %v3495
  %4739 = vmatprep.subr.bf16.mxu0 0
  %4740 = vmatpush1.bf16.msra.mxu0 %v3496
  %4741 = vmatprep.subr.bf16.mxu0 0
  %4742 = vmatpush1.bf16.msra.mxu0 %v3497
  %4743 = vmatprep.subr.bf16.mxu0 0
  %4744 = vmatpush1.bf16.msra.mxu0 %v3498
  %4745 = vmatprep.subr.bf16.mxu0 0
  %4746 = vmatpush1.bf16.msra.mxu0 %v3499
  %4747 = vmatprep.subr.bf16.mxu0 0
  %4748 = vmatpush1.bf16.msra.mxu0 %v3500
  %4749 = vmatprep.subr.bf16.mxu0 0
  %4750 = vmatpush1.bf16.msra.mxu0 %v3501
  %4751 = vmatprep.subr.bf16.mxu0 0
  %4752 = vmatpush1.bf16.msra.mxu0 %v3502
  %4753 = vmatprep.subr.bf16.mxu0 0
  %4754 = vmatpush1.bf16.msra.mxu0 %v3503
  %4755 = vmatprep.subr.bf16.mxu0 0
  %4756 = vmatpush1.bf16.msra.mxu0 %v3504
  %4757 = vmatprep.subr.bf16.mxu0 0
  %4758 = vmatpush1.bf16.msra.mxu0 %v3505
  %4759 = vmatprep.subr.bf16.mxu0 0
  %4760 = vmatpush1.bf16.msra.mxu0 %v3506
  %4761 = vmatprep.subr.bf16.mxu0 0
  %4762 = vmatpush1.bf16.msra.mxu0 %v3507
  %4763 = vmatprep.subr.bf16.mxu0 0
  %4764 = vmatpush1.bf16.msra.mxu0 %v3508
  %4765 = vmatprep.mubr.bf16.mxu0 %v1192
  %4766 = vmatmul.mubr.bf16.gmra.mrb[0].mxu0 %v1191
  %v4767 = vpop.f32.mrb[0].mxu0
  %v4768 = vadd.f32 %v4728, %v4767
  %v4769 = vpop.f32.mrb[0].mxu0
  %v4770 = vpop.f32.mrb[0].mxu0
  %v4771 = vpop.f32.mrb[0].mxu0
  %4772 = vdwg.mxu0
  %4773 = vmatprep.subr.bf16.mxu0 0
  %4774 = vmatpush1.bf16.msra.mxu0 %v3509
  %4775 = vmatprep.subr.bf16.mxu0 0
  %4776 = vmatpush1.bf16.msra.mxu0 %v3510
  %4777 = vmatprep.subr.bf16.mxu0 0
  %4778 = vmatpush1.bf16.msra.mxu0 %v3511
  %4779 = vmatprep.subr.bf16.mxu0 0
  %4780 = vmatpush1.bf16.msra.mxu0 %v3512
  %4781 = vmatprep.subr.bf16.mxu0 0
  %4782 = vmatpush1.bf16.msra.mxu0 %v3513
  %4783 = vmatprep.subr.bf16.mxu0 0
  %4784 = vmatpush1.bf16.msra.mxu0 %v3514
  %4785 = vmatprep.subr.bf16.mxu0 0
  %4786 = vmatpush1.bf16.msra.mxu0 %v3515
  %4787 = vmatprep.subr.bf16.mxu0 0
  %4788 = vmatpush1.bf16.msra.mxu0 %v3516
  %4789 = vmatprep.subr.bf16.mxu0 0
  %4790 = vmatpush1.bf16.msra.mxu0 %v3517
  %4791 = vmatprep.subr.bf16.mxu0 0
  %4792 = vmatpush1.bf16.msra.mxu0 %v3518
  %4793 = vmatprep.subr.bf16.mxu0 0
  %4794 = vmatpush1.bf16.msra.mxu0 %v3519
  %4795 = vmatprep.subr.bf16.mxu0 0
  %4796 = vmatpush1.bf16.msra.mxu0 %v3520
  %4797 = vmatprep.subr.bf16.mxu0 0
  %4798 = vmatpush1.bf16.msra.mxu0 %v3521
  %4799 = vmatprep.subr.bf16.mxu0 0
  %4800 = vmatpush1.bf16.msra.mxu0 %v3522
  %4801 = vmatprep.subr.bf16.mxu0 0
  %4802 = vmatpush1.bf16.msra.mxu0 %v3523
  %4803 = vmatprep.subr.bf16.mxu0 0
  %4804 = vmatpush1.bf16.msra.mxu0 %v3524
  %4805 = vmatprep.mubr.bf16.mxu0 %v1194
  %4806 = vmatmul.mubr.bf16.gmra.mrb[0].mxu0 %v1193
  %v4807 = vpop.f32.mrb[0].mxu0
  %v4808 = vadd.f32 %v4768, %v4807
  %v4809 = vpop.f32.mrb[0].mxu0
  %v4810 = vpop.f32.mrb[0].mxu0
  %v4811 = vpop.f32.mrb[0].mxu0
  %4812 = vdwg.mxu0
  %4813 = vmatprep.subr.bf16.mxu0 0
  %4814 = vmatpush1.bf16.msra.mxu0 %v3525
  %4815 = vmatprep.subr.bf16.mxu0 0
  %4816 = vmatpush1.bf16.msra.mxu0 %v3526
  %4817 = vmatprep.subr.bf16.mxu0 0
  %4818 = vmatpush1.bf16.msra.mxu0 %v3527
  %4819 = vmatprep.subr.bf16.mxu0 0
  %4820 = vmatpush1.bf16.msra.mxu0 %v3528
  %4821 = vmatprep.subr.bf16.mxu0 0
  %4822 = vmatpush1.bf16.msra.mxu0 %v3529
  %4823 = vmatprep.subr.bf16.mxu0 0
  %4824 = vmatpush1.bf16.msra.mxu0 %v3530
  %4825 = vmatprep.subr.bf16.mxu0 0
  %4826 = vmatpush1.bf16.msra.mxu0 %v3531
  %4827 = vmatprep.subr.bf16.mxu0 0
  %4828 = vmatpush1.bf16.msra.mxu0 %v3532
  %4829 = vmatprep.subr.bf16.mxu0 0
  %4830 = vmatpush1.bf16.msra.mxu0 %v3533
  %4831 = vmatprep.subr.bf16.mxu0 0
  %4832 = vmatpush1.bf16.msra.mxu0 %v3534
  %4833 = vmatprep.subr.bf16.mxu0 0
  %4834 = vmatpush1.bf16.msra.mxu0 %v3535
  %4835 = vmatprep.subr.bf16.mxu0 0
  %4836 = vmatpush1.bf16.msra.mxu0 %v3536
  %4837 = vmatprep.subr.bf16.mxu0 0
  %4838 = vmatpush1.bf16.msra.mxu0 %v3537
  %4839 = vmatprep.subr.bf16.mxu0 0
  %4840 = vmatpush1.bf16.msra.mxu0 %v3538
  %4841 = vmatprep.subr.bf16.mxu0 0
  %4842 = vmatpush1.bf16.msra.mxu0 %v3539
  %4843 = vmatprep.subr.bf16.mxu0 0
  %4844 = vmatpush1.bf16.msra.mxu0 %v3540
  %4845 = vmatprep.mubr.bf16.mxu0 %v1196
  %4846 = vmatmul.mubr.bf16.gmra.mrb[0].mxu0 %v1195
  %v4847 = vpop.f32.mrb[0].mxu0
  %v4848 = vadd.f32 %v4808, %v4847
  %v4849 = vpop.f32.mrb[0].mxu0
  %v4850 = vpop.f32.mrb[0].mxu0
  %v4851 = vpop.f32.mrb[0].mxu0
  %4852 = vdwg.mxu0
  %4853 = vmatprep.subr.bf16.mxu0 0
  %4854 = vmatpush1.bf16.msra.mxu0 %v3541
  %4855 = vmatprep.subr.bf16.mxu0 0
  %4856 = vmatpush1.bf16.msra.mxu0 %v3542
  %4857 = vmatprep.subr.bf16.mxu0 0
  %4858 = vmatpush1.bf16.msra.mxu0 %v3543
  %4859 = vmatprep.subr.bf16.mxu0 0
  %4860 = vmatpush1.bf16.msra.mxu0 %v3544
  %4861 = vmatprep.subr.bf16.mxu0 0
  %4862 = vmatpush1.bf16.msra.mxu0 %v3545
  %4863 = vmatprep.subr.bf16.mxu0 0
  %4864 = vmatpush1.bf16.msra.mxu0 %v3546
  %4865 = vmatprep.subr.bf16.mxu0 0
  %4866 = vmatpush1.bf16.msra.mxu0 %v3547
  %4867 = vmatprep.subr.bf16.mxu0 0
  %4868 = vmatpush1.bf16.msra.mxu0 %v3548
  %4869 = vmatprep.subr.bf16.mxu0 0
  %4870 = vmatpush1.bf16.msra.mxu0 %v3549
  %4871 = vmatprep.subr.bf16.mxu0 0
  %4872 = vmatpush1.bf16.msra.mxu0 %v3550
  %4873 = vmatprep.subr.bf16.mxu0 0
  %4874 = vmatpush1.bf16.msra.mxu0 %v3551
  %4875 = vmatprep.subr.bf16.mxu0 0
  %4876 = vmatpush1.bf16.msra.mxu0 %v3552
  %4877 = vmatprep.subr.bf16.mxu0 0
  %4878 = vmatpush1.bf16.msra.mxu0 %v3553
  %4879 = vmatprep.subr.bf16.mxu0 0
  %4880 = vmatpush1.bf16.msra.mxu0 %v3554
  %4881 = vmatprep.subr.bf16.mxu0 0
  %4882 = vmatpush1.bf16.msra.mxu0 %v3555
  %4883 = vmatprep.subr.bf16.mxu0 0
  %4884 = vmatpush1.bf16.msra.mxu0 %v3556
  %4885 = vmatprep.mubr.bf16.mxu0 %v1198
  %4886 = vmatmul.mubr.bf16.gmra.mrb[0].mxu0 %v1197
  %v4887 = vpop.f32.mrb[0].mxu0
  %v4888 = vadd.f32 %v4848, %v4887
  %v4889 = vpop.f32.mrb[0].mxu0
  %v4890 = vpop.f32.mrb[0].mxu0
  %v4891 = vpop.f32.mrb[0].mxu0
  %4892 = vdwg.mxu0
  %4893 = vmatprep.subr.bf16.mxu0 0
  %4894 = vmatpush1.bf16.msra.mxu0 %v3557
  %4895 = vmatprep.subr.bf16.mxu0 0
  %4896 = vmatpush1.bf16.msra.mxu0 %v3558
  %4897 = vmatprep.subr.bf16.mxu0 0
  %4898 = vmatpush1.bf16.msra.mxu0 %v3559
  %4899 = vmatprep.subr.bf16.mxu0 0
  %4900 = vmatpush1.bf16.msra.mxu0 %v3560
  %4901 = vmatprep.subr.bf16.mxu0 0
  %4902 = vmatpush1.bf16.msra.mxu0 %v3561
  %4903 = vmatprep.subr.bf16.mxu0 0
  %4904 = vmatpush1.bf16.msra.mxu0 %v3562
  %4905 = vmatprep.subr.bf16.mxu0 0
  %4906 = vmatpush1.bf16.msra.mxu0 %v3563
  %4907 = vmatprep.subr.bf16.mxu0 0
  %4908 = vmatpush1.bf16.msra.mxu0 %v3564
  %4909 = vmatprep.subr.bf16.mxu0 0
  %4910 = vmatpush1.bf16.msra.mxu0 %v3565
  %4911 = vmatprep.subr.bf16.mxu0 0
  %4912 = vmatpush1.bf16.msra.mxu0 %v3566
  %4913 = vmatprep.subr.bf16.mxu0 0
  %4914 = vmatpush1.bf16.msra.mxu0 %v3567
  %4915 = vmatprep.subr.bf16.mxu0 0
  %4916 = vmatpush1.bf16.msra.mxu0 %v3568
  %4917 = vmatprep.subr.bf16.mxu0 0
  %4918 = vmatpush1.bf16.msra.mxu0 %v3569
  %4919 = vmatprep.subr.bf16.mxu0 0
  %4920 = vmatpush1.bf16.msra.mxu0 %v3570
  %4921 = vmatprep.subr.bf16.mxu0 0
  %4922 = vmatpush1.bf16.msra.mxu0 %v3571
  %4923 = vmatprep.subr.bf16.mxu0 0
  %4924 = vmatpush1.bf16.msra.mxu0 %v3572
  %4925 = vmatprep.mubr.bf16.mxu0 %v1200
  %4926 = vmatmul.mubr.bf16.gmra.mrb[0].mxu0 %v1199
  %v4927 = vpop.f32.mrb[0].mxu0
  %v4928 = vadd.f32 %v4888, %v4927
  %v4929 = vpop.f32.mrb[0].mxu0
  %v4930 = vpop.f32.mrb[0].mxu0
  %v4931 = vpop.f32.mrb[0].mxu0
  %4932 = vdwg.mxu0
  %4933 = vmatprep.subr.bf16.mxu0 0
  %4934 = vmatpush1.bf16.msra.mxu0 %v3573
  %4935 = vmatprep.subr.bf16.mxu0 0
  %4936 = vmatpush1.bf16.msra.mxu0 %v3574
  %4937 = vmatprep.subr.bf16.mxu0 0
  %4938 = vmatpush1.bf16.msra.mxu0 %v3575
  %4939 = vmatprep.subr.bf16.mxu0 0
  %4940 = vmatpush1.bf16.msra.mxu0 %v3576
  %4941 = vmatprep.subr.bf16.mxu0 0
  %4942 = vmatpush1.bf16.msra.mxu0 %v3577
  %4943 = vmatprep.subr.bf16.mxu0 0
  %4944 = vmatpush1.bf16.msra.mxu0 %v3578
  %4945 = vmatprep.subr.bf16.mxu0 0
  %4946 = vmatpush1.bf16.msra.mxu0 %v3579
  %4947 = vmatprep.subr.bf16.mxu0 0
  %4948 = vmatpush1.bf16.msra.mxu0 %v3580
  %4949 = vmatprep.subr.bf16.mxu0 0
  %4950 = vmatpush1.bf16.msra.mxu0 %v3581
  %4951 = vmatprep.subr.bf16.mxu0 0
  %4952 = vmatpush1.bf16.msra.mxu0 %v3582
  %4953 = vmatprep.subr.bf16.mxu0 0
  %4954 = vmatpush1.bf16.msra.mxu0 %v3583
  %4955 = vmatprep.subr.bf16.mxu0 0
  %4956 = vmatpush1.bf16.msra.mxu0 %v3584
  %4957 = vmatprep.subr.bf16.mxu0 0
  %4958 = vmatpush1.bf16.msra.mxu0 %v3585
  %4959 = vmatprep.subr.bf16.mxu0 0
  %4960 = vmatpush1.bf16.msra.mxu0 %v3586
  %4961 = vmatprep.subr.bf16.mxu0 0
  %4962 = vmatpush1.bf16.msra.mxu0 %v3587
  %4963 = vmatprep.subr.bf16.mxu0 0
  %4964 = vmatpush1.bf16.msra.mxu0 %v3588
  %4965 = vmatprep.mubr.bf16.mxu0 %v1202
  %4966 = vmatmul.mubr.bf16.gmra.mrb[0].mxu0 %v1201
  %v4967 = vpop.f32.mrb[0].mxu0
  %v4968 = vadd.f32 %v4928, %v4967
  %v4969 = vpop.f32.mrb[0].mxu0
  %v4970 = vpop.f32.mrb[0].mxu0
  %v4971 = vpop.f32.mrb[0].mxu0
  %4972 = vdwg.mxu0
  %4973 = vmatprep.subr.bf16.mxu0 0
  %4974 = vmatpush1.bf16.msra.mxu0 %v3589
  %4975 = vmatprep.subr.bf16.mxu0 0
  %4976 = vmatpush1.bf16.msra.mxu0 %v3590
  %4977 = vmatprep.subr.bf16.mxu0 0
  %4978 = vmatpush1.bf16.msra.mxu0 %v3591
  %4979 = vmatprep.subr.bf16.mxu0 0
  %4980 = vmatpush1.bf16.msra.mxu0 %v3592
  %4981 = vmatprep.subr.bf16.mxu0 0
  %4982 = vmatpush1.bf16.msra.mxu0 %v3593
  %4983 = vmatprep.subr.bf16.mxu0 0
  %4984 = vmatpush1.bf16.msra.mxu0 %v3594
  %4985 = vmatprep.subr.bf16.mxu0 0
  %4986 = vmatpush1.bf16.msra.mxu0 %v3595
  %4987 = vmatprep.subr.bf16.mxu0 0
  %4988 = vmatpush1.bf16.msra.mxu0 %v3596
  %4989 = vmatprep.subr.bf16.mxu0 0
  %4990 = vmatpush1.bf16.msra.mxu0 %v3597
  %4991 = vmatprep.subr.bf16.mxu0 0
  %4992 = vmatpush1.bf16.msra.mxu0 %v3598
  %4993 = vmatprep.subr.bf16.mxu0 0
  %4994 = vmatpush1.bf16.msra.mxu0 %v3599
  %4995 = vmatprep.subr.bf16.mxu0 0
  %4996 = vmatpush1.bf16.msra.mxu0 %v3600
  %4997 = vmatprep.subr.bf16.mxu0 0
  %4998 = vmatpush1.bf16.msra.mxu0 %v3601
  %4999 = vmatprep.subr.bf16.mxu0 0
  %5000 = vmatpush1.bf16.msra.mxu0 %v3602
  %5001 = vmatprep.subr.bf16.mxu0 0
  %5002 = vmatpush1.bf16.msra.mxu0 %v3603
  %5003 = vmatprep.subr.bf16.mxu0 0
  %5004 = vmatpush1.bf16.msra.mxu0 %v3604
  %5005 = vmatprep.mubr.bf16.mxu0 %v1204
  %5006 = vmatmul.mubr.bf16.gmra.mrb[0].mxu0 %v1203
  %v5007 = vpop.f32.mrb[0].mxu0
  %v5008 = vadd.f32 %v4968, %v5007
  %v5009 = vpop.f32.mrb[0].mxu0
  %v5010 = vpop.f32.mrb[0].mxu0
  %v5011 = vpop.f32.mrb[0].mxu0
  %5012 = vdwg.mxu0
  %5013 = vmatprep.subr.bf16.mxu0 0
  %5014 = vmatpush1.bf16.msra.mxu0 %v3605
  %5015 = vmatprep.subr.bf16.mxu0 0
  %5016 = vmatpush1.bf16.msra.mxu0 %v3606
  %5017 = vmatprep.subr.bf16.mxu0 0
  %5018 = vmatpush1.bf16.msra.mxu0 %v3607
  %5019 = vmatprep.subr.bf16.mxu0 0
  %5020 = vmatpush1.bf16.msra.mxu0 %v3608
  %5021 = vmatprep.subr.bf16.mxu0 0
  %5022 = vmatpush1.bf16.msra.mxu0 %v3609
  %5023 = vmatprep.subr.bf16.mxu0 0
  %5024 = vmatpush1.bf16.msra.mxu0 %v3610
  %5025 = vmatprep.subr.bf16.mxu0 0
  %5026 = vmatpush1.bf16.msra.mxu0 %v3611
  %5027 = vmatprep.subr.bf16.mxu0 0
  %5028 = vmatpush1.bf16.msra.mxu0 %v3612
  %5029 = vmatprep.subr.bf16.mxu0 0
  %5030 = vmatpush1.bf16.msra.mxu0 %v3613
  %5031 = vmatprep.subr.bf16.mxu0 0
  %5032 = vmatpush1.bf16.msra.mxu0 %v3614
  %5033 = vmatprep.subr.bf16.mxu0 0
  %5034 = vmatpush1.bf16.msra.mxu0 %v3615
  %5035 = vmatprep.subr.bf16.mxu0 0
  %5036 = vmatpush1.bf16.msra.mxu0 %v3616
  %5037 = vmatprep.subr.bf16.mxu0 0
  %5038 = vmatpush1.bf16.msra.mxu0 %v3617
  %5039 = vmatprep.subr.bf16.mxu0 0
  %5040 = vmatpush1.bf16.msra.mxu0 %v3618
  %5041 = vmatprep.subr.bf16.mxu0 0
  %5042 = vmatpush1.bf16.msra.mxu0 %v3619
  %5043 = vmatprep.subr.bf16.mxu0 0
  %5044 = vmatpush1.bf16.msra.mxu0 %v3620
  %5045 = vmatprep.mubr.bf16.mxu0 %v1206
  %5046 = vmatmul.mubr.bf16.gmra.mrb[0].mxu0 %v1205
  %v5047 = vpop.f32.mrb[0].mxu0
  %v5048 = vadd.f32 %v5008, %v5047
  %v5049 = vpop.f32.mrb[0].mxu0
  %v5050 = vpop.f32.mrb[0].mxu0
  %v5051 = vpop.f32.mrb[0].mxu0
  %5052 = vdwg.mxu0
  %5053 = vmatprep.subr.bf16.mxu0 0
  %5054 = vmatpush1.bf16.msra.mxu0 %v3621
  %5055 = vmatprep.subr.bf16.mxu0 0
  %5056 = vmatpush1.bf16.msra.mxu0 %v3622
  %5057 = vmatprep.subr.bf16.mxu0 0
  %5058 = vmatpush1.bf16.msra.mxu0 %v3623
  %5059 = vmatprep.subr.bf16.mxu0 0
  %5060 = vmatpush1.bf16.msra.mxu0 %v3624
  %5061 = vmatprep.subr.bf16.mxu0 0
  %5062 = vmatpush1.bf16.msra.mxu0 %v3625
  %5063 = vmatprep.subr.bf16.mxu0 0
  %5064 = vmatpush1.bf16.msra.mxu0 %v3626
  %5065 = vmatprep.subr.bf16.mxu0 0
  %5066 = vmatpush1.bf16.msra.mxu0 %v3627
  %5067 = vmatprep.subr.bf16.mxu0 0
  %5068 = vmatpush1.bf16.msra.mxu0 %v3628
  %5069 = vmatprep.subr.bf16.mxu0 0
  %5070 = vmatpush1.bf16.msra.mxu0 %v3629
  %5071 = vmatprep.subr.bf16.mxu0 0
  %5072 = vmatpush1.bf16.msra.mxu0 %v3630
  %5073 = vmatprep.subr.bf16.mxu0 0
  %5074 = vmatpush1.bf16.msra.mxu0 %v3631
  %5075 = vmatprep.subr.bf16.mxu0 0
  %5076 = vmatpush1.bf16.msra.mxu0 %v3632
  %5077 = vmatprep.subr.bf16.mxu0 0
  %5078 = vmatpush1.bf16.msra.mxu0 %v3633
  %5079 = vmatprep.subr.bf16.mxu0 0
  %5080 = vmatpush1.bf16.msra.mxu0 %v3634
  %5081 = vmatprep.subr.bf16.mxu0 0
  %5082 = vmatpush1.bf16.msra.mxu0 %v3635
  %5083 = vmatprep.subr.bf16.mxu0 0
  %5084 = vmatpush1.bf16.msra.mxu0 %v3636
  %5085 = vmatprep.mubr.bf16.mxu0 %v1208
  %5086 = vmatmul.mubr.bf16.gmra.mrb[0].mxu0 %v1207
  %v5087 = vpop.f32.mrb[0].mxu0
  %v5088 = vadd.f32 %v5048, %v5087
  %v5089 = vpop.f32.mrb[0].mxu0
  %v5090 = vpop.f32.mrb[0].mxu0
  %v5091 = vpop.f32.mrb[0].mxu0
  %5092 = vdwg.mxu0
  %5093 = vmatprep.subr.bf16.mxu0 0
  %5094 = vmatpush1.bf16.msra.mxu0 %v3637
  %5095 = vmatprep.subr.bf16.mxu0 0
  %5096 = vmatpush1.bf16.msra.mxu0 %v3638
  %5097 = vmatprep.subr.bf16.mxu0 0
  %5098 = vmatpush1.bf16.msra.mxu0 %v3639
  %5099 = vmatprep.subr.bf16.mxu0 0
  %5100 = vmatpush1.bf16.msra.mxu0 %v3640
  %5101 = vmatprep.subr.bf16.mxu0 0
  %5102 = vmatpush1.bf16.msra.mxu0 %v3641
  %5103 = vmatprep.subr.bf16.mxu0 0
  %5104 = vmatpush1.bf16.msra.mxu0 %v3642
  %5105 = vmatprep.subr.bf16.mxu0 0
  %5106 = vmatpush1.bf16.msra.mxu0 %v3643
  %5107 = vmatprep.subr.bf16.mxu0 0
  %5108 = vmatpush1.bf16.msra.mxu0 %v3644
  %5109 = vmatprep.subr.bf16.mxu0 0
  %5110 = vmatpush1.bf16.msra.mxu0 %v3645
  %5111 = vmatprep.subr.bf16.mxu0 0
  %5112 = vmatpush1.bf16.msra.mxu0 %v3646
  %5113 = vmatprep.subr.bf16.mxu0 0
  %5114 = vmatpush1.bf16.msra.mxu0 %v3647
  %5115 = vmatprep.subr.bf16.mxu0 0
  %5116 = vmatpush1.bf16.msra.mxu0 %v3648
  %5117 = vmatprep.subr.bf16.mxu0 0
  %5118 = vmatpush1.bf16.msra.mxu0 %v3649
  %5119 = vmatprep.subr.bf16.mxu0 0
  %5120 = vmatpush1.bf16.msra.mxu0 %v3650
  %5121 = vmatprep.subr.bf16.mxu0 0
  %5122 = vmatpush1.bf16.msra.mxu0 %v3651
  %5123 = vmatprep.subr.bf16.mxu0 0
  %5124 = vmatpush1.bf16.msra.mxu0 %v3652
  %5125 = vmatprep.mubr.bf16.mxu0 %v1210
  %5126 = vmatmul.mubr.bf16.gmra.mrb[0].mxu0 %v1209
  %v5127 = vpop.f32.mrb[0].mxu0
  %v5128 = vadd.f32 %v5088, %v5127
  %v5129 = vpop.f32.mrb[0].mxu0
  %v5130 = vpop.f32.mrb[0].mxu0
  %v5131 = vpop.f32.mrb[0].mxu0
  %5132 = vdwg.mxu0
  %5133 = vmatprep.subr.bf16.mxu0 0
  %5134 = vmatpush1.bf16.msra.mxu0 %v3653
  %5135 = vmatprep.subr.bf16.mxu0 0
  %5136 = vmatpush1.bf16.msra.mxu0 %v3654
  %5137 = vmatprep.subr.bf16.mxu0 0
  %5138 = vmatpush1.bf16.msra.mxu0 %v3655
  %5139 = vmatprep.subr.bf16.mxu0 0
  %5140 = vmatpush1.bf16.msra.mxu0 %v3656
  %5141 = vmatprep.subr.bf16.mxu0 0
  %5142 = vmatpush1.bf16.msra.mxu0 %v3657
  %5143 = vmatprep.subr.bf16.mxu0 0
  %5144 = vmatpush1.bf16.msra.mxu0 %v3658
  %5145 = vmatprep.subr.bf16.mxu0 0
  %5146 = vmatpush1.bf16.msra.mxu0 %v3659
  %5147 = vmatprep.subr.bf16.mxu0 0
  %5148 = vmatpush1.bf16.msra.mxu0 %v3660
  %5149 = vmatprep.subr.bf16.mxu0 0
  %5150 = vmatpush1.bf16.msra.mxu0 %v3661
  %5151 = vmatprep.subr.bf16.mxu0 0
  %5152 = vmatpush1.bf16.msra.mxu0 %v3662
  %5153 = vmatprep.subr.bf16.mxu0 0
  %5154 = vmatpush1.bf16.msra.mxu0 %v3663
  %5155 = vmatprep.subr.bf16.mxu0 0
  %5156 = vmatpush1.bf16.msra.mxu0 %v3664
  %5157 = vmatprep.subr.bf16.mxu0 0
  %5158 = vmatpush1.bf16.msra.mxu0 %v3665
  %5159 = vmatprep.subr.bf16.mxu0 0
  %5160 = vmatpush1.bf16.msra.mxu0 %v3666
  %5161 = vmatprep.subr.bf16.mxu0 0
  %5162 = vmatpush1.bf16.msra.mxu0 %v3667
  %5163 = vmatprep.subr.bf16.mxu0 0
  %5164 = vmatpush1.bf16.msra.mxu0 %v3668
  %5165 = vmatprep.mubr.bf16.mxu0 %v1212
  %5166 = vmatmul.mubr.bf16.gmra.mrb[0].mxu0 %v1211
  %v5167 = vpop.f32.mrb[0].mxu0
  %v5168 = vadd.f32 %v5128, %v5167
  %v5169 = vpop.f32.mrb[0].mxu0
  %v5170 = vpop.f32.mrb[0].mxu0
  %v5171 = vpop.f32.mrb[0].mxu0
  %5172 = vdwg.mxu0
  %5173 = vmatprep.subr.bf16.mxu0 0
  %5174 = vmatpush1.bf16.msra.mxu0 %v3669
  %5175 = vmatprep.subr.bf16.mxu0 0
  %5176 = vmatpush1.bf16.msra.mxu0 %v3670
  %5177 = vmatprep.subr.bf16.mxu0 0
  %5178 = vmatpush1.bf16.msra.mxu0 %v3671
  %5179 = vmatprep.subr.bf16.mxu0 0
  %5180 = vmatpush1.bf16.msra.mxu0 %v3672
  %5181 = vmatprep.subr.bf16.mxu0 0
  %5182 = vmatpush1.bf16.msra.mxu0 %v3673
  %5183 = vmatprep.subr.bf16.mxu0 0
  %5184 = vmatpush1.bf16.msra.mxu0 %v3674
  %5185 = vmatprep.subr.bf16.mxu0 0
  %5186 = vmatpush1.bf16.msra.mxu0 %v3675
  %5187 = vmatprep.subr.bf16.mxu0 0
  %5188 = vmatpush1.bf16.msra.mxu0 %v3676
  %5189 = vmatprep.subr.bf16.mxu0 0
  %5190 = vmatpush1.bf16.msra.mxu0 %v3677
  %5191 = vmatprep.subr.bf16.mxu0 0
  %5192 = vmatpush1.bf16.msra.mxu0 %v3678
  %5193 = vmatprep.subr.bf16.mxu0 0
  %5194 = vmatpush1.bf16.msra.mxu0 %v3679
  %5195 = vmatprep.subr.bf16.mxu0 0
  %5196 = vmatpush1.bf16.msra.mxu0 %v3680
  %5197 = vmatprep.subr.bf16.mxu0 0
  %5198 = vmatpush1.bf16.msra.mxu0 %v3681
  %5199 = vmatprep.subr.bf16.mxu0 0
  %5200 = vmatpush1.bf16.msra.mxu0 %v3682
  %5201 = vmatprep.subr.bf16.mxu0 0
  %5202 = vmatpush1.bf16.msra.mxu0 %v3683
  %5203 = vmatprep.subr.bf16.mxu0 0
  %5204 = vmatpush1.bf16.msra.mxu0 %v3684
  %5205 = vmatprep.mubr.bf16.mxu0 %v1214
  %5206 = vmatmul.mubr.bf16.gmra.mrb[0].mxu0 %v1213
  %v5207 = vpop.f32.mrb[0].mxu0
  %v5208 = vadd.f32 %v5168, %v5207
  %v5209 = vpop.f32.mrb[0].mxu0
  %v5210 = vpop.f32.mrb[0].mxu0
  %v5211 = vpop.f32.mrb[0].mxu0
  %5212 = vdwg.mxu0
  %5213 = vmatprep.subr.bf16.mxu0 0
  %5214 = vmatpush1.bf16.msra.mxu0 %v3685
  %5215 = vmatprep.subr.bf16.mxu0 0
  %5216 = vmatpush1.bf16.msra.mxu0 %v3686
  %5217 = vmatprep.subr.bf16.mxu0 0
  %5218 = vmatpush1.bf16.msra.mxu0 %v3687
  %5219 = vmatprep.subr.bf16.mxu0 0
  %5220 = vmatpush1.bf16.msra.mxu0 %v3688
  %5221 = vmatprep.subr.bf16.mxu0 0
  %5222 = vmatpush1.bf16.msra.mxu0 %v3689
  %5223 = vmatprep.subr.bf16.mxu0 0
  %5224 = vmatpush1.bf16.msra.mxu0 %v3690
  %5225 = vmatprep.subr.bf16.mxu0 0
  %5226 = vmatpush1.bf16.msra.mxu0 %v3691
  %5227 = vmatprep.subr.bf16.mxu0 0
  %5228 = vmatpush1.bf16.msra.mxu0 %v3692
  %5229 = vmatprep.subr.bf16.mxu0 0
  %5230 = vmatpush1.bf16.msra.mxu0 %v3693
  %5231 = vmatprep.subr.bf16.mxu0 0
  %5232 = vmatpush1.bf16.msra.mxu0 %v3694
  %5233 = vmatprep.subr.bf16.mxu0 0
  %5234 = vmatpush1.bf16.msra.mxu0 %v3695
  %5235 = vmatprep.subr.bf16.mxu0 0
  %5236 = vmatpush1.bf16.msra.mxu0 %v3696
  %5237 = vmatprep.subr.bf16.mxu0 0
  %5238 = vmatpush1.bf16.msra.mxu0 %v3697
  %5239 = vmatprep.subr.bf16.mxu0 0
  %5240 = vmatpush1.bf16.msra.mxu0 %v3698
  %5241 = vmatprep.subr.bf16.mxu0 0
  %5242 = vmatpush1.bf16.msra.mxu0 %v3699
  %5243 = vmatprep.subr.bf16.mxu0 0
  %5244 = vmatpush1.bf16.msra.mxu0 %v3700
  %5245 = vmatprep.mubr.bf16.mxu0 %v1216
  %5246 = vmatmul.mubr.bf16.gmra.mrb[0].mxu0 %v1215
  %v5247 = vpop.f32.mrb[0].mxu0
  %v5248 = vadd.f32 %v5208, %v5247
  %v5249 = vpop.f32.mrb[0].mxu0
  %v5250 = vpop.f32.mrb[0].mxu0
  %v5251 = vpop.f32.mrb[0].mxu0
  %5252 = vdwg.mxu0
  %5253 = vmatprep.subr.bf16.mxu0 0
  %5254 = vmatpush1.bf16.msra.mxu0 %v3701
  %5255 = vmatprep.subr.bf16.mxu0 0
  %5256 = vmatpush1.bf16.msra.mxu0 %v3702
  %5257 = vmatprep.subr.bf16.mxu0 0
  %5258 = vmatpush1.bf16.msra.mxu0 %v3703
  %5259 = vmatprep.subr.bf16.mxu0 0
  %5260 = vmatpush1.bf16.msra.mxu0 %v3704
  %5261 = vmatprep.subr.bf16.mxu0 0
  %5262 = vmatpush1.bf16.msra.mxu0 %v3705
  %5263 = vmatprep.subr.bf16.mxu0 0
  %5264 = vmatpush1.bf16.msra.mxu0 %v3706
  %5265 = vmatprep.subr.bf16.mxu0 0
  %5266 = vmatpush1.bf16.msra.mxu0 %v3707
  %5267 = vmatprep.subr.bf16.mxu0 0
  %5268 = vmatpush1.bf16.msra.mxu0 %v3708
  %5269 = vmatprep.subr.bf16.mxu0 0
  %5270 = vmatpush1.bf16.msra.mxu0 %v3709
  %5271 = vmatprep.subr.bf16.mxu0 0
  %5272 = vmatpush1.bf16.msra.mxu0 %v3710
  %5273 = vmatprep.subr.bf16.mxu0 0
  %5274 = vmatpush1.bf16.msra.mxu0 %v3711
  %5275 = vmatprep.subr.bf16.mxu0 0
  %5276 = vmatpush1.bf16.msra.mxu0 %v3712
  %5277 = vmatprep.subr.bf16.mxu0 0
  %5278 = vmatpush1.bf16.msra.mxu0 %v3713
  %5279 = vmatprep.subr.bf16.mxu0 0
  %5280 = vmatpush1.bf16.msra.mxu0 %v3714
  %5281 = vmatprep.subr.bf16.mxu0 0
  %5282 = vmatpush1.bf16.msra.mxu0 %v3715
  %5283 = vmatprep.subr.bf16.mxu0 0
  %5284 = vmatpush1.bf16.msra.mxu0 %v3716
  %5285 = vmatprep.mubr.bf16.mxu0 %v1218
  %5286 = vmatmul.mubr.bf16.gmra.mrb[0].mxu0 %v1217
  %v5287 = vpop.f32.mrb[0].mxu0
  %v5288 = vadd.f32 %v5248, %v5287
  %v5289 = vpop.f32.mrb[0].mxu0
  %v5290 = vpop.f32.mrb[0].mxu0
  %v5291 = vpop.f32.mrb[0].mxu0
  %5292 = vdwg.mxu0
  %5293 = vmatprep.subr.bf16.mxu0 0
  %5294 = vmatpush1.bf16.msra.mxu0 %v3717
  %5295 = vmatprep.subr.bf16.mxu0 0
  %5296 = vmatpush1.bf16.msra.mxu0 %v3718
  %5297 = vmatprep.subr.bf16.mxu0 0
  %5298 = vmatpush1.bf16.msra.mxu0 %v3719
  %5299 = vmatprep.subr.bf16.mxu0 0
  %5300 = vmatpush1.bf16.msra.mxu0 %v3720
  %5301 = vmatprep.subr.bf16.mxu0 0
  %5302 = vmatpush1.bf16.msra.mxu0 %v3721
  %5303 = vmatprep.subr.bf16.mxu0 0
  %5304 = vmatpush1.bf16.msra.mxu0 %v3722
  %5305 = vmatprep.subr.bf16.mxu0 0
  %5306 = vmatpush1.bf16.msra.mxu0 %v3723
  %5307 = vmatprep.subr.bf16.mxu0 0
  %5308 = vmatpush1.bf16.msra.mxu0 %v3724
  %5309 = vmatprep.subr.bf16.mxu0 0
  %5310 = vmatpush1.bf16.msra.mxu0 %v3725
  %5311 = vmatprep.subr.bf16.mxu0 0
  %5312 = vmatpush1.bf16.msra.mxu0 %v3726
  %5313 = vmatprep.subr.bf16.mxu0 0
  %5314 = vmatpush1.bf16.msra.mxu0 %v3727
  %5315 = vmatprep.subr.bf16.mxu0 0
  %5316 = vmatpush1.bf16.msra.mxu0 %v3728
  %5317 = vmatprep.subr.bf16.mxu0 0
  %5318 = vmatpush1.bf16.msra.mxu0 %v3729
  %5319 = vmatprep.subr.bf16.mxu0 0
  %5320 = vmatpush1.bf16.msra.mxu0 %v3730
  %5321 = vmatprep.subr.bf16.mxu0 0
  %5322 = vmatpush1.bf16.msra.mxu0 %v3731
  %5323 = vmatprep.subr.bf16.mxu0 0
  %5324 = vmatpush1.bf16.msra.mxu0 %v3732
  %5325 = vmatprep.mubr.bf16.mxu0 %v1220
  %5326 = vmatmul.mubr.bf16.gmra.mrb[0].mxu0 %v1219
  %v5327 = vpop.f32.mrb[0].mxu0
  %v5328 = vadd.f32 %v5288, %v5327
  %v5329 = vpop.f32.mrb[0].mxu0
  %v5330 = vpop.f32.mrb[0].mxu0
  %v5331 = vpop.f32.mrb[0].mxu0
  %5332 = vdwg.mxu0
  %5333 = vmatprep.subr.bf16.mxu0 0
  %5334 = vmatpush1.bf16.msra.mxu0 %v3733
  %5335 = vmatprep.subr.bf16.mxu0 0
  %5336 = vmatpush1.bf16.msra.mxu0 %v3734
  %5337 = vmatprep.subr.bf16.mxu0 0
  %5338 = vmatpush1.bf16.msra.mxu0 %v3735
  %5339 = vmatprep.subr.bf16.mxu0 0
  %5340 = vmatpush1.bf16.msra.mxu0 %v3736
  %5341 = vmatprep.subr.bf16.mxu0 0
  %5342 = vmatpush1.bf16.msra.mxu0 %v3737
  %5343 = vmatprep.subr.bf16.mxu0 0
  %5344 = vmatpush1.bf16.msra.mxu0 %v3738
  %5345 = vmatprep.subr.bf16.mxu0 0
  %5346 = vmatpush1.bf16.msra.mxu0 %v3739
  %5347 = vmatprep.subr.bf16.mxu0 0
  %5348 = vmatpush1.bf16.msra.mxu0 %v3740
  %5349 = vmatprep.subr.bf16.mxu0 0
  %5350 = vmatpush1.bf16.msra.mxu0 %v3741
  %5351 = vmatprep.subr.bf16.mxu0 0
  %5352 = vmatpush1.bf16.msra.mxu0 %v3742
  %5353 = vmatprep.subr.bf16.mxu0 0
  %5354 = vmatpush1.bf16.msra.mxu0 %v3743
  %5355 = vmatprep.subr.bf16.mxu0 0
  %5356 = vmatpush1.bf16.msra.mxu0 %v3744
  %5357 = vmatprep.subr.bf16.mxu0 0
  %5358 = vmatpush1.bf16.msra.mxu0 %v3745
  %5359 = vmatprep.subr.bf16.mxu0 0
  %5360 = vmatpush1.bf16.msra.mxu0 %v3746
  %5361 = vmatprep.subr.bf16.mxu0 0
  %5362 = vmatpush1.bf16.msra.mxu0 %v3747
  %5363 = vmatprep.subr.bf16.mxu0 0
  %5364 = vmatpush1.bf16.msra.mxu0 %v3748
  %5365 = vmatprep.mubr.bf16.mxu0 %v1222
  %5366 = vmatmul.mubr.bf16.gmra.mrb[0].mxu0 %v1221
  %v5367 = vpop.f32.mrb[0].mxu0
  %v5368 = vadd.f32 %v5328, %v5367
  %v5369 = vpop.f32.mrb[0].mxu0
  %v5370 = vpop.f32.mrb[0].mxu0
  %v5371 = vpop.f32.mrb[0].mxu0
  %5372 = vdwg.mxu0
  %5373 = vmatprep.subr.bf16.mxu0 0
  %5374 = vmatpush1.bf16.msra.mxu0 %v3749
  %5375 = vmatprep.subr.bf16.mxu0 0
  %5376 = vmatpush1.bf16.msra.mxu0 %v3750
  %5377 = vmatprep.subr.bf16.mxu0 0
  %5378 = vmatpush1.bf16.msra.mxu0 %v3751
  %5379 = vmatprep.subr.bf16.mxu0 0
  %5380 = vmatpush1.bf16.msra.mxu0 %v3752
  %5381 = vmatprep.subr.bf16.mxu0 0
  %5382 = vmatpush1.bf16.msra.mxu0 %v3753
  %5383 = vmatprep.subr.bf16.mxu0 0
  %5384 = vmatpush1.bf16.msra.mxu0 %v3754
  %5385 = vmatprep.subr.bf16.mxu0 0
  %5386 = vmatpush1.bf16.msra.mxu0 %v3755
  %5387 = vmatprep.subr.bf16.mxu0 0
  %5388 = vmatpush1.bf16.msra.mxu0 %v3756
  %5389 = vmatprep.subr.bf16.mxu0 0
  %5390 = vmatpush1.bf16.msra.mxu0 %v3757
  %5391 = vmatprep.subr.bf16.mxu0 0
  %5392 = vmatpush1.bf16.msra.mxu0 %v3758
  %5393 = vmatprep.subr.bf16.mxu0 0
  %5394 = vmatpush1.bf16.msra.mxu0 %v3759
  %5395 = vmatprep.subr.bf16.mxu0 0
  %5396 = vmatpush1.bf16.msra.mxu0 %v3760
  %5397 = vmatprep.subr.bf16.mxu0 0
  %5398 = vmatpush1.bf16.msra.mxu0 %v3761
  %5399 = vmatprep.subr.bf16.mxu0 0
  %5400 = vmatpush1.bf16.msra.mxu0 %v3762
  %5401 = vmatprep.subr.bf16.mxu0 0
  %5402 = vmatpush1.bf16.msra.mxu0 %v3763
  %5403 = vmatprep.subr.bf16.mxu0 0
  %5404 = vmatpush1.bf16.msra.mxu0 %v3764
  %5405 = vmatprep.mubr.bf16.mxu0 %v1224
  %5406 = vmatmul.mubr.bf16.gmra.mrb[0].mxu0 %v1223
  %v5407 = vpop.f32.mrb[0].mxu0
  %v5408 = vadd.f32 %v5368, %v5407
  %v5409 = vpop.f32.mrb[0].mxu0
  %v5410 = vpop.f32.mrb[0].mxu0
  %v5411 = vpop.f32.mrb[0].mxu0
  %5412 = vdwg.mxu0
  %5413 = vmatprep.subr.bf16.mxu0 0
  %5414 = vmatpush1.bf16.msra.mxu0 %v3765
  %5415 = vmatprep.subr.bf16.mxu0 0
  %5416 = vmatpush1.bf16.msra.mxu0 %v3766
  %5417 = vmatprep.subr.bf16.mxu0 0
  %5418 = vmatpush1.bf16.msra.mxu0 %v3767
  %5419 = vmatprep.subr.bf16.mxu0 0
  %5420 = vmatpush1.bf16.msra.mxu0 %v3768
  %5421 = vmatprep.subr.bf16.mxu0 0
  %5422 = vmatpush1.bf16.msra.mxu0 %v3769
  %5423 = vmatprep.subr.bf16.mxu0 0
  %5424 = vmatpush1.bf16.msra.mxu0 %v3770
  %5425 = vmatprep.subr.bf16.mxu0 0
  %5426 = vmatpush1.bf16.msra.mxu0 %v3771
  %5427 = vmatprep.subr.bf16.mxu0 0
  %5428 = vmatpush1.bf16.msra.mxu0 %v3772
  %5429 = vmatprep.subr.bf16.mxu0 0
  %5430 = vmatpush1.bf16.msra.mxu0 %v3773
  %5431 = vmatprep.subr.bf16.mxu0 0
  %5432 = vmatpush1.bf16.msra.mxu0 %v3774
  %5433 = vmatprep.subr.bf16.mxu0 0
  %5434 = vmatpush1.bf16.msra.mxu0 %v3775
  %5435 = vmatprep.subr.bf16.mxu0 0
  %5436 = vmatpush1.bf16.msra.mxu0 %v3776
  %5437 = vmatprep.subr.bf16.mxu0 0
  %5438 = vmatpush1.bf16.msra.mxu0 %v3777
  %5439 = vmatprep.subr.bf16.mxu0 0
  %5440 = vmatpush1.bf16.msra.mxu0 %v3778
  %5441 = vmatprep.subr.bf16.mxu0 0
  %5442 = vmatpush1.bf16.msra.mxu0 %v3779
  %5443 = vmatprep.subr.bf16.mxu0 0
  %5444 = vmatpush1.bf16.msra.mxu0 %v3780
  %5445 = vmatprep.mubr.bf16.mxu0 %v1226
  %5446 = vmatmul.mubr.bf16.gmra.mrb[0].mxu0 %v1225
  %v5447 = vpop.f32.mrb[0].mxu0
  %v5448 = vadd.f32 %v5408, %v5447
  %v5449 = vpop.f32.mrb[0].mxu0
  %v5450 = vpop.f32.mrb[0].mxu0
  %v5451 = vpop.f32.mrb[0].mxu0
  %5452 = vdwg.mxu0
  %5453 = vmatprep.subr.bf16.mxu0 0
  %5454 = vmatpush1.bf16.msra.mxu0 %v3781
  %5455 = vmatprep.subr.bf16.mxu0 0
  %5456 = vmatpush1.bf16.msra.mxu0 %v3782
  %5457 = vmatprep.subr.bf16.mxu0 0
  %5458 = vmatpush1.bf16.msra.mxu0 %v3783
  %5459 = vmatprep.subr.bf16.mxu0 0
  %5460 = vmatpush1.bf16.msra.mxu0 %v3784
  %5461 = vmatprep.subr.bf16.mxu0 0
  %5462 = vmatpush1.bf16.msra.mxu0 %v3785
  %5463 = vmatprep.subr.bf16.mxu0 0
  %5464 = vmatpush1.bf16.msra.mxu0 %v3786
  %5465 = vmatprep.subr.bf16.mxu0 0
  %5466 = vmatpush1.bf16.msra.mxu0 %v3787
  %5467 = vmatprep.subr.bf16.mxu0 0
  %5468 = vmatpush1.bf16.msra.mxu0 %v3788
  %5469 = vmatprep.subr.bf16.mxu0 0
  %5470 = vmatpush1.bf16.msra.mxu0 %v3789
  %5471 = vmatprep.subr.bf16.mxu0 0
  %5472 = vmatpush1.bf16.msra.mxu0 %v3790
  %5473 = vmatprep.subr.bf16.mxu0 0
  %5474 = vmatpush1.bf16.msra.mxu0 %v3791
  %5475 = vmatprep.subr.bf16.mxu0 0
  %5476 = vmatpush1.bf16.msra.mxu0 %v3792
  %5477 = vmatprep.subr.bf16.mxu0 0
  %5478 = vmatpush1.bf16.msra.mxu0 %v3793
  %5479 = vmatprep.subr.bf16.mxu0 0
  %5480 = vmatpush1.bf16.msra.mxu0 %v3794
  %5481 = vmatprep.subr.bf16.mxu0 0
  %5482 = vmatpush1.bf16.msra.mxu0 %v3795
  %5483 = vmatprep.subr.bf16.mxu0 0
  %5484 = vmatpush1.bf16.msra.mxu0 %v3796
  %5485 = vmatprep.mubr.bf16.mxu0 %v1228
  %5486 = vmatmul.mubr.bf16.gmra.mrb[0].mxu0 %v1227
  %v5487 = vpop.f32.mrb[0].mxu0
  %v5488 = vadd.f32 %v5448, %v5487
  %v5489 = vpop.f32.mrb[0].mxu0
  %v5490 = vpop.f32.mrb[0].mxu0
  %v5491 = vpop.f32.mrb[0].mxu0
  %5492 = vdwg.mxu0
  %5493 = vmatprep.subr.bf16.mxu0 0
  %5494 = vmatpush1.bf16.msra.mxu0 %v3797
  %5495 = vmatprep.subr.bf16.mxu0 0
  %5496 = vmatpush1.bf16.msra.mxu0 %v3798
  %5497 = vmatprep.subr.bf16.mxu0 0
  %5498 = vmatpush1.bf16.msra.mxu0 %v3799
  %5499 = vmatprep.subr.bf16.mxu0 0
  %5500 = vmatpush1.bf16.msra.mxu0 %v3800
  %5501 = vmatprep.subr.bf16.mxu0 0
  %5502 = vmatpush1.bf16.msra.mxu0 %v3801
  %5503 = vmatprep.subr.bf16.mxu0 0
  %5504 = vmatpush1.bf16.msra.mxu0 %v3802
  %5505 = vmatprep.subr.bf16.mxu0 0
  %5506 = vmatpush1.bf16.msra.mxu0 %v3803
  %5507 = vmatprep.subr.bf16.mxu0 0
  %5508 = vmatpush1.bf16.msra.mxu0 %v3804
  %5509 = vmatprep.subr.bf16.mxu0 0
  %5510 = vmatpush1.bf16.msra.mxu0 %v3805
  %5511 = vmatprep.subr.bf16.mxu0 0
  %5512 = vmatpush1.bf16.msra.mxu0 %v3806
  %5513 = vmatprep.subr.bf16.mxu0 0
  %5514 = vmatpush1.bf16.msra.mxu0 %v3807
  %5515 = vmatprep.subr.bf16.mxu0 0
  %5516 = vmatpush1.bf16.msra.mxu0 %v3808
  %5517 = vmatprep.subr.bf16.mxu0 0
  %5518 = vmatpush1.bf16.msra.mxu0 %v3809
  %5519 = vmatprep.subr.bf16.mxu0 0
  %5520 = vmatpush1.bf16.msra.mxu0 %v3810
  %5521 = vmatprep.subr.bf16.mxu0 0
  %5522 = vmatpush1.bf16.msra.mxu0 %v3811
  %5523 = vmatprep.subr.bf16.mxu0 0
  %5524 = vmatpush1.bf16.msra.mxu0 %v3812
  %5525 = vmatprep.mubr.bf16.mxu0 %v1230
  %5526 = vmatmul.mubr.bf16.gmra.mrb[0].mxu0 %v1229
  %v5527 = vpop.f32.mrb[0].mxu0
  %v5528 = vadd.f32 %v5488, %v5527
  %v5529 = vpop.f32.mrb[0].mxu0
  %v5530 = vpop.f32.mrb[0].mxu0
  %v5531 = vpop.f32.mrb[0].mxu0
  %5532 = vdwg.mxu0
  %5533 = vmatprep.subr.bf16.mxu0 0
  %5534 = vmatpush1.bf16.msra.mxu0 %v3813
  %5535 = vmatprep.subr.bf16.mxu0 0
  %5536 = vmatpush1.bf16.msra.mxu0 %v3814
  %5537 = vmatprep.subr.bf16.mxu0 0
  %5538 = vmatpush1.bf16.msra.mxu0 %v3815
  %5539 = vmatprep.subr.bf16.mxu0 0
  %5540 = vmatpush1.bf16.msra.mxu0 %v3816
  %5541 = vmatprep.subr.bf16.mxu0 0
  %5542 = vmatpush1.bf16.msra.mxu0 %v3817
  %5543 = vmatprep.subr.bf16.mxu0 0
  %5544 = vmatpush1.bf16.msra.mxu0 %v3818
  %5545 = vmatprep.subr.bf16.mxu0 0
  %5546 = vmatpush1.bf16.msra.mxu0 %v3819
  %5547 = vmatprep.subr.bf16.mxu0 0
  %5548 = vmatpush1.bf16.msra.mxu0 %v3820
  %5549 = vmatprep.subr.bf16.mxu0 0
  %5550 = vmatpush1.bf16.msra.mxu0 %v3821
  %5551 = vmatprep.subr.bf16.mxu0 0
  %5552 = vmatpush1.bf16.msra.mxu0 %v3822
  %5553 = vmatprep.subr.bf16.mxu0 0
  %5554 = vmatpush1.bf16.msra.mxu0 %v3823
  %5555 = vmatprep.subr.bf16.mxu0 0
  %5556 = vmatpush1.bf16.msra.mxu0 %v3824
  %5557 = vmatprep.subr.bf16.mxu0 0
  %5558 = vmatpush1.bf16.msra.mxu0 %v3825
  %5559 = vmatprep.subr.bf16.mxu0 0
  %5560 = vmatpush1.bf16.msra.mxu0 %v3826
  %5561 = vmatprep.subr.bf16.mxu0 0
  %5562 = vmatpush1.bf16.msra.mxu0 %v3827
  %5563 = vmatprep.subr.bf16.mxu0 0
  %5564 = vmatpush1.bf16.msra.mxu0 %v3828
  %5565 = vmatprep.mubr.bf16.mxu0 %v1232
  %5566 = vmatmul.mubr.bf16.gmra.mrb[0].mxu0 %v1231
  %v5567 = vpop.f32.mrb[0].mxu0
  %v5568 = vadd.f32 %v5528, %v5567
  %v5569 = vpop.f32.mrb[0].mxu0
  %v5570 = vpop.f32.mrb[0].mxu0
  %v5571 = vpop.f32.mrb[0].mxu0
  %5572 = vdwg.mxu0
  %5573 = vmatprep.subr.bf16.mxu0 0
  %5574 = vmatpush1.bf16.msra.mxu0 %v3829
  %5575 = vmatprep.subr.bf16.mxu0 0
  %5576 = vmatpush1.bf16.msra.mxu0 %v3830
  %5577 = vmatprep.subr.bf16.mxu0 0
  %5578 = vmatpush1.bf16.msra.mxu0 %v3831
  %5579 = vmatprep.subr.bf16.mxu0 0
  %5580 = vmatpush1.bf16.msra.mxu0 %v3832
  %5581 = vmatprep.subr.bf16.mxu0 0
  %5582 = vmatpush1.bf16.msra.mxu0 %v3833
  %5583 = vmatprep.subr.bf16.mxu0 0
  %5584 = vmatpush1.bf16.msra.mxu0 %v3834
  %5585 = vmatprep.subr.bf16.mxu0 0
  %5586 = vmatpush1.bf16.msra.mxu0 %v3835
  %5587 = vmatprep.subr.bf16.mxu0 0
  %5588 = vmatpush1.bf16.msra.mxu0 %v3836
  %5589 = vmatprep.subr.bf16.mxu0 0
  %5590 = vmatpush1.bf16.msra.mxu0 %v3837
  %5591 = vmatprep.subr.bf16.mxu0 0
  %5592 = vmatpush1.bf16.msra.mxu0 %v3838
  %5593 = vmatprep.subr.bf16.mxu0 0
  %5594 = vmatpush1.bf16.msra.mxu0 %v3839
  %5595 = vmatprep.subr.bf16.mxu0 0
  %5596 = vmatpush1.bf16.msra.mxu0 %v3840
  %5597 = vmatprep.subr.bf16.mxu0 0
  %5598 = vmatpush1.bf16.msra.mxu0 %v3841
  %5599 = vmatprep.subr.bf16.mxu0 0
  %5600 = vmatpush1.bf16.msra.mxu0 %v3842
  %5601 = vmatprep.subr.bf16.mxu0 0
  %5602 = vmatpush1.bf16.msra.mxu0 %v3843
  %5603 = vmatprep.subr.bf16.mxu0 0
  %5604 = vmatpush1.bf16.msra.mxu0 %v3844
  %5605 = vmatprep.mubr.bf16.mxu0 %v1234
  %5606 = vmatmul.mubr.bf16.gmra.mrb[0].mxu0 %v1233
  %v5607 = vpop.f32.mrb[0].mxu0
  %v5608 = vadd.f32 %v5568, %v5607
  %v5609 = vpop.f32.mrb[0].mxu0
  %v5610 = vpop.f32.mrb[0].mxu0
  %v5611 = vpop.f32.mrb[0].mxu0
  %5612 = vdwg.mxu0
  %5613 = vmatprep.subr.bf16.mxu0 0
  %5614 = vmatpush1.bf16.msra.mxu0 %v3845
  %5615 = vmatprep.subr.bf16.mxu0 0
  %5616 = vmatpush1.bf16.msra.mxu0 %v3846
  %5617 = vmatprep.subr.bf16.mxu0 0
  %5618 = vmatpush1.bf16.msra.mxu0 %v3847
  %5619 = vmatprep.subr.bf16.mxu0 0
  %5620 = vmatpush1.bf16.msra.mxu0 %v3848
  %5621 = vmatprep.subr.bf16.mxu0 0
  %5622 = vmatpush1.bf16.msra.mxu0 %v3849
  %5623 = vmatprep.subr.bf16.mxu0 0
  %5624 = vmatpush1.bf16.msra.mxu0 %v3850
  %5625 = vmatprep.subr.bf16.mxu0 0
  %5626 = vmatpush1.bf16.msra.mxu0 %v3851
  %5627 = vmatprep.subr.bf16.mxu0 0
  %5628 = vmatpush1.bf16.msra.mxu0 %v3852
  %5629 = vmatprep.subr.bf16.mxu0 0
  %5630 = vmatpush1.bf16.msra.mxu0 %v3853
  %5631 = vmatprep.subr.bf16.mxu0 0
  %5632 = vmatpush1.bf16.msra.mxu0 %v3854
  %5633 = vmatprep.subr.bf16.mxu0 0
  %5634 = vmatpush1.bf16.msra.mxu0 %v3855
  %5635 = vmatprep.subr.bf16.mxu0 0
  %5636 = vmatpush1.bf16.msra.mxu0 %v3856
  %5637 = vmatprep.subr.bf16.mxu0 0
  %5638 = vmatpush1.bf16.msra.mxu0 %v3857
  %5639 = vmatprep.subr.bf16.mxu0 0
  %5640 = vmatpush1.bf16.msra.mxu0 %v3858
  %5641 = vmatprep.subr.bf16.mxu0 0
  %5642 = vmatpush1.bf16.msra.mxu0 %v3859
  %5643 = vmatprep.subr.bf16.mxu0 0
  %5644 = vmatpush1.bf16.msra.mxu0 %v3860
  %5645 = vmatprep.mubr.bf16.mxu0 %v1236
  %5646 = vmatmul.mubr.bf16.gmra.mrb[0].mxu0 %v1235
  %v5647 = vpop.f32.mrb[0].mxu0
  %v5648 = vadd.f32 %v5608, %v5647
  %v5649 = vpop.f32.mrb[0].mxu0
  %v5650 = vpop.f32.mrb[0].mxu0
  %v5651 = vpop.f32.mrb[0].mxu0
  %5652 = vdwg.mxu0
  %v5653 = vadd.f32 %v20, %v5648
  %5654 = vst [vmem:[%s3] sm:$0xff] %v5653
  // Predicated region
  $region18: #{exit_block_forward.3} parent=0 // pred_check
    %p5655 = pneg %p15
  $region19: #{exit_block_forward.3} parent=0 // pred_check_branch
    %5657 = sbr.rel (%p5655) target = $region21
  $region20: #{exit_block_forward.3} parent=0 // pred_region
    %v5658 = vld [vmem:[%s3] sm:$0xff]
    %v5659 = vld [vmem:[%s2] sm:$0x1]
    %v5661 = vlaneseq
    %v5662 = vshrl.u32 %v5661, 7
    %v5663 = vsub.s32 0, %v5662
    %v5664 = vrot.slane %v5659, %v5663
    %v5666 = vadd.f32 %v5658, %v5664
    %5667 = vst [vmem:[%s3] sm:$0xff] %v5666
  $region21: #{exit_block_forward.3} parent=0 // pred_fallthru
    _
  // Predicated region
  $region22: #{exit_block_forward.3} parent=0 // pred_check
    _
  $region23: #{exit_block_forward.3} parent=0 // pred_check_branch
    %5669 = sbr.rel (0) target = $region25
  $region24: #{exit_block_forward.3} parent=0 // pred_region
    _
  $region25: #{exit_block_forward.3} parent=0 // pred_fallthru
    _
  // Predicated region
  $region26: #{exit_block_forward.3} parent=0 // pred_check
    _
  $region27: #{exit_block_forward.3} parent=0 // pred_check_branch
    %5671 = sbr.rel (0) target = $region29
  $region28: #{exit_block_forward.3} parent=0 // pred_region
    _
  $region29: #{exit_block_forward.3} parent=0 // pred_fallthru
    _

</llo_original>
